<compile_context>
chip_gen: v7x
topology: tpu7x:2x2x1
jax: 0.10.0
libtpu: 0.0.40
codegen_flags: <defaults>
</compile_context>

<pallas_src>
import functools
import math

import jax
import jax.numpy as jnp
from jax import lax
from jax.experimental import pallas as pl
from jax.experimental.pallas import tpu as pltpu

# ------------------------------ tiny config ----------------------------------
VOCAB = 128          # vocab_size (small; one-hot gather stays lane dense)
MAX_POS = 32         # max_position_embeddings
EMBED = 128          # hidden_size (multiple of 128 -> lane-dense activations)
NUM_HEADS = 2
HEAD_DIM = EMBED // NUM_HEADS
INTER = 256          # intermediate_size
NUM_LAYERS = 2
NUM_LABELS = 2
LANE = 128           # lane-dense padded width for the classifier output
LN_EPS_EMB = 1e-12   # config.layer_norm_eps used by Embeddings.layer_norm
LN_EPS = 1e-5        # nn.LayerNorm default in EncoderTransformerLayer

BATCH = 2
SEQ = 8


# --------------------------- shared math helpers -----------------------------
def _layer_norm(x, gamma, beta, eps):
    mu = jnp.mean(x, axis=-1, keepdims=True)
    var = jnp.mean(jnp.square(x - mu), axis=-1, keepdims=True)
    return (x - mu) * lax.rsqrt(var + eps) * gamma + beta


def _gelu(x):
    # TODO(synk): PyTorch nn.GELU() defaults to the exact erf form; the tanh
    # approximation is used here (and in the reference) since erf has no
    # guaranteed Mosaic lowering.
    c = math.sqrt(2.0 / math.pi)
    return 0.5 * x * (1.0 + jnp.tanh(c * (x + 0.044715 * x * x * x)))


# ------------------------------ fused kernel ----------------------------------
def _fused_forward_kernel(ids_ref, tok_ref, pos_ref, eg_ref, eb_ref,
                          ln1g_ref, ln1b_ref, wqkv_ref, bqkv_ref,
                          wo_ref, bo_ref, ln2g_ref, ln2b_ref,
                          w1_ref, b1_ref, w2_ref, b2_ref,
                          wcls_ref, bcls_ref, o_ref,
                          *, batch, seq, num_heads, num_layers):
    bs = batch * seq
    vocab, e_dim = tok_ref.shape
    head_dim = e_dim // num_heads
    scale = 1.0 / math.sqrt(head_dim)

    # ---- embeddings: one-hot token gather (MXU) + position add + LayerNorm ----
    ids = ids_ref[...]                                               # (BS, 1)
    vocab_iota = lax.broadcasted_iota(jnp.int32, (bs, vocab), 1)
    one_hot = (ids == vocab_iota).astype(jnp.float32)                # (BS, V)
    tok = jnp.dot(one_hot, tok_ref[...],
                  preferred_element_type=jnp.float32)                # (BS, E)
    pos = pos_ref[...]                                               # (S, E)
    pos_tiled = jnp.concatenate([pos] * batch, axis=0)               # (BS, E)
    # Dropout after LayerNorm is identity in eval mode.
    x = _layer_norm(tok + pos_tiled, eg_ref[...], eb_ref[...], LN_EPS_EMB)

    # ---- encoder layers (static unroll, all weights VMEM-resident) ----
    for l in range(num_layers):
        # LN1 -> fused QKV: one (BS, E) x (E, 3E) MXU matmul.
        h = _layer_norm(x, ln1g_ref[l], ln1b_ref[l], LN_EPS)
        qkv = jnp.dot(h, wqkv_ref[l],
                      preferred_element_type=jnp.float32) + bqkv_ref[l]
        q = qkv[:, 0 * e_dim:1 * e_dim] * scale      # fold 1/sqrt(d_k) into q
        k = qkv[:, 1 * e_dim:2 * e_dim]
        v = qkv[:, 2 * e_dim:3 * e_dim]

        # Per-(batch, head) (S, S) attention; everything else stays (BS, *).
        ctx_rows = []
        for b in range(batch):
            r0 = b * seq
            heads = []
            for hd in range(num_heads):
                lo, hi = hd * head_dim, (hd + 1) * head_dim
                qh = q[r0:r0 + seq, lo:hi]
                kh = k[r0:r0 + seq, lo:hi]
                vh = v[r0:r0 + seq, lo:hi]
                # Contract last dims: no materialized K transpose.
                s = lax.dot_general(qh, kh, (((1,), (1,)), ((), ())),
                                    preferred_element_type=jnp.float32)
                m = jnp.max(s, axis=-1, keepdims=True)
                p = jnp.exp(s - m)
                attn = p / jnp.sum(p, axis=-1, keepdims=True)        # exact
                heads.append(jnp.dot(attn, vh,
                                     preferred_element_type=jnp.float32))
            ctx_rows.append(jnp.concatenate(heads, axis=-1))         # (S, E)
        ctx = jnp.concatenate(ctx_rows, axis=0)                      # (BS, E)

        # Output projection on the full (BS, E) slab + residual.
        x = x + jnp.dot(ctx, wo_ref[l],
                        preferred_element_type=jnp.float32) + bo_ref[l]

        # LN2 -> FFN -> residual (FFN dropout identity in eval mode).
        h2 = _layer_norm(x, ln2g_ref[l], ln2b_ref[l], LN_EPS)
        a = jnp.dot(h2, w1_ref[l],
                    preferred_element_type=jnp.float32) + b1_ref[l]
        a = _gelu(a)
        x = x + jnp.dot(a, w2_ref[l],
                        preferred_element_type=jnp.float32) + b2_ref[l]

    # ---- classifier on CLS tokens (row b*seq); dropout identity in eval ----
    x_cls = jnp.concatenate([x[b * seq:b * seq + 1, :] for b in range(batch)],
                            axis=0)                                  # (B, E)
    logits = jnp.dot(x_cls, wcls_ref[...],
                     preferred_element_type=jnp.float32) + bcls_ref[...]
    o_ref[...] = logits.astype(o_ref.dtype)                          # (B, 128)


# ----------------------------- pallas wrapper ----------------------------------
@jax.jit
def transformer_forward(params, input_ids):
    B, S = input_ids.shape
    E, I, L, V = EMBED, INTER, NUM_LAYERS, VOCAB
    BS = B * S

    ids2d = input_ids.reshape(BS, 1).astype(jnp.int32)
    pos = params["pos_emb"][:S]

    stack = lambda name: jnp.stack([lp[name] for lp in params["layers"]], 0)
    ln1_g = stack("ln1_g").reshape(L, 1, E)
    ln1_b = stack("ln1_b").reshape(L, 1, E)
    w_qkv = stack("w_qkv")                         # (L, E, 3E)
    b_qkv = stack("b_qkv").reshape(L, 1, 3 * E)
    w_o = stack("w_o")                             # (L, E, E)
    b_o = stack("b_o").reshape(L, 1, E)
    ln2_g = stack("ln2_g").reshape(L, 1, E)
    ln2_b = stack("ln2_b").reshape(L, 1, E)
    w1 = stack("w1")                               # (L, E, I)
    b1 = stack("b1").reshape(L, 1, I)
    w2 = stack("w2")                               # (L, I, E)
    b2 = stack("b2").reshape(L, 1, E)

    # Lane-dense classifier weights: pad (E, 2) -> (E, 128), (2,) -> (1, 128).
    w_cls_pad = jnp.zeros((E, LANE), jnp.float32).at[:, :NUM_LABELS].set(
        params["w_cls"])
    b_cls_pad = jnp.zeros((1, LANE), jnp.float32).at[:, :NUM_LABELS].set(
        params["b_cls"].reshape(1, NUM_LABELS))

    kernel = functools.partial(_fused_forward_kernel, batch=B, seq=S,
                               num_heads=NUM_HEADS, num_layers=L)
    full2 = lambda i: (0, 0)
    full3 = lambda i: (0, 0, 0)

    out = pl.pallas_call(
        kernel,
        out_shape=jax.ShapeDtypeStruct((B, LANE), jnp.float32),
        grid_spec=pltpu.PrefetchScalarGridSpec(
            num_scalar_prefetch=0,
            grid=(1,),
            in_specs=[
                pl.BlockSpec((BS, 1), full2),          # ids
                pl.BlockSpec((V, E), full2),           # token table
                pl.BlockSpec((S, E), full2),           # position rows
                pl.BlockSpec((1, E), full2),           # emb LN gamma
                pl.BlockSpec((1, E), full2),           # emb LN beta
                pl.BlockSpec((L, 1, E), full3),        # ln1 gamma
                pl.BlockSpec((L, 1, E), full3),        # ln1 beta
                pl.BlockSpec((L, E, 3 * E), full3),    # w_qkv
                pl.BlockSpec((L, 1, 3 * E), full3),    # b_qkv
                pl.BlockSpec((L, E, E), full3),        # w_o
                pl.BlockSpec((L, 1, E), full3),        # b_o
                pl.BlockSpec((L, 1, E), full3),        # ln2 gamma
                pl.BlockSpec((L, 1, E), full3),        # ln2 beta
                pl.BlockSpec((L, E, I), full3),        # w1
                pl.BlockSpec((L, 1, I), full3),        # b1
                pl.BlockSpec((L, I, E), full3),        # w2
                pl.BlockSpec((L, 1, E), full3),        # b2
                pl.BlockSpec((E, LANE), full2),        # classifier W (padded)
                pl.BlockSpec((1, LANE), full2),        # classifier b (padded)
            ],
            out_specs=pl.BlockSpec((B, LANE), full2),
        ),
        compiler_params=pltpu.CompilerParams(
            dimension_semantics=("arbitrary",)),
    )(ids2d, params["tok_emb"], pos,
      params["emb_ln_g"].reshape(1, E), params["emb_ln_b"].reshape(1, E),
      ln1_g, ln1_b, w_qkv, b_qkv, w_o, b_o, ln2_g, ln2_b,
      w1, b1, w2, b2, w_cls_pad, b_cls_pad)

    return out[:, :NUM_LABELS]


# --------------------------- pure-JAX reference --------------------------------
def transformer_forward_ref(params, input_ids):
    E, H, Dh = EMBED, NUM_HEADS, HEAD_DIM
    tok = jnp.take(params["tok_emb"], input_ids, axis=0)             # (B,S,E)
    pos = params["pos_emb"][: input_ids.shape[1]]                    # (S,E)
    x = _layer_norm(tok + pos, params["emb_ln_g"], params["emb_ln_b"], LN_EPS_EMB)
    for lp in params["layers"]:
        h = _layer_norm(x, lp["ln1_g"], lp["ln1_b"], LN_EPS)
        qkv = h @ lp["w_qkv"] + lp["b_qkv"]
        q, k, v = qkv[..., :E], qkv[..., E:2 * E], qkv[..., 2 * E:]
        heads = []
        for hd in range(H):
            lo, hi = hd * Dh, (hd + 1) * Dh
            s = jnp.einsum("bqd,bkd->bqk", q[..., lo:hi], k[..., lo:hi]) / math.sqrt(Dh)
            w = jax.nn.softmax(s, axis=-1)
            heads.append(jnp.einsum("bqk,bkd->bqd", w, v[..., lo:hi]))
        x = x + jnp.concatenate(heads, axis=-1) @ lp["w_o"] + lp["b_o"]
        h2 = _layer_norm(x, lp["ln2_g"], lp["ln2_b"], LN_EPS)
        x = x + _gelu(h2 @ lp["w1"] + lp["b1"]) @ lp["w2"] + lp["b2"]
    return x[:, 0, :] @ params["w_cls"] + params["b_cls"]


# ------------------------------ parameter init ---------------------------------
def _uniform(key, shape, bound):
    return jax.random.uniform(key, shape, jnp.float32, minval=-bound, maxval=bound)


def init_params(key):
    k_tok, k_pos, k_eg, k_eb, k_cw, k_cb, k_layers = jax.random.split(key, 7)
    be = 1.0 / math.sqrt(EMBED)
    bi = 1.0 / math.sqrt(INTER)
    params = {
        "tok_emb": 0.02 * jax.random.normal(k_tok, (VOCAB, EMBED), jnp.float32),
        "pos_emb": 0.02 * jax.random.normal(k_pos, (MAX_POS, EMBED), jnp.float32),
        "emb_ln_g": 1.0 + 0.1 * jax.random.normal(k_eg, (EMBED,), jnp.float32),
        "emb_ln_b": 0.1 * jax.random.normal(k_eb, (EMBED,), jnp.float32),
        "w_cls": _uniform(k_cw, (EMBED, NUM_LABELS), be),
        "b_cls": _uniform(k_cb, (NUM_LABELS,), be),
        "layers": [],
    }
    for lk in jax.random.split(k_layers, NUM_LAYERS):
        ks = jax.random.split(lk, 12)
        params["layers"].append({
            "ln1_g": 1.0 + 0.1 * jax.random.normal(ks[0], (EMBED,), jnp.float32),
            "ln1_b": 0.1 * jax.random.normal(ks[1], (EMBED,), jnp.float32),
            "w_qkv": _uniform(ks[2], (EMBED, 3 * EMBED), be),   # [Wq | Wk | Wv]
            "b_qkv": _uniform(ks[3], (3 * EMBED,), be),
            "w_o": _uniform(ks[4], (EMBED, EMBED), be),
            "b_o": _uniform(ks[5], (EMBED,), be),
            "ln2_g": 1.0 + 0.1 * jax.random.normal(ks[6], (EMBED,), jnp.float32),
            "ln2_b": 0.1 * jax.random.normal(ks[7], (EMBED,), jnp.float32),
            "w1": _uniform(ks[8], (EMBED, INTER), be),
            "b1": _uniform(ks[9], (INTER,), be),
            "w2": _uniform(ks[10], (INTER, EMBED), bi),
            "b2": _uniform(ks[11], (EMBED,), bi),
        })
    return params


# ----------------------------------- main ---------------------------------------
if __name__ == "__main__":
    key = jax.random.PRNGKey(0)
    k_params, k_ids = jax.random.split(key)
    params = init_params(k_params)
    # Token ids are generated in [0, VOCAB); out-of-range ids would read a zero
    # embedding (one-hot gather) rather than raising like jnp.take.
    input_ids = jax.random.randint(k_ids, (BATCH, SEQ), 0, VOCAB, dtype=jnp.int32)

    logits = transformer_forward(params, input_ids)
    logits = jax.block_until_ready(logits)

    ref = transformer_forward_ref(params, input_ids)
    assert logits.shape == (BATCH, NUM_LABELS)
    max_err = float(jnp.max(jnp.abs(logits - ref)))
    assert jnp.allclose(logits, ref, atol=2e-3, rtol=2e-3), f"mismatch: max_err={max_err}"
    print("KERNEL_OK")
</pallas_src>

<mosaic_0001>
module attributes {stable_mosaic.version = 11 : i64} {
  func.func @_fused_forward_kernel(%arg0: i32, %arg1: memref<16x1xi32, #tpu.memory_space<vmem>>, %arg2: memref<128x128xf32, #tpu.memory_space<vmem>>, %arg3: memref<8x128xf32, #tpu.memory_space<vmem>>, %arg4: memref<1x128xf32, #tpu.memory_space<vmem>>, %arg5: memref<1x128xf32, #tpu.memory_space<vmem>>, %arg6: memref<2x1x128xf32, #tpu.memory_space<vmem>>, %arg7: memref<2x1x128xf32, #tpu.memory_space<vmem>>, %arg8: memref<2x128x384xf32, #tpu.memory_space<vmem>>, %arg9: memref<2x1x384xf32, #tpu.memory_space<vmem>>, %arg10: memref<2x128x128xf32, #tpu.memory_space<vmem>>, %arg11: memref<2x1x128xf32, #tpu.memory_space<vmem>>, %arg12: memref<2x1x128xf32, #tpu.memory_space<vmem>>, %arg13: memref<2x1x128xf32, #tpu.memory_space<vmem>>, %arg14: memref<2x128x256xf32, #tpu.memory_space<vmem>>, %arg15: memref<2x1x256xf32, #tpu.memory_space<vmem>>, %arg16: memref<2x256x128xf32, #tpu.memory_space<vmem>>, %arg17: memref<2x1x128xf32, #tpu.memory_space<vmem>>, %arg18: memref<128x128xf32, #tpu.memory_space<vmem>>, %arg19: memref<1x128xf32, #tpu.memory_space<vmem>>, %arg20: memref<2x128xf32, #tpu.memory_space<vmem>>) attributes {dimension_semantics = [#tpu.dimension_semantics<arbitrary>], iteration_bounds = array<i64: 1>, scalar_prefetch = 0 : i64, scratch_operands = 0 : i64, tpu.core_type = #tpu.core_type<tc>, window_params = [{pipeline_mode = #tpu.pipeline_mode<synchronous>, transform_indices = @transform_0, window_bounds = array<i64: 16, 1>}, {pipeline_mode = #tpu.pipeline_mode<synchronous>, transform_indices = @transform_1, window_bounds = array<i64: 128, 128>}, {pipeline_mode = #tpu.pipeline_mode<synchronous>, transform_indices = @transform_2, window_bounds = array<i64: 8, 128>}, {pipeline_mode = #tpu.pipeline_mode<synchronous>, transform_indices = @transform_3, window_bounds = array<i64: 1, 128>}, {pipeline_mode = #tpu.pipeline_mode<synchronous>, transform_indices = @transform_4, window_bounds = array<i64: 1, 128>}, {pipeline_mode = #tpu.pipeline_mode<synchronous>, transform_indices = @transform_5, window_bounds = array<i64: 2, 1, 128>}, {pipeline_mode = #tpu.pipeline_mode<synchronous>, transform_indices = @transform_6, window_bounds = array<i64: 2, 1, 128>}, {pipeline_mode = #tpu.pipeline_mode<synchronous>, transform_indices = @transform_7, window_bounds = array<i64: 2, 128, 384>}, {pipeline_mode = #tpu.pipeline_mode<synchronous>, transform_indices = @transform_8, window_bounds = array<i64: 2, 1, 384>}, {pipeline_mode = #tpu.pipeline_mode<synchronous>, transform_indices = @transform_9, window_bounds = array<i64: 2, 128, 128>}, {pipeline_mode = #tpu.pipeline_mode<synchronous>, transform_indices = @transform_10, window_bounds = array<i64: 2, 1, 128>}, {pipeline_mode = #tpu.pipeline_mode<synchronous>, transform_indices = @transform_11, window_bounds = array<i64: 2, 1, 128>}, {pipeline_mode = #tpu.pipeline_mode<synchronous>, transform_indices = @transform_12, window_bounds = array<i64: 2, 1, 128>}, {pipeline_mode = #tpu.pipeline_mode<synchronous>, transform_indices = @transform_13, window_bounds = array<i64: 2, 128, 256>}, {pipeline_mode = #tpu.pipeline_mode<synchronous>, transform_indices = @transform_14, window_bounds = array<i64: 2, 1, 256>}, {pipeline_mode = #tpu.pipeline_mode<synchronous>, transform_indices = @transform_15, window_bounds = array<i64: 2, 256, 128>}, {pipeline_mode = #tpu.pipeline_mode<synchronous>, transform_indices = @transform_16, window_bounds = array<i64: 2, 1, 128>}, {pipeline_mode = #tpu.pipeline_mode<synchronous>, transform_indices = @transform_17, window_bounds = array<i64: 128, 128>}, {pipeline_mode = #tpu.pipeline_mode<synchronous>, transform_indices = @transform_18, window_bounds = array<i64: 1, 128>}, {pipeline_mode = #tpu.pipeline_mode<synchronous>, transform_indices = @transform_19, window_bounds = array<i64: 2, 128>}]} {
    %c0 = arith.constant 0 : index
    %c0_0 = arith.constant 0 : index
    %0 = vector.load %arg1[%c0, %c0_0] : memref<16x1xi32, #tpu.memory_space<vmem>>, vector<16x1xi32>
    %1 = tpu.iota {dimensions = array<i32: 1>} : vector<16x128xi32>
    %2 = vector.broadcast %0 : vector<16x1xi32> to vector<16x128xi32>
    %3 = arith.cmpi eq, %2, %1 : vector<16x128xi32>
    %4 = arith.extui %3 : vector<16x128xi1> to vector<16x128xi32>
    %5 = arith.sitofp %4 : vector<16x128xi32> to vector<16x128xf32>
    %c0_1 = arith.constant 0 : index
    %c0_2 = arith.constant 0 : index
    %6 = vector.load %arg2[%c0_1, %c0_2] : memref<128x128xf32, #tpu.memory_space<vmem>>, vector<128x128xf32>
    %cst = arith.constant dense<0.000000e+00> : vector<16x128xf32>
    %7 = tpu.matmul %5, %6, %cst {dimension_numbers = #tpu.dot_dimension_numbers<[1], [0], [0], [1], [0, 0, 1, 1], [], []>} : vector<16x128xf32>, vector<128x128xf32>, vector<16x128xf32> -> vector<16x128xf32>
    %c0_3 = arith.constant 0 : index
    %c0_4 = arith.constant 0 : index
    %8 = vector.load %arg3[%c0_3, %c0_4] : memref<8x128xf32, #tpu.memory_space<vmem>>, vector<8x128xf32>
    %9 = tpu.concatenate %8, %8 in 0 : vector<8x128xf32>, vector<8x128xf32> -> vector<16x128xf32>
    %10 = arith.addf %7, %9 : vector<16x128xf32>
    %c0_5 = arith.constant 0 : index
    %c0_6 = arith.constant 0 : index
    %11 = vector.load %arg4[%c0_5, %c0_6] : memref<1x128xf32, #tpu.memory_space<vmem>>, vector<1x128xf32>
    %c0_7 = arith.constant 0 : index
    %c0_8 = arith.constant 0 : index
    %12 = vector.load %arg5[%c0_7, %c0_8] : memref<1x128xf32, #tpu.memory_space<vmem>>, vector<1x128xf32>
    %cst_9 = arith.constant dense<0.000000e+00> : vector<16xf32>
    %13 = vector.multi_reduction <add>, %10, %cst_9 [1] : vector<16x128xf32> to vector<16xf32>
    %14 = vector.shape_cast %13 : vector<16xf32> to vector<16x1xf32>
    %cst_10 = arith.constant 1.280000e+02 : f32
    %15 = vector.broadcast %cst_10 : f32 to vector<16x1xf32>
    %16 = arith.divf %14, %15 : vector<16x1xf32>
    %17 = vector.broadcast %16 : vector<16x1xf32> to vector<16x128xf32>
    %18 = arith.subf %10, %17 : vector<16x128xf32>
    %19 = arith.mulf %18, %18 : vector<16x128xf32>
    %cst_11 = arith.constant dense<0.000000e+00> : vector<16xf32>
    %20 = vector.multi_reduction <add>, %19, %cst_11 [1] : vector<16x128xf32> to vector<16xf32>
    %21 = vector.shape_cast %20 : vector<16xf32> to vector<16x1xf32>
    %cst_12 = arith.constant 1.280000e+02 : f32
    %22 = vector.broadcast %cst_12 : f32 to vector<16x1xf32>
    %23 = arith.divf %21, %22 : vector<16x1xf32>
    %24 = vector.broadcast %16 : vector<16x1xf32> to vector<16x128xf32>
    %25 = arith.subf %10, %24 : vector<16x128xf32>
    %cst_13 = arith.constant 9.99999996E-13 : f32
    %26 = vector.broadcast %cst_13 : f32 to vector<16x1xf32>
    %27 = arith.addf %23, %26 : vector<16x1xf32>
    %28 = math.rsqrt %27 : vector<16x1xf32>
    %29 = vector.broadcast %28 : vector<16x1xf32> to vector<16x128xf32>
    %30 = arith.mulf %25, %29 : vector<16x128xf32>
    %31 = vector.broadcast %11 : vector<1x128xf32> to vector<16x128xf32>
    %32 = arith.mulf %30, %31 : vector<16x128xf32>
    %33 = vector.broadcast %12 : vector<1x128xf32> to vector<16x128xf32>
    %34 = arith.addf %32, %33 : vector<16x128xf32>
    %c0_14 = arith.constant 0 : index
    %c0_15 = arith.constant 0 : index
    %c0_16 = arith.constant 0 : index
    %35 = vector.load %arg6[%c0_14, %c0_15, %c0_16] : memref<2x1x128xf32, #tpu.memory_space<vmem>>, vector<1x1x128xf32>
    %36 = vector.shape_cast %35 : vector<1x1x128xf32> to vector<1x128xf32>
    %c0_17 = arith.constant 0 : index
    %c0_18 = arith.constant 0 : index
    %c0_19 = arith.constant 0 : index
    %37 = vector.load %arg7[%c0_17, %c0_18, %c0_19] : memref<2x1x128xf32, #tpu.memory_space<vmem>>, vector<1x1x128xf32>
    %38 = vector.shape_cast %37 : vector<1x1x128xf32> to vector<1x128xf32>
    %cst_20 = arith.constant dense<0.000000e+00> : vector<16xf32>
    %39 = vector.multi_reduction <add>, %34, %cst_20 [1] : vector<16x128xf32> to vector<16xf32>
    %40 = vector.shape_cast %39 : vector<16xf32> to vector<16x1xf32>
    %cst_21 = arith.constant 1.280000e+02 : f32
    %41 = vector.broadcast %cst_21 : f32 to vector<16x1xf32>
    %42 = arith.divf %40, %41 : vector<16x1xf32>
    %43 = vector.broadcast %42 : vector<16x1xf32> to vector<16x128xf32>
    %44 = arith.subf %34, %43 : vector<16x128xf32>
    %45 = arith.mulf %44, %44 : vector<16x128xf32>
    %cst_22 = arith.constant dense<0.000000e+00> : vector<16xf32>
    %46 = vector.multi_reduction <add>, %45, %cst_22 [1] : vector<16x128xf32> to vector<16xf32>
    %47 = vector.shape_cast %46 : vector<16xf32> to vector<16x1xf32>
    %cst_23 = arith.constant 1.280000e+02 : f32
    %48 = vector.broadcast %cst_23 : f32 to vector<16x1xf32>
    %49 = arith.divf %47, %48 : vector<16x1xf32>
    %50 = vector.broadcast %42 : vector<16x1xf32> to vector<16x128xf32>
    %51 = arith.subf %34, %50 : vector<16x128xf32>
    %cst_24 = arith.constant 9.99999974E-6 : f32
    %52 = vector.broadcast %cst_24 : f32 to vector<16x1xf32>
    %53 = arith.addf %49, %52 : vector<16x1xf32>
    %54 = math.rsqrt %53 : vector<16x1xf32>
    %55 = vector.broadcast %54 : vector<16x1xf32> to vector<16x128xf32>
    %56 = arith.mulf %51, %55 : vector<16x128xf32>
    %57 = vector.broadcast %36 : vector<1x128xf32> to vector<16x128xf32>
    %58 = arith.mulf %56, %57 : vector<16x128xf32>
    %59 = vector.broadcast %38 : vector<1x128xf32> to vector<16x128xf32>
    %60 = arith.addf %58, %59 : vector<16x128xf32>
    %c0_25 = arith.constant 0 : index
    %c0_26 = arith.constant 0 : index
    %c0_27 = arith.constant 0 : index
    %61 = vector.load %arg8[%c0_25, %c0_26, %c0_27] : memref<2x128x384xf32, #tpu.memory_space<vmem>>, vector<1x128x384xf32>
    %62 = vector.shape_cast %61 : vector<1x128x384xf32> to vector<128x384xf32>
    %cst_28 = arith.constant dense<0.000000e+00> : vector<16x384xf32>
    %63 = tpu.matmul %60, %62, %cst_28 {dimension_numbers = #tpu.dot_dimension_numbers<[1], [0], [0], [1], [0, 0, 1, 1], [], []>} : vector<16x128xf32>, vector<128x384xf32>, vector<16x384xf32> -> vector<16x384xf32>
    %c0_29 = arith.constant 0 : index
    %c0_30 = arith.constant 0 : index
    %c0_31 = arith.constant 0 : index
    %64 = vector.load %arg9[%c0_29, %c0_30, %c0_31] : memref<2x1x384xf32, #tpu.memory_space<vmem>>, vector<1x1x384xf32>
    %65 = vector.shape_cast %64 : vector<1x1x384xf32> to vector<1x384xf32>
    %66 = vector.broadcast %65 : vector<1x384xf32> to vector<16x384xf32>
    %67 = arith.addf %63, %66 : vector<16x384xf32>
    %68 = vector.extract_strided_slice %67 {offsets = [0, 0], sizes = [16, 128], strides = [1, 1]} : vector<16x384xf32> to vector<16x128xf32>
    %cst_32 = arith.constant 1.250000e-01 : f32
    %69 = vector.broadcast %cst_32 : f32 to vector<16x128xf32>
    %70 = arith.mulf %68, %69 : vector<16x128xf32>
    %71 = vector.extract_strided_slice %67 {offsets = [0, 128], sizes = [16, 128], strides = [1, 1]} : vector<16x384xf32> to vector<16x128xf32>
    %72 = vector.extract_strided_slice %67 {offsets = [0, 256], sizes = [16, 128], strides = [1, 1]} : vector<16x384xf32> to vector<16x128xf32>
    %73 = vector.extract_strided_slice %70 {offsets = [0, 0], sizes = [8, 64], strides = [1, 1]} : vector<16x128xf32> to vector<8x64xf32>
    %74 = vector.extract_strided_slice %71 {offsets = [0, 0], sizes = [8, 64], strides = [1, 1]} : vector<16x128xf32> to vector<8x64xf32>
    %75 = vector.extract_strided_slice %72 {offsets = [0, 0], sizes = [8, 64], strides = [1, 1]} : vector<16x128xf32> to vector<8x64xf32>
    %cst_33 = arith.constant dense<0.000000e+00> : vector<8x8xf32>
    %76 = tpu.matmul %73, %74, %cst_33 {dimension_numbers = #tpu.dot_dimension_numbers<[1], [1], [0], [0], [0, 0, 1, 0], [], []>} : vector<8x64xf32>, vector<8x64xf32>, vector<8x8xf32> -> vector<8x8xf32>
    %cst_34 = arith.constant dense<0xFF800000> : vector<8xf32>
    %77 = vector.multi_reduction <maximumf>, %76, %cst_34 [1] : vector<8x8xf32> to vector<8xf32>
    %78 = vector.shape_cast %77 : vector<8xf32> to vector<8x1xf32>
    %79 = vector.broadcast %78 : vector<8x1xf32> to vector<8x8xf32>
    %80 = arith.subf %76, %79 : vector<8x8xf32>
    %81 = math.exp %80 : vector<8x8xf32>
    %cst_35 = arith.constant dense<0.000000e+00> : vector<8xf32>
    %82 = vector.multi_reduction <add>, %81, %cst_35 [1] : vector<8x8xf32> to vector<8xf32>
    %83 = vector.shape_cast %82 : vector<8xf32> to vector<8x1xf32>
    %84 = vector.broadcast %83 : vector<8x1xf32> to vector<8x8xf32>
    %85 = arith.divf %81, %84 : vector<8x8xf32>
    %cst_36 = arith.constant dense<0.000000e+00> : vector<8x64xf32>
    %86 = tpu.matmul %85, %75, %cst_36 {dimension_numbers = #tpu.dot_dimension_numbers<[1], [0], [0], [1], [0, 0, 1, 1], [], []>} : vector<8x8xf32>, vector<8x64xf32>, vector<8x64xf32> -> vector<8x64xf32>
    %87 = vector.extract_strided_slice %70 {offsets = [0, 64], sizes = [8, 64], strides = [1, 1]} : vector<16x128xf32> to vector<8x64xf32>
    %88 = vector.extract_strided_slice %71 {offsets = [0, 64], sizes = [8, 64], strides = [1, 1]} : vector<16x128xf32> to vector<8x64xf32>
    %89 = vector.extract_strided_slice %72 {offsets = [0, 64], sizes = [8, 64], strides = [1, 1]} : vector<16x128xf32> to vector<8x64xf32>
    %cst_37 = arith.constant dense<0.000000e+00> : vector<8x8xf32>
    %90 = tpu.matmul %87, %88, %cst_37 {dimension_numbers = #tpu.dot_dimension_numbers<[1], [1], [0], [0], [0, 0, 1, 0], [], []>} : vector<8x64xf32>, vector<8x64xf32>, vector<8x8xf32> -> vector<8x8xf32>
    %cst_38 = arith.constant dense<0xFF800000> : vector<8xf32>
    %91 = vector.multi_reduction <maximumf>, %90, %cst_38 [1] : vector<8x8xf32> to vector<8xf32>
    %92 = vector.shape_cast %91 : vector<8xf32> to vector<8x1xf32>
    %93 = vector.broadcast %92 : vector<8x1xf32> to vector<8x8xf32>
    %94 = arith.subf %90, %93 : vector<8x8xf32>
    %95 = math.exp %94 : vector<8x8xf32>
    %cst_39 = arith.constant dense<0.000000e+00> : vector<8xf32>
    %96 = vector.multi_reduction <add>, %95, %cst_39 [1] : vector<8x8xf32> to vector<8xf32>
    %97 = vector.shape_cast %96 : vector<8xf32> to vector<8x1xf32>
    %98 = vector.broadcast %97 : vector<8x1xf32> to vector<8x8xf32>
    %99 = arith.divf %95, %98 : vector<8x8xf32>
    %cst_40 = arith.constant dense<0.000000e+00> : vector<8x64xf32>
    %100 = tpu.matmul %99, %89, %cst_40 {dimension_numbers = #tpu.dot_dimension_numbers<[1], [0], [0], [1], [0, 0, 1, 1], [], []>} : vector<8x8xf32>, vector<8x64xf32>, vector<8x64xf32> -> vector<8x64xf32>
    %101 = tpu.concatenate %86, %100 in 1 : vector<8x64xf32>, vector<8x64xf32> -> vector<8x128xf32>
    %102 = vector.extract_strided_slice %70 {offsets = [8, 0], sizes = [8, 64], strides = [1, 1]} : vector<16x128xf32> to vector<8x64xf32>
    %103 = vector.extract_strided_slice %71 {offsets = [8, 0], sizes = [8, 64], strides = [1, 1]} : vector<16x128xf32> to vector<8x64xf32>
    %104 = vector.extract_strided_slice %72 {offsets = [8, 0], sizes = [8, 64], strides = [1, 1]} : vector<16x128xf32> to vector<8x64xf32>
    %cst_41 = arith.constant dense<0.000000e+00> : vector<8x8xf32>
    %105 = tpu.matmul %102, %103, %cst_41 {dimension_numbers = #tpu.dot_dimension_numbers<[1], [1], [0], [0], [0, 0, 1, 0], [], []>} : vector<8x64xf32>, vector<8x64xf32>, vector<8x8xf32> -> vector<8x8xf32>
    %cst_42 = arith.constant dense<0xFF800000> : vector<8xf32>
    %106 = vector.multi_reduction <maximumf>, %105, %cst_42 [1] : vector<8x8xf32> to vector<8xf32>
    %107 = vector.shape_cast %106 : vector<8xf32> to vector<8x1xf32>
    %108 = vector.broadcast %107 : vector<8x1xf32> to vector<8x8xf32>
    %109 = arith.subf %105, %108 : vector<8x8xf32>
    %110 = math.exp %109 : vector<8x8xf32>
    %cst_43 = arith.constant dense<0.000000e+00> : vector<8xf32>
    %111 = vector.multi_reduction <add>, %110, %cst_43 [1] : vector<8x8xf32> to vector<8xf32>
    %112 = vector.shape_cast %111 : vector<8xf32> to vector<8x1xf32>
    %113 = vector.broadcast %112 : vector<8x1xf32> to vector<8x8xf32>
    %114 = arith.divf %110, %113 : vector<8x8xf32>
    %cst_44 = arith.constant dense<0.000000e+00> : vector<8x64xf32>
    %115 = tpu.matmul %114, %104, %cst_44 {dimension_numbers = #tpu.dot_dimension_numbers<[1], [0], [0], [1], [0, 0, 1, 1], [], []>} : vector<8x8xf32>, vector<8x64xf32>, vector<8x64xf32> -> vector<8x64xf32>
    %116 = vector.extract_strided_slice %70 {offsets = [8, 64], sizes = [8, 64], strides = [1, 1]} : vector<16x128xf32> to vector<8x64xf32>
    %117 = vector.extract_strided_slice %71 {offsets = [8, 64], sizes = [8, 64], strides = [1, 1]} : vector<16x128xf32> to vector<8x64xf32>
    %118 = vector.extract_strided_slice %72 {offsets = [8, 64], sizes = [8, 64], strides = [1, 1]} : vector<16x128xf32> to vector<8x64xf32>
    %cst_45 = arith.constant dense<0.000000e+00> : vector<8x8xf32>
    %119 = tpu.matmul %116, %117, %cst_45 {dimension_numbers = #tpu.dot_dimension_numbers<[1], [1], [0], [0], [0, 0, 1, 0], [], []>} : vector<8x64xf32>, vector<8x64xf32>, vector<8x8xf32> -> vector<8x8xf32>
    %cst_46 = arith.constant dense<0xFF800000> : vector<8xf32>
    %120 = vector.multi_reduction <maximumf>, %119, %cst_46 [1] : vector<8x8xf32> to vector<8xf32>
    %121 = vector.shape_cast %120 : vector<8xf32> to vector<8x1xf32>
    %122 = vector.broadcast %121 : vector<8x1xf32> to vector<8x8xf32>
    %123 = arith.subf %119, %122 : vector<8x8xf32>
    %124 = math.exp %123 : vector<8x8xf32>
    %cst_47 = arith.constant dense<0.000000e+00> : vector<8xf32>
    %125 = vector.multi_reduction <add>, %124, %cst_47 [1] : vector<8x8xf32> to vector<8xf32>
    %126 = vector.shape_cast %125 : vector<8xf32> to vector<8x1xf32>
    %127 = vector.broadcast %126 : vector<8x1xf32> to vector<8x8xf32>
    %128 = arith.divf %124, %127 : vector<8x8xf32>
    %cst_48 = arith.constant dense<0.000000e+00> : vector<8x64xf32>
    %129 = tpu.matmul %128, %118, %cst_48 {dimension_numbers = #tpu.dot_dimension_numbers<[1], [0], [0], [1], [0, 0, 1, 1], [], []>} : vector<8x8xf32>, vector<8x64xf32>, vector<8x64xf32> -> vector<8x64xf32>
    %130 = tpu.concatenate %115, %129 in 1 : vector<8x64xf32>, vector<8x64xf32> -> vector<8x128xf32>
    %131 = tpu.concatenate %101, %130 in 0 : vector<8x128xf32>, vector<8x128xf32> -> vector<16x128xf32>
    %c0_49 = arith.constant 0 : index
    %c0_50 = arith.constant 0 : index
    %c0_51 = arith.constant 0 : index
    %132 = vector.load %arg10[%c0_49, %c0_50, %c0_51] : memref<2x128x128xf32, #tpu.memory_space<vmem>>, vector<1x128x128xf32>
    %133 = vector.shape_cast %132 : vector<1x128x128xf32> to vector<128x128xf32>
    %cst_52 = arith.constant dense<0.000000e+00> : vector<16x128xf32>
    %134 = tpu.matmul %131, %133, %cst_52 {dimension_numbers = #tpu.dot_dimension_numbers<[1], [0], [0], [1], [0, 0, 1, 1], [], []>} : vector<16x128xf32>, vector<128x128xf32>, vector<16x128xf32> -> vector<16x128xf32>
    %135 = arith.addf %34, %134 : vector<16x128xf32>
    %c0_53 = arith.constant 0 : index
    %c0_54 = arith.constant 0 : index
    %c0_55 = arith.constant 0 : index
    %136 = vector.load %arg11[%c0_53, %c0_54, %c0_55] : memref<2x1x128xf32, #tpu.memory_space<vmem>>, vector<1x1x128xf32>
    %137 = vector.shape_cast %136 : vector<1x1x128xf32> to vector<1x128xf32>
    %138 = vector.broadcast %137 : vector<1x128xf32> to vector<16x128xf32>
    %139 = arith.addf %135, %138 : vector<16x128xf32>
    %c0_56 = arith.constant 0 : index
    %c0_57 = arith.constant 0 : index
    %c0_58 = arith.constant 0 : index
    %140 = vector.load %arg12[%c0_56, %c0_57, %c0_58] : memref<2x1x128xf32, #tpu.memory_space<vmem>>, vector<1x1x128xf32>
    %141 = vector.shape_cast %140 : vector<1x1x128xf32> to vector<1x128xf32>
    %c0_59 = arith.constant 0 : index
    %c0_60 = arith.constant 0 : index
    %c0_61 = arith.constant 0 : index
    %142 = vector.load %arg13[%c0_59, %c0_60, %c0_61] : memref<2x1x128xf32, #tpu.memory_space<vmem>>, vector<1x1x128xf32>
    %143 = vector.shape_cast %142 : vector<1x1x128xf32> to vector<1x128xf32>
    %cst_62 = arith.constant dense<0.000000e+00> : vector<16xf32>
    %144 = vector.multi_reduction <add>, %139, %cst_62 [1] : vector<16x128xf32> to vector<16xf32>
    %145 = vector.shape_cast %144 : vector<16xf32> to vector<16x1xf32>
    %cst_63 = arith.constant 1.280000e+02 : f32
    %146 = vector.broadcast %cst_63 : f32 to vector<16x1xf32>
    %147 = arith.divf %145, %146 : vector<16x1xf32>
    %148 = vector.broadcast %147 : vector<16x1xf32> to vector<16x128xf32>
    %149 = arith.subf %139, %148 : vector<16x128xf32>
    %150 = arith.mulf %149, %149 : vector<16x128xf32>
    %cst_64 = arith.constant dense<0.000000e+00> : vector<16xf32>
    %151 = vector.multi_reduction <add>, %150, %cst_64 [1] : vector<16x128xf32> to vector<16xf32>
    %152 = vector.shape_cast %151 : vector<16xf32> to vector<16x1xf32>
    %cst_65 = arith.constant 1.280000e+02 : f32
    %153 = vector.broadcast %cst_65 : f32 to vector<16x1xf32>
    %154 = arith.divf %152, %153 : vector<16x1xf32>
    %155 = vector.broadcast %147 : vector<16x1xf32> to vector<16x128xf32>
    %156 = arith.subf %139, %155 : vector<16x128xf32>
    %cst_66 = arith.constant 9.99999974E-6 : f32
    %157 = vector.broadcast %cst_66 : f32 to vector<16x1xf32>
    %158 = arith.addf %154, %157 : vector<16x1xf32>
    %159 = math.rsqrt %158 : vector<16x1xf32>
    %160 = vector.broadcast %159 : vector<16x1xf32> to vector<16x128xf32>
    %161 = arith.mulf %156, %160 : vector<16x128xf32>
    %162 = vector.broadcast %141 : vector<1x128xf32> to vector<16x128xf32>
    %163 = arith.mulf %161, %162 : vector<16x128xf32>
    %164 = vector.broadcast %143 : vector<1x128xf32> to vector<16x128xf32>
    %165 = arith.addf %163, %164 : vector<16x128xf32>
    %c0_67 = arith.constant 0 : index
    %c0_68 = arith.constant 0 : index
    %c0_69 = arith.constant 0 : index
    %166 = vector.load %arg14[%c0_67, %c0_68, %c0_69] : memref<2x128x256xf32, #tpu.memory_space<vmem>>, vector<1x128x256xf32>
    %167 = vector.shape_cast %166 : vector<1x128x256xf32> to vector<128x256xf32>
    %cst_70 = arith.constant dense<0.000000e+00> : vector<16x256xf32>
    %168 = tpu.matmul %165, %167, %cst_70 {dimension_numbers = #tpu.dot_dimension_numbers<[1], [0], [0], [1], [0, 0, 1, 1], [], []>} : vector<16x128xf32>, vector<128x256xf32>, vector<16x256xf32> -> vector<16x256xf32>
    %c0_71 = arith.constant 0 : index
    %c0_72 = arith.constant 0 : index
    %c0_73 = arith.constant 0 : index
    %169 = vector.load %arg15[%c0_71, %c0_72, %c0_73] : memref<2x1x256xf32, #tpu.memory_space<vmem>>, vector<1x1x256xf32>
    %170 = vector.shape_cast %169 : vector<1x1x256xf32> to vector<1x256xf32>
    %171 = vector.broadcast %170 : vector<1x256xf32> to vector<16x256xf32>
    %172 = arith.addf %168, %171 : vector<16x256xf32>
    %cst_74 = arith.constant 5.000000e-01 : f32
    %173 = vector.broadcast %cst_74 : f32 to vector<16x256xf32>
    %174 = arith.mulf %173, %172 : vector<16x256xf32>
    %cst_75 = arith.constant 4.471500e-02 : f32
    %175 = vector.broadcast %cst_75 : f32 to vector<16x256xf32>
    %176 = arith.mulf %175, %172 : vector<16x256xf32>
    %177 = arith.mulf %176, %172 : vector<16x256xf32>
    %178 = arith.mulf %177, %172 : vector<16x256xf32>
    %179 = arith.addf %172, %178 : vector<16x256xf32>
    %cst_76 = arith.constant 0.797884583 : f32
    %180 = vector.broadcast %cst_76 : f32 to vector<16x256xf32>
    %181 = arith.mulf %180, %179 : vector<16x256xf32>
    %182 = math.tanh %181 : vector<16x256xf32>
    %cst_77 = arith.constant 1.000000e+00 : f32
    %183 = vector.broadcast %cst_77 : f32 to vector<16x256xf32>
    %184 = arith.addf %183, %182 : vector<16x256xf32>
    %185 = arith.mulf %174, %184 : vector<16x256xf32>
    %c0_78 = arith.constant 0 : index
    %c0_79 = arith.constant 0 : index
    %c0_80 = arith.constant 0 : index
    %186 = vector.load %arg16[%c0_78, %c0_79, %c0_80] : memref<2x256x128xf32, #tpu.memory_space<vmem>>, vector<1x256x128xf32>
    %187 = vector.shape_cast %186 : vector<1x256x128xf32> to vector<256x128xf32>
    %cst_81 = arith.constant dense<0.000000e+00> : vector<16x128xf32>
    %188 = tpu.matmul %185, %187, %cst_81 {dimension_numbers = #tpu.dot_dimension_numbers<[1], [0], [0], [1], [0, 0, 1, 1], [], []>} : vector<16x256xf32>, vector<256x128xf32>, vector<16x128xf32> -> vector<16x128xf32>
    %189 = arith.addf %139, %188 : vector<16x128xf32>
    %c0_82 = arith.constant 0 : index
    %c0_83 = arith.constant 0 : index
    %c0_84 = arith.constant 0 : index
    %190 = vector.load %arg17[%c0_82, %c0_83, %c0_84] : memref<2x1x128xf32, #tpu.memory_space<vmem>>, vector<1x1x128xf32>
    %191 = vector.shape_cast %190 : vector<1x1x128xf32> to vector<1x128xf32>
    %192 = vector.broadcast %191 : vector<1x128xf32> to vector<16x128xf32>
    %193 = arith.addf %189, %192 : vector<16x128xf32>
    %c1 = arith.constant 1 : index
    %c0_85 = arith.constant 0 : index
    %c0_86 = arith.constant 0 : index
    %194 = vector.load %arg6[%c1, %c0_85, %c0_86] : memref<2x1x128xf32, #tpu.memory_space<vmem>>, vector<1x1x128xf32>
    %195 = vector.shape_cast %194 : vector<1x1x128xf32> to vector<1x128xf32>
    %c1_87 = arith.constant 1 : index
    %c0_88 = arith.constant 0 : index
    %c0_89 = arith.constant 0 : index
    %196 = vector.load %arg7[%c1_87, %c0_88, %c0_89] : memref<2x1x128xf32, #tpu.memory_space<vmem>>, vector<1x1x128xf32>
    %197 = vector.shape_cast %196 : vector<1x1x128xf32> to vector<1x128xf32>
    %cst_90 = arith.constant dense<0.000000e+00> : vector<16xf32>
    %198 = vector.multi_reduction <add>, %193, %cst_90 [1] : vector<16x128xf32> to vector<16xf32>
    %199 = vector.shape_cast %198 : vector<16xf32> to vector<16x1xf32>
    %cst_91 = arith.constant 1.280000e+02 : f32
    %200 = vector.broadcast %cst_91 : f32 to vector<16x1xf32>
    %201 = arith.divf %199, %200 : vector<16x1xf32>
    %202 = vector.broadcast %201 : vector<16x1xf32> to vector<16x128xf32>
    %203 = arith.subf %193, %202 : vector<16x128xf32>
    %204 = arith.mulf %203, %203 : vector<16x128xf32>
    %cst_92 = arith.constant dense<0.000000e+00> : vector<16xf32>
    %205 = vector.multi_reduction <add>, %204, %cst_92 [1] : vector<16x128xf32> to vector<16xf32>
    %206 = vector.shape_cast %205 : vector<16xf32> to vector<16x1xf32>
    %cst_93 = arith.constant 1.280000e+02 : f32
    %207 = vector.broadcast %cst_93 : f32 to vector<16x1xf32>
    %208 = arith.divf %206, %207 : vector<16x1xf32>
    %209 = vector.broadcast %201 : vector<16x1xf32> to vector<16x128xf32>
    %210 = arith.subf %193, %209 : vector<16x128xf32>
    %cst_94 = arith.constant 9.99999974E-6 : f32
    %211 = vector.broadcast %cst_94 : f32 to vector<16x1xf32>
    %212 = arith.addf %208, %211 : vector<16x1xf32>
    %213 = math.rsqrt %212 : vector<16x1xf32>
    %214 = vector.broadcast %213 : vector<16x1xf32> to vector<16x128xf32>
    %215 = arith.mulf %210, %214 : vector<16x128xf32>
    %216 = vector.broadcast %195 : vector<1x128xf32> to vector<16x128xf32>
    %217 = arith.mulf %215, %216 : vector<16x128xf32>
    %218 = vector.broadcast %197 : vector<1x128xf32> to vector<16x128xf32>
    %219 = arith.addf %217, %218 : vector<16x128xf32>
    %c1_95 = arith.constant 1 : index
    %c0_96 = arith.constant 0 : index
    %c0_97 = arith.constant 0 : index
    %220 = vector.load %arg8[%c1_95, %c0_96, %c0_97] : memref<2x128x384xf32, #tpu.memory_space<vmem>>, vector<1x128x384xf32>
    %221 = vector.shape_cast %220 : vector<1x128x384xf32> to vector<128x384xf32>
    %cst_98 = arith.constant dense<0.000000e+00> : vector<16x384xf32>
    %222 = tpu.matmul %219, %221, %cst_98 {dimension_numbers = #tpu.dot_dimension_numbers<[1], [0], [0], [1], [0, 0, 1, 1], [], []>} : vector<16x128xf32>, vector<128x384xf32>, vector<16x384xf32> -> vector<16x384xf32>
    %c1_99 = arith.constant 1 : index
    %c0_100 = arith.constant 0 : index
    %c0_101 = arith.constant 0 : index
    %223 = vector.load %arg9[%c1_99, %c0_100, %c0_101] : memref<2x1x384xf32, #tpu.memory_space<vmem>>, vector<1x1x384xf32>
    %224 = vector.shape_cast %223 : vector<1x1x384xf32> to vector<1x384xf32>
    %225 = vector.broadcast %224 : vector<1x384xf32> to vector<16x384xf32>
    %226 = arith.addf %222, %225 : vector<16x384xf32>
    %227 = vector.extract_strided_slice %226 {offsets = [0, 0], sizes = [16, 128], strides = [1, 1]} : vector<16x384xf32> to vector<16x128xf32>
    %cst_102 = arith.constant 1.250000e-01 : f32
    %228 = vector.broadcast %cst_102 : f32 to vector<16x128xf32>
    %229 = arith.mulf %227, %228 : vector<16x128xf32>
    %230 = vector.extract_strided_slice %226 {offsets = [0, 128], sizes = [16, 128], strides = [1, 1]} : vector<16x384xf32> to vector<16x128xf32>
    %231 = vector.extract_strided_slice %226 {offsets = [0, 256], sizes = [16, 128], strides = [1, 1]} : vector<16x384xf32> to vector<16x128xf32>
    %232 = vector.extract_strided_slice %229 {offsets = [0, 0], sizes = [8, 64], strides = [1, 1]} : vector<16x128xf32> to vector<8x64xf32>
    %233 = vector.extract_strided_slice %230 {offsets = [0, 0], sizes = [8, 64], strides = [1, 1]} : vector<16x128xf32> to vector<8x64xf32>
    %234 = vector.extract_strided_slice %231 {offsets = [0, 0], sizes = [8, 64], strides = [1, 1]} : vector<16x128xf32> to vector<8x64xf32>
    %cst_103 = arith.constant dense<0.000000e+00> : vector<8x8xf32>
    %235 = tpu.matmul %232, %233, %cst_103 {dimension_numbers = #tpu.dot_dimension_numbers<[1], [1], [0], [0], [0, 0, 1, 0], [], []>} : vector<8x64xf32>, vector<8x64xf32>, vector<8x8xf32> -> vector<8x8xf32>
    %cst_104 = arith.constant dense<0xFF800000> : vector<8xf32>
    %236 = vector.multi_reduction <maximumf>, %235, %cst_104 [1] : vector<8x8xf32> to vector<8xf32>
    %237 = vector.shape_cast %236 : vector<8xf32> to vector<8x1xf32>
    %238 = vector.broadcast %237 : vector<8x1xf32> to vector<8x8xf32>
    %239 = arith.subf %235, %238 : vector<8x8xf32>
    %240 = math.exp %239 : vector<8x8xf32>
    %cst_105 = arith.constant dense<0.000000e+00> : vector<8xf32>
    %241 = vector.multi_reduction <add>, %240, %cst_105 [1] : vector<8x8xf32> to vector<8xf32>
    %242 = vector.shape_cast %241 : vector<8xf32> to vector<8x1xf32>
    %243 = vector.broadcast %242 : vector<8x1xf32> to vector<8x8xf32>
    %244 = arith.divf %240, %243 : vector<8x8xf32>
    %cst_106 = arith.constant dense<0.000000e+00> : vector<8x64xf32>
    %245 = tpu.matmul %244, %234, %cst_106 {dimension_numbers = #tpu.dot_dimension_numbers<[1], [0], [0], [1], [0, 0, 1, 1], [], []>} : vector<8x8xf32>, vector<8x64xf32>, vector<8x64xf32> -> vector<8x64xf32>
    %246 = vector.extract_strided_slice %229 {offsets = [0, 64], sizes = [8, 64], strides = [1, 1]} : vector<16x128xf32> to vector<8x64xf32>
    %247 = vector.extract_strided_slice %230 {offsets = [0, 64], sizes = [8, 64], strides = [1, 1]} : vector<16x128xf32> to vector<8x64xf32>
    %248 = vector.extract_strided_slice %231 {offsets = [0, 64], sizes = [8, 64], strides = [1, 1]} : vector<16x128xf32> to vector<8x64xf32>
    %cst_107 = arith.constant dense<0.000000e+00> : vector<8x8xf32>
    %249 = tpu.matmul %246, %247, %cst_107 {dimension_numbers = #tpu.dot_dimension_numbers<[1], [1], [0], [0], [0, 0, 1, 0], [], []>} : vector<8x64xf32>, vector<8x64xf32>, vector<8x8xf32> -> vector<8x8xf32>
    %cst_108 = arith.constant dense<0xFF800000> : vector<8xf32>
    %250 = vector.multi_reduction <maximumf>, %249, %cst_108 [1] : vector<8x8xf32> to vector<8xf32>
    %251 = vector.shape_cast %250 : vector<8xf32> to vector<8x1xf32>
    %252 = vector.broadcast %251 : vector<8x1xf32> to vector<8x8xf32>
    %253 = arith.subf %249, %252 : vector<8x8xf32>
    %254 = math.exp %253 : vector<8x8xf32>
    %cst_109 = arith.constant dense<0.000000e+00> : vector<8xf32>
    %255 = vector.multi_reduction <add>, %254, %cst_109 [1] : vector<8x8xf32> to vector<8xf32>
    %256 = vector.shape_cast %255 : vector<8xf32> to vector<8x1xf32>
    %257 = vector.broadcast %256 : vector<8x1xf32> to vector<8x8xf32>
    %258 = arith.divf %254, %257 : vector<8x8xf32>
    %cst_110 = arith.constant dense<0.000000e+00> : vector<8x64xf32>
    %259 = tpu.matmul %258, %248, %cst_110 {dimension_numbers = #tpu.dot_dimension_numbers<[1], [0], [0], [1], [0, 0, 1, 1], [], []>} : vector<8x8xf32>, vector<8x64xf32>, vector<8x64xf32> -> vector<8x64xf32>
    %260 = tpu.concatenate %245, %259 in 1 : vector<8x64xf32>, vector<8x64xf32> -> vector<8x128xf32>
    %261 = vector.extract_strided_slice %229 {offsets = [8, 0], sizes = [8, 64], strides = [1, 1]} : vector<16x128xf32> to vector<8x64xf32>
    %262 = vector.extract_strided_slice %230 {offsets = [8, 0], sizes = [8, 64], strides = [1, 1]} : vector<16x128xf32> to vector<8x64xf32>
    %263 = vector.extract_strided_slice %231 {offsets = [8, 0], sizes = [8, 64], strides = [1, 1]} : vector<16x128xf32> to vector<8x64xf32>
    %cst_111 = arith.constant dense<0.000000e+00> : vector<8x8xf32>
    %264 = tpu.matmul %261, %262, %cst_111 {dimension_numbers = #tpu.dot_dimension_numbers<[1], [1], [0], [0], [0, 0, 1, 0], [], []>} : vector<8x64xf32>, vector<8x64xf32>, vector<8x8xf32> -> vector<8x8xf32>
    %cst_112 = arith.constant dense<0xFF800000> : vector<8xf32>
    %265 = vector.multi_reduction <maximumf>, %264, %cst_112 [1] : vector<8x8xf32> to vector<8xf32>
    %266 = vector.shape_cast %265 : vector<8xf32> to vector<8x1xf32>
    %267 = vector.broadcast %266 : vector<8x1xf32> to vector<8x8xf32>
    %268 = arith.subf %264, %267 : vector<8x8xf32>
    %269 = math.exp %268 : vector<8x8xf32>
    %cst_113 = arith.constant dense<0.000000e+00> : vector<8xf32>
    %270 = vector.multi_reduction <add>, %269, %cst_113 [1] : vector<8x8xf32> to vector<8xf32>
    %271 = vector.shape_cast %270 : vector<8xf32> to vector<8x1xf32>
    %272 = vector.broadcast %271 : vector<8x1xf32> to vector<8x8xf32>
    %273 = arith.divf %269, %272 : vector<8x8xf32>
    %cst_114 = arith.constant dense<0.000000e+00> : vector<8x64xf32>
    %274 = tpu.matmul %273, %263, %cst_114 {dimension_numbers = #tpu.dot_dimension_numbers<[1], [0], [0], [1], [0, 0, 1, 1], [], []>} : vector<8x8xf32>, vector<8x64xf32>, vector<8x64xf32> -> vector<8x64xf32>
    %275 = vector.extract_strided_slice %229 {offsets = [8, 64], sizes = [8, 64], strides = [1, 1]} : vector<16x128xf32> to vector<8x64xf32>
    %276 = vector.extract_strided_slice %230 {offsets = [8, 64], sizes = [8, 64], strides = [1, 1]} : vector<16x128xf32> to vector<8x64xf32>
    %277 = vector.extract_strided_slice %231 {offsets = [8, 64], sizes = [8, 64], strides = [1, 1]} : vector<16x128xf32> to vector<8x64xf32>
    %cst_115 = arith.constant dense<0.000000e+00> : vector<8x8xf32>
    %278 = tpu.matmul %275, %276, %cst_115 {dimension_numbers = #tpu.dot_dimension_numbers<[1], [1], [0], [0], [0, 0, 1, 0], [], []>} : vector<8x64xf32>, vector<8x64xf32>, vector<8x8xf32> -> vector<8x8xf32>
    %cst_116 = arith.constant dense<0xFF800000> : vector<8xf32>
    %279 = vector.multi_reduction <maximumf>, %278, %cst_116 [1] : vector<8x8xf32> to vector<8xf32>
    %280 = vector.shape_cast %279 : vector<8xf32> to vector<8x1xf32>
    %281 = vector.broadcast %280 : vector<8x1xf32> to vector<8x8xf32>
    %282 = arith.subf %278, %281 : vector<8x8xf32>
    %283 = math.exp %282 : vector<8x8xf32>
    %cst_117 = arith.constant dense<0.000000e+00> : vector<8xf32>
    %284 = vector.multi_reduction <add>, %283, %cst_117 [1] : vector<8x8xf32> to vector<8xf32>
    %285 = vector.shape_cast %284 : vector<8xf32> to vector<8x1xf32>
    %286 = vector.broadcast %285 : vector<8x1xf32> to vector<8x8xf32>
    %287 = arith.divf %283, %286 : vector<8x8xf32>
    %cst_118 = arith.constant dense<0.000000e+00> : vector<8x64xf32>
    %288 = tpu.matmul %287, %277, %cst_118 {dimension_numbers = #tpu.dot_dimension_numbers<[1], [0], [0], [1], [0, 0, 1, 1], [], []>} : vector<8x8xf32>, vector<8x64xf32>, vector<8x64xf32> -> vector<8x64xf32>
    %289 = tpu.concatenate %274, %288 in 1 : vector<8x64xf32>, vector<8x64xf32> -> vector<8x128xf32>
    %290 = tpu.concatenate %260, %289 in 0 : vector<8x128xf32>, vector<8x128xf32> -> vector<16x128xf32>
    %c1_119 = arith.constant 1 : index
    %c0_120 = arith.constant 0 : index
    %c0_121 = arith.constant 0 : index
    %291 = vector.load %arg10[%c1_119, %c0_120, %c0_121] : memref<2x128x128xf32, #tpu.memory_space<vmem>>, vector<1x128x128xf32>
    %292 = vector.shape_cast %291 : vector<1x128x128xf32> to vector<128x128xf32>
    %cst_122 = arith.constant dense<0.000000e+00> : vector<16x128xf32>
    %293 = tpu.matmul %290, %292, %cst_122 {dimension_numbers = #tpu.dot_dimension_numbers<[1], [0], [0], [1], [0, 0, 1, 1], [], []>} : vector<16x128xf32>, vector<128x128xf32>, vector<16x128xf32> -> vector<16x128xf32>
    %294 = arith.addf %193, %293 : vector<16x128xf32>
    %c1_123 = arith.constant 1 : index
    %c0_124 = arith.constant 0 : index
    %c0_125 = arith.constant 0 : index
    %295 = vector.load %arg11[%c1_123, %c0_124, %c0_125] : memref<2x1x128xf32, #tpu.memory_space<vmem>>, vector<1x1x128xf32>
    %296 = vector.shape_cast %295 : vector<1x1x128xf32> to vector<1x128xf32>
    %297 = vector.broadcast %296 : vector<1x128xf32> to vector<16x128xf32>
    %298 = arith.addf %294, %297 : vector<16x128xf32>
    %c1_126 = arith.constant 1 : index
    %c0_127 = arith.constant 0 : index
    %c0_128 = arith.constant 0 : index
    %299 = vector.load %arg12[%c1_126, %c0_127, %c0_128] : memref<2x1x128xf32, #tpu.memory_space<vmem>>, vector<1x1x128xf32>
    %300 = vector.shape_cast %299 : vector<1x1x128xf32> to vector<1x128xf32>
    %c1_129 = arith.constant 1 : index
    %c0_130 = arith.constant 0 : index
    %c0_131 = arith.constant 0 : index
    %301 = vector.load %arg13[%c1_129, %c0_130, %c0_131] : memref<2x1x128xf32, #tpu.memory_space<vmem>>, vector<1x1x128xf32>
    %302 = vector.shape_cast %301 : vector<1x1x128xf32> to vector<1x128xf32>
    %cst_132 = arith.constant dense<0.000000e+00> : vector<16xf32>
    %303 = vector.multi_reduction <add>, %298, %cst_132 [1] : vector<16x128xf32> to vector<16xf32>
    %304 = vector.shape_cast %303 : vector<16xf32> to vector<16x1xf32>
    %cst_133 = arith.constant 1.280000e+02 : f32
    %305 = vector.broadcast %cst_133 : f32 to vector<16x1xf32>
    %306 = arith.divf %304, %305 : vector<16x1xf32>
    %307 = vector.broadcast %306 : vector<16x1xf32> to vector<16x128xf32>
    %308 = arith.subf %298, %307 : vector<16x128xf32>
    %309 = arith.mulf %308, %308 : vector<16x128xf32>
    %cst_134 = arith.constant dense<0.000000e+00> : vector<16xf32>
    %310 = vector.multi_reduction <add>, %309, %cst_134 [1] : vector<16x128xf32> to vector<16xf32>
    %311 = vector.shape_cast %310 : vector<16xf32> to vector<16x1xf32>
    %cst_135 = arith.constant 1.280000e+02 : f32
    %312 = vector.broadcast %cst_135 : f32 to vector<16x1xf32>
    %313 = arith.divf %311, %312 : vector<16x1xf32>
    %314 = vector.broadcast %306 : vector<16x1xf32> to vector<16x128xf32>
    %315 = arith.subf %298, %314 : vector<16x128xf32>
    %cst_136 = arith.constant 9.99999974E-6 : f32
    %316 = vector.broadcast %cst_136 : f32 to vector<16x1xf32>
    %317 = arith.addf %313, %316 : vector<16x1xf32>
    %318 = math.rsqrt %317 : vector<16x1xf32>
    %319 = vector.broadcast %318 : vector<16x1xf32> to vector<16x128xf32>
    %320 = arith.mulf %315, %319 : vector<16x128xf32>
    %321 = vector.broadcast %300 : vector<1x128xf32> to vector<16x128xf32>
    %322 = arith.mulf %320, %321 : vector<16x128xf32>
    %323 = vector.broadcast %302 : vector<1x128xf32> to vector<16x128xf32>
    %324 = arith.addf %322, %323 : vector<16x128xf32>
    %c1_137 = arith.constant 1 : index
    %c0_138 = arith.constant 0 : index
    %c0_139 = arith.constant 0 : index
    %325 = vector.load %arg14[%c1_137, %c0_138, %c0_139] : memref<2x128x256xf32, #tpu.memory_space<vmem>>, vector<1x128x256xf32>
    %326 = vector.shape_cast %325 : vector<1x128x256xf32> to vector<128x256xf32>
    %cst_140 = arith.constant dense<0.000000e+00> : vector<16x256xf32>
    %327 = tpu.matmul %324, %326, %cst_140 {dimension_numbers = #tpu.dot_dimension_numbers<[1], [0], [0], [1], [0, 0, 1, 1], [], []>} : vector<16x128xf32>, vector<128x256xf32>, vector<16x256xf32> -> vector<16x256xf32>
    %c1_141 = arith.constant 1 : index
    %c0_142 = arith.constant 0 : index
    %c0_143 = arith.constant 0 : index
    %328 = vector.load %arg15[%c1_141, %c0_142, %c0_143] : memref<2x1x256xf32, #tpu.memory_space<vmem>>, vector<1x1x256xf32>
    %329 = vector.shape_cast %328 : vector<1x1x256xf32> to vector<1x256xf32>
    %330 = vector.broadcast %329 : vector<1x256xf32> to vector<16x256xf32>
    %331 = arith.addf %327, %330 : vector<16x256xf32>
    %cst_144 = arith.constant 5.000000e-01 : f32
    %332 = vector.broadcast %cst_144 : f32 to vector<16x256xf32>
    %333 = arith.mulf %332, %331 : vector<16x256xf32>
    %cst_145 = arith.constant 4.471500e-02 : f32
    %334 = vector.broadcast %cst_145 : f32 to vector<16x256xf32>
    %335 = arith.mulf %334, %331 : vector<16x256xf32>
    %336 = arith.mulf %335, %331 : vector<16x256xf32>
    %337 = arith.mulf %336, %331 : vector<16x256xf32>
    %338 = arith.addf %331, %337 : vector<16x256xf32>
    %cst_146 = arith.constant 0.797884583 : f32
    %339 = vector.broadcast %cst_146 : f32 to vector<16x256xf32>
    %340 = arith.mulf %339, %338 : vector<16x256xf32>
    %341 = math.tanh %340 : vector<16x256xf32>
    %cst_147 = arith.constant 1.000000e+00 : f32
    %342 = vector.broadcast %cst_147 : f32 to vector<16x256xf32>
    %343 = arith.addf %342, %341 : vector<16x256xf32>
    %344 = arith.mulf %333, %343 : vector<16x256xf32>
    %c1_148 = arith.constant 1 : index
    %c0_149 = arith.constant 0 : index
    %c0_150 = arith.constant 0 : index
    %345 = vector.load %arg16[%c1_148, %c0_149, %c0_150] : memref<2x256x128xf32, #tpu.memory_space<vmem>>, vector<1x256x128xf32>
    %346 = vector.shape_cast %345 : vector<1x256x128xf32> to vector<256x128xf32>
    %cst_151 = arith.constant dense<0.000000e+00> : vector<16x128xf32>
    %347 = tpu.matmul %344, %346, %cst_151 {dimension_numbers = #tpu.dot_dimension_numbers<[1], [0], [0], [1], [0, 0, 1, 1], [], []>} : vector<16x256xf32>, vector<256x128xf32>, vector<16x128xf32> -> vector<16x128xf32>
    %348 = arith.addf %298, %347 : vector<16x128xf32>
    %c1_152 = arith.constant 1 : index
    %c0_153 = arith.constant 0 : index
    %c0_154 = arith.constant 0 : index
    %349 = vector.load %arg17[%c1_152, %c0_153, %c0_154] : memref<2x1x128xf32, #tpu.memory_space<vmem>>, vector<1x1x128xf32>
    %350 = vector.shape_cast %349 : vector<1x1x128xf32> to vector<1x128xf32>
    %351 = vector.broadcast %350 : vector<1x128xf32> to vector<16x128xf32>
    %352 = arith.addf %348, %351 : vector<16x128xf32>
    %353 = vector.extract_strided_slice %352 {offsets = [0, 0], sizes = [1, 128], strides = [1, 1]} : vector<16x128xf32> to vector<1x128xf32>
    %354 = vector.extract_strided_slice %352 {offsets = [8, 0], sizes = [1, 128], strides = [1, 1]} : vector<16x128xf32> to vector<1x128xf32>
    %355 = tpu.concatenate %353, %354 in 0 : vector<1x128xf32>, vector<1x128xf32> -> vector<2x128xf32>
    %c0_155 = arith.constant 0 : index
    %c0_156 = arith.constant 0 : index
    %356 = vector.load %arg18[%c0_155, %c0_156] : memref<128x128xf32, #tpu.memory_space<vmem>>, vector<128x128xf32>
    %cst_157 = arith.constant dense<0.000000e+00> : vector<2x128xf32>
    %357 = tpu.matmul %355, %356, %cst_157 {dimension_numbers = #tpu.dot_dimension_numbers<[1], [0], [0], [1], [0, 0, 1, 1], [], []>} : vector<2x128xf32>, vector<128x128xf32>, vector<2x128xf32> -> vector<2x128xf32>
    %c0_158 = arith.constant 0 : index
    %c0_159 = arith.constant 0 : index
    %358 = vector.load %arg19[%c0_158, %c0_159] : memref<1x128xf32, #tpu.memory_space<vmem>>, vector<1x128xf32>
    %359 = vector.broadcast %358 : vector<1x128xf32> to vector<2x128xf32>
    %360 = arith.addf %357, %359 : vector<2x128xf32>
    %c0_160 = arith.constant 0 : index
    %c0_161 = arith.constant 0 : index
    %361 = vector.load %arg20[%c0_160, %c0_161] : memref<2x128xf32, #tpu.memory_space<vmem>>, vector<2x128xf32>
    tpu.vector_store %arg20[%c0_160, %c0_161], %360 {strides = array<i32>} : memref<2x128xf32, #tpu.memory_space<vmem>>, vector<2x128xf32>,
    return
  }
  func.func @transform_0(%arg0: i32) -> (i32, i32) {
    %c0_i32 = arith.constant 0 : i32
    %c0_i32_0 = arith.constant 0 : i32
    %c0_i32_1 = arith.constant 0 : i32
    return %c0_i32, %c0_i32_0 : i32, i32
  }
  func.func @transform_1(%arg0: i32) -> (i32, i32) {
    %c0_i32 = arith.constant 0 : i32
    %c0_i32_0 = arith.constant 0 : i32
    %c0_i32_1 = arith.constant 0 : i32
    return %c0_i32, %c0_i32_0 : i32, i32
  }
  func.func @transform_2(%arg0: i32) -> (i32, i32) {
    %c0_i32 = arith.constant 0 : i32
    %c0_i32_0 = arith.constant 0 : i32
    %c0_i32_1 = arith.constant 0 : i32
    return %c0_i32, %c0_i32_0 : i32, i32
  }
  func.func @transform_3(%arg0: i32) -> (i32, i32) {
    %c0_i32 = arith.constant 0 : i32
    %c0_i32_0 = arith.constant 0 : i32
    %c0_i32_1 = arith.constant 0 : i32
    return %c0_i32, %c0_i32_0 : i32, i32
  }
  func.func @transform_4(%arg0: i32) -> (i32, i32) {
    %c0_i32 = arith.constant 0 : i32
    %c0_i32_0 = arith.constant 0 : i32
    %c0_i32_1 = arith.constant 0 : i32
    return %c0_i32, %c0_i32_0 : i32, i32
  }
  func.func @transform_5(%arg0: i32) -> (i32, i32, i32) {
    %c0_i32 = arith.constant 0 : i32
    %c0_i32_0 = arith.constant 0 : i32
    %c0_i32_1 = arith.constant 0 : i32
    %c0_i32_2 = arith.constant 0 : i32
    return %c0_i32, %c0_i32_0, %c0_i32_1 : i32, i32, i32
  }
  func.func @transform_6(%arg0: i32) -> (i32, i32, i32) {
    %c0_i32 = arith.constant 0 : i32
    %c0_i32_0 = arith.constant 0 : i32
    %c0_i32_1 = arith.constant 0 : i32
    %c0_i32_2 = arith.constant 0 : i32
    return %c0_i32, %c0_i32_0, %c0_i32_1 : i32, i32, i32
  }
  func.func @transform_7(%arg0: i32) -> (i32, i32, i32) {
    %c0_i32 = arith.constant 0 : i32
    %c0_i32_0 = arith.constant 0 : i32
    %c0_i32_1 = arith.constant 0 : i32
    %c0_i32_2 = arith.constant 0 : i32
    return %c0_i32, %c0_i32_0, %c0_i32_1 : i32, i32, i32
  }
  func.func @transform_8(%arg0: i32) -> (i32, i32, i32) {
    %c0_i32 = arith.constant 0 : i32
    %c0_i32_0 = arith.constant 0 : i32
    %c0_i32_1 = arith.constant 0 : i32
    %c0_i32_2 = arith.constant 0 : i32
    return %c0_i32, %c0_i32_0, %c0_i32_1 : i32, i32, i32
  }
  func.func @transform_9(%arg0: i32) -> (i32, i32, i32) {
    %c0_i32 = arith.constant 0 : i32
    %c0_i32_0 = arith.constant 0 : i32
    %c0_i32_1 = arith.constant 0 : i32
    %c0_i32_2 = arith.constant 0 : i32
    return %c0_i32, %c0_i32_0, %c0_i32_1 : i32, i32, i32
  }
  func.func @transform_10(%arg0: i32) -> (i32, i32, i32) {
    %c0_i32 = arith.constant 0 : i32
    %c0_i32_0 = arith.constant 0 : i32
    %c0_i32_1 = arith.constant 0 : i32
    %c0_i32_2 = arith.constant 0 : i32
    return %c0_i32, %c0_i32_0, %c0_i32_1 : i32, i32, i32
  }
  func.func @transform_11(%arg0: i32) -> (i32, i32, i32) {
    %c0_i32 = arith.constant 0 : i32
    %c0_i32_0 = arith.constant 0 : i32
    %c0_i32_1 = arith.constant 0 : i32
    %c0_i32_2 = arith.constant 0 : i32
    return %c0_i32, %c0_i32_0, %c0_i32_1 : i32, i32, i32
  }
  func.func @transform_12(%arg0: i32) -> (i32, i32, i32) {
    %c0_i32 = arith.constant 0 : i32
    %c0_i32_0 = arith.constant 0 : i32
    %c0_i32_1 = arith.constant 0 : i32
    %c0_i32_2 = arith.constant 0 : i32
    return %c0_i32, %c0_i32_0, %c0_i32_1 : i32, i32, i32
  }
  func.func @transform_13(%arg0: i32) -> (i32, i32, i32) {
    %c0_i32 = arith.constant 0 : i32
    %c0_i32_0 = arith.constant 0 : i32
    %c0_i32_1 = arith.constant 0 : i32
    %c0_i32_2 = arith.constant 0 : i32
    return %c0_i32, %c0_i32_0, %c0_i32_1 : i32, i32, i32
  }
  func.func @transform_14(%arg0: i32) -> (i32, i32, i32) {
    %c0_i32 = arith.constant 0 : i32
    %c0_i32_0 = arith.constant 0 : i32
    %c0_i32_1 = arith.constant 0 : i32
    %c0_i32_2 = arith.constant 0 : i32
    return %c0_i32, %c0_i32_0, %c0_i32_1 : i32, i32, i32
  }
  func.func @transform_15(%arg0: i32) -> (i32, i32, i32) {
    %c0_i32 = arith.constant 0 : i32
    %c0_i32_0 = arith.constant 0 : i32
    %c0_i32_1 = arith.constant 0 : i32
    %c0_i32_2 = arith.constant 0 : i32
    return %c0_i32, %c0_i32_0, %c0_i32_1 : i32, i32, i32
  }
  func.func @transform_16(%arg0: i32) -> (i32, i32, i32) {
    %c0_i32 = arith.constant 0 : i32
    %c0_i32_0 = arith.constant 0 : i32
    %c0_i32_1 = arith.constant 0 : i32
    %c0_i32_2 = arith.constant 0 : i32
    return %c0_i32, %c0_i32_0, %c0_i32_1 : i32, i32, i32
  }
  func.func @transform_17(%arg0: i32) -> (i32, i32) {
    %c0_i32 = arith.constant 0 : i32
    %c0_i32_0 = arith.constant 0 : i32
    %c0_i32_1 = arith.constant 0 : i32
    return %c0_i32, %c0_i32_0 : i32, i32
  }
  func.func @transform_18(%arg0: i32) -> (i32, i32) {
    %c0_i32 = arith.constant 0 : i32
    %c0_i32_0 = arith.constant 0 : i32
    %c0_i32_1 = arith.constant 0 : i32
    return %c0_i32, %c0_i32_0 : i32, i32
  }
  func.func @transform_19(%arg0: i32) -> (i32, i32) {
    %c0_i32 = arith.constant 0 : i32
    %c0_i32_0 = arith.constant 0 : i32
    %c0_i32_1 = arith.constant 0 : i32
    return %c0_i32, %c0_i32_0 : i32, i32
  }
}

</mosaic_0001>

<llo_original>
// kernel: transformer_forward.1
$region0: #{transformer_forward.1}
  #allocation0 [shape = 'u32[]', space=smem, size = 0x4, offset = 0x4, fixed_abs, tag = 'smem constant byte address 0x4 - core index']
  #allocation1 [shape = 'u32[144,128]{1,0:T(1,128)}', space=vmem, size = 0x12000, scoped, tag = 'internal scratch']
  %s0 = inlined_call_operand.vmem [shape: s32[16,1], index: 0, kind: input, shape index: {}]
  %s1 = inlined_call_operand.vmem [shape: f32[128,128], index: 1, kind: input, shape index: {}]
  %s2 = inlined_call_operand.vmem [shape: f32[8,128], index: 2, kind: input, shape index: {}]
  %s3 = inlined_call_operand.vmem [shape: f32[1,128], index: 3, kind: input, shape index: {}]
  %s4 = inlined_call_operand.vmem [shape: f32[1,128], index: 4, kind: input, shape index: {}]
  %s5 = inlined_call_operand.vmem [shape: f32[2,1,128], index: 5, kind: input, shape index: {}]
  %s6 = inlined_call_operand.vmem [shape: f32[2,1,128], index: 6, kind: input, shape index: {}]
  %s7 = inlined_call_operand.vmem [shape: f32[2,128,384], index: 7, kind: input, shape index: {}]
  %s8 = inlined_call_operand.vmem [shape: f32[2,1,384], index: 8, kind: input, shape index: {}]
  %s9 = inlined_call_operand.vmem [shape: f32[2,128,128], index: 9, kind: input, shape index: {}]
  %s10 = inlined_call_operand.vmem [shape: f32[2,1,128], index: 10, kind: input, shape index: {}]
  %s11 = inlined_call_operand.vmem [shape: f32[2,1,128], index: 11, kind: input, shape index: {}]
  %s12 = inlined_call_operand.vmem [shape: f32[2,1,128], index: 12, kind: input, shape index: {}]
  %s13 = inlined_call_operand.vmem [shape: f32[2,128,256], index: 13, kind: input, shape index: {}]
  %s14 = inlined_call_operand.vmem [shape: f32[2,1,256], index: 14, kind: input, shape index: {}]
  %s15 = inlined_call_operand.vmem [shape: f32[2,256,128], index: 15, kind: input, shape index: {}]
  %s16 = inlined_call_operand.vmem [shape: f32[2,1,128], index: 16, kind: input, shape index: {}]
  %s17 = inlined_call_operand.vmem [shape: f32[128,128], index: 17, kind: input, shape index: {}]
  %s18 = inlined_call_operand.vmem [shape: f32[1,128], index: 18, kind: input, shape index: {}]
  %s19 = inlined_call_operand.hbm [shape: f32[2,128], index: 19, kind: output, shape index: {}]
  %s20 = sld [smem:[#allocation0]]
  $region86: #{transformer_forward.1} parent=0
    _
  %s22 = ssub.s32 1, %s20
  %s23 = scalar_select 0, %s22, %s20
  $region1: #{transformer_forward.1} parent=0
    #allocation2 [shape = 'u8[1024]{0}', space=vmem, size = 0x400, scoped, tag = 'output window, operand 0, single buffered']
    #allocation3 [shape = 's32[1]{0}', space=sflag, size = 0x4, scoped, tag = 'scoped memory for transformer_forward.1']
    %24 = vsyncpa [#allocation3], 0
    // Predicated region
    $region2: #{transformer_forward.1} parent=1 // pred_check
      _
    $region3: #{transformer_forward.1} parent=1 // pred_check_branch
      %26 = sbr.rel (0) target = $region5
    $region4: #{transformer_forward.1} parent=1 // pred_region
      _
    $region5: #{transformer_forward.1} parent=1 // pred_fallthru
      _
    // Predicated region
    $region6: #{transformer_forward.1} parent=1 // pred_check
      _
    $region7: #{transformer_forward.1} parent=1 // pred_check_branch
      %28 = sbr.rel (0) target = $region9
    $region8: #{transformer_forward.1} parent=1 // pred_region
      _
    $region9: #{transformer_forward.1} parent=1 // pred_fallthru
      _
    // Predicated region
    $region10: #{transformer_forward.1} parent=1 // pred_check
      _
    $region11: #{transformer_forward.1} parent=1 // pred_check_branch
      %30 = sbr.rel (0) target = $region13
    $region12: #{transformer_forward.1} parent=1 // pred_region
      _
    $region13: #{transformer_forward.1} parent=1 // pred_fallthru
      _
    // Predicated region
    $region14: #{transformer_forward.1} parent=1 // pred_check
      _
    $region15: #{transformer_forward.1} parent=1 // pred_check_branch
      %32 = sbr.rel (0) target = $region17
    $region16: #{transformer_forward.1} parent=1 // pred_region
      _
    $region17: #{transformer_forward.1} parent=1 // pred_fallthru
      _
    // Predicated region
    $region18: #{transformer_forward.1} parent=1 // pred_check
      _
    $region19: #{transformer_forward.1} parent=1 // pred_check_branch
      %34 = sbr.rel (0) target = $region21
    $region20: #{transformer_forward.1} parent=1 // pred_region
      _
    $region21: #{transformer_forward.1} parent=1 // pred_fallthru
      _
    // Predicated region
    $region22: #{transformer_forward.1} parent=1 // pred_check
      _
    $region23: #{transformer_forward.1} parent=1 // pred_check_branch
      %36 = sbr.rel (0) target = $region25
    $region24: #{transformer_forward.1} parent=1 // pred_region
      _
    $region25: #{transformer_forward.1} parent=1 // pred_fallthru
      _
    // Predicated region
    $region26: #{transformer_forward.1} parent=1 // pred_check
      _
    $region27: #{transformer_forward.1} parent=1 // pred_check_branch
      %38 = sbr.rel (0) target = $region29
    $region28: #{transformer_forward.1} parent=1 // pred_region
      _
    $region29: #{transformer_forward.1} parent=1 // pred_fallthru
      _
    // Predicated region
    $region30: #{transformer_forward.1} parent=1 // pred_check
      _
    $region31: #{transformer_forward.1} parent=1 // pred_check_branch
      %40 = sbr.rel (0) target = $region33
    $region32: #{transformer_forward.1} parent=1 // pred_region
      _
    $region33: #{transformer_forward.1} parent=1 // pred_fallthru
      _
    // Predicated region
    $region34: #{transformer_forward.1} parent=1 // pred_check
      _
    $region35: #{transformer_forward.1} parent=1 // pred_check_branch
      %42 = sbr.rel (0) target = $region37
    $region36: #{transformer_forward.1} parent=1 // pred_region
      _
    $region37: #{transformer_forward.1} parent=1 // pred_fallthru
      _
    // Predicated region
    $region38: #{transformer_forward.1} parent=1 // pred_check
      _
    $region39: #{transformer_forward.1} parent=1 // pred_check_branch
      %44 = sbr.rel (0) target = $region41
    $region40: #{transformer_forward.1} parent=1 // pred_region
      _
    $region41: #{transformer_forward.1} parent=1 // pred_fallthru
      _
    // Predicated region
    $region42: #{transformer_forward.1} parent=1 // pred_check
      _
    $region43: #{transformer_forward.1} parent=1 // pred_check_branch
      %46 = sbr.rel (0) target = $region45
    $region44: #{transformer_forward.1} parent=1 // pred_region
      _
    $region45: #{transformer_forward.1} parent=1 // pred_fallthru
      _
    // Predicated region
    $region46: #{transformer_forward.1} parent=1 // pred_check
      _
    $region47: #{transformer_forward.1} parent=1 // pred_check_branch
      %48 = sbr.rel (0) target = $region49
    $region48: #{transformer_forward.1} parent=1 // pred_region
      _
    $region49: #{transformer_forward.1} parent=1 // pred_fallthru
      _
    // Predicated region
    $region50: #{transformer_forward.1} parent=1 // pred_check
      _
    $region51: #{transformer_forward.1} parent=1 // pred_check_branch
      %50 = sbr.rel (0) target = $region53
    $region52: #{transformer_forward.1} parent=1 // pred_region
      _
    $region53: #{transformer_forward.1} parent=1 // pred_fallthru
      _
    // Predicated region
    $region54: #{transformer_forward.1} parent=1 // pred_check
      _
    $region55: #{transformer_forward.1} parent=1 // pred_check_branch
      %52 = sbr.rel (0) target = $region57
    $region56: #{transformer_forward.1} parent=1 // pred_region
      _
    $region57: #{transformer_forward.1} parent=1 // pred_fallthru
      _
    // Predicated region
    $region58: #{transformer_forward.1} parent=1 // pred_check
      _
    $region59: #{transformer_forward.1} parent=1 // pred_check_branch
      %54 = sbr.rel (0) target = $region61
    $region60: #{transformer_forward.1} parent=1 // pred_region
      _
    $region61: #{transformer_forward.1} parent=1 // pred_fallthru
      _
    // Predicated region
    $region62: #{transformer_forward.1} parent=1 // pred_check
      _
    $region63: #{transformer_forward.1} parent=1 // pred_check_branch
      %56 = sbr.rel (0) target = $region65
    $region64: #{transformer_forward.1} parent=1 // pred_region
      _
    $region65: #{transformer_forward.1} parent=1 // pred_fallthru
      _
    // Predicated region
    $region66: #{transformer_forward.1} parent=1 // pred_check
      _
    $region67: #{transformer_forward.1} parent=1 // pred_check_branch
      %58 = sbr.rel (0) target = $region69
    $region68: #{transformer_forward.1} parent=1 // pred_region
      _
    $region69: #{transformer_forward.1} parent=1 // pred_fallthru
      _
    // Predicated region
    $region70: #{transformer_forward.1} parent=1 // pred_check
      _
    $region71: #{transformer_forward.1} parent=1 // pred_check_branch
      %60 = sbr.rel (0) target = $region73
    $region72: #{transformer_forward.1} parent=1 // pred_region
      _
    $region73: #{transformer_forward.1} parent=1 // pred_fallthru
      _
    // Predicated region
    $region74: #{transformer_forward.1} parent=1 // pred_check
      _
    $region75: #{transformer_forward.1} parent=1 // pred_check_branch
      %62 = sbr.rel (0) target = $region77
    $region76: #{transformer_forward.1} parent=1 // pred_region
      _
    $region77: #{transformer_forward.1} parent=1 // pred_fallthru
      _
    %v63 = vld [vmem:[%s0] sm:$0xff]
    %v64 = vld [vmem:[%s0 + $0x8] sm:$0xff]
    %v65 = vlaneseq
    %v66 = vand.u32 %v65, 127
    %67 = vset.pattern.permute.xlu0 0
    %68 = vperm.xlu0 %67, %v63
    %v69 = vpop.permute.xlu0 %68
    %70 = vset.pattern.permute.xlu0 0
    %71 = vperm.xlu0 %70, %v64
    %v72 = vpop.permute.xlu0 %71
    %vm73 = vcmp.eq.s32.totalorder %v69, %v66
    %vm74 = vcmp.eq.s32.totalorder %v72, %v66
    %v75 = vsel %vm73, 1, 0
    %v76 = vsel %vm74, 1, 0
    %v77 = vcvt.s32.f32 %v75
    %v78 = vcvt.s32.f32 %v76
    %v79 = vld [vmem:[%s1] sm:$0xff]
    %v80 = vld [vmem:[%s1 + $0x8] sm:$0xff]
    %v81 = vld [vmem:[%s1 + $0x10] sm:$0xff]
    %v82 = vld [vmem:[%s1 + $0x18] sm:$0xff]
    %v83 = vld [vmem:[%s1 + $0x20] sm:$0xff]
    %v84 = vld [vmem:[%s1 + $0x28] sm:$0xff]
    %v85 = vld [vmem:[%s1 + $0x30] sm:$0xff]
    %v86 = vld [vmem:[%s1 + $0x38] sm:$0xff]
    %v87 = vld [vmem:[%s1 + $0x40] sm:$0xff]
    %v88 = vld [vmem:[%s1 + $0x48] sm:$0xff]
    %v89 = vld [vmem:[%s1 + $0x50] sm:$0xff]
    %v90 = vld [vmem:[%s1 + $0x58] sm:$0xff]
    %v91 = vld [vmem:[%s1 + $0x60] sm:$0xff]
    %v92 = vld [vmem:[%s1 + $0x68] sm:$0xff]
    %v93 = vld [vmem:[%s1 + $0x70] sm:$0xff]
    %v94 = vld [vmem:[%s1 + $0x78] sm:$0xff]
    %v95 = vld [vmem:[%s2] sm:$0xff]
    %96 = vmatprep.subr.mxu0 0.0
    %97 = vmatpush1.msra.mxu0 %v79
    %98 = vmatprep.subr.mxu0 0.0
    %99 = vmatpush1.msra.mxu0 %v80
    %100 = vmatprep.subr.mxu0 0.0
    %101 = vmatpush1.msra.mxu0 %v81
    %102 = vmatprep.subr.mxu0 0.0
    %103 = vmatpush1.msra.mxu0 %v82
    %104 = vmatprep.subr.mxu0 0.0
    %105 = vmatpush1.msra.mxu0 %v83
    %106 = vmatprep.subr.mxu0 0.0
    %107 = vmatpush1.msra.mxu0 %v84
    %108 = vmatprep.subr.mxu0 0.0
    %109 = vmatpush1.msra.mxu0 %v85
    %110 = vmatprep.subr.mxu0 0.0
    %111 = vmatpush1.msra.mxu0 %v86
    %112 = vmatprep.subr.mxu0 0.0
    %113 = vmatpush1.msra.mxu0 %v87
    %114 = vmatprep.subr.mxu0 0.0
    %115 = vmatpush1.msra.mxu0 %v88
    %116 = vmatprep.subr.mxu0 0.0
    %117 = vmatpush1.msra.mxu0 %v89
    %118 = vmatprep.subr.mxu0 0.0
    %119 = vmatpush1.msra.mxu0 %v90
    %120 = vmatprep.subr.mxu0 0.0
    %121 = vmatpush1.msra.mxu0 %v91
    %122 = vmatprep.subr.mxu0 0.0
    %123 = vmatpush1.msra.mxu0 %v92
    %124 = vmatprep.subr.mxu0 0.0
    %125 = vmatpush1.msra.mxu0 %v93
    %126 = vmatprep.subr.mxu0 0.0
    %127 = vmatpush1.msra.mxu0 %v94
    %128 = vmatprep.subr.mxu0 0.0
    %129 = vmatpush1.msra.mxu0 0.0
    %130 = vmatprep.subr.mxu0 0.0
    %131 = vmatpush1.msra.mxu0 0.0
    %132 = vmatprep.subr.mxu0 0.0
    %133 = vmatpush1.msra.mxu0 0.0
    %134 = vmatprep.subr.mxu0 0.0
    %135 = vmatpush1.msra.mxu0 0.0
    %136 = vmatprep.subr.mxu0 0.0
    %137 = vmatpush1.msra.mxu0 0.0
    %138 = vmatprep.subr.mxu0 0.0
    %139 = vmatpush1.msra.mxu0 0.0
    %140 = vmatprep.subr.mxu0 0.0
    %141 = vmatpush1.msra.mxu0 0.0
    %142 = vmatprep.subr.mxu0 0.0
    %143 = vmatpush1.msra.mxu0 0.0
    %144 = vmatprep.subr.mxu0 0.0
    %145 = vmatpush1.msra.mxu0 0.0
    %146 = vmatprep.subr.mxu0 0.0
    %147 = vmatpush1.msra.mxu0 0.0
    %148 = vmatprep.subr.mxu0 0.0
    %149 = vmatpush1.msra.mxu0 0.0
    %150 = vmatprep.subr.mxu0 0.0
    %151 = vmatpush1.msra.mxu0 0.0
    %152 = vmatprep.subr.mxu0 0.0
    %153 = vmatpush1.msra.mxu0 0.0
    %154 = vmatprep.subr.mxu0 0.0
    %155 = vmatpush1.msra.mxu0 0.0
    %156 = vmatprep.subr.mxu0 0.0
    %157 = vmatpush1.msra.mxu0 0.0
    %158 = vmatprep.subr.mxu0 0.0
    %159 = vmatpush1.msra.mxu0 0.0
    %160 = vmatprep.mubr.f32.mxu0 0.0
    %161 = vmatmul.mubr.f32.gmra.mrb[0].mxu0 %v77
    %v162 = vpop.f32.mrb[0].mxu0
    %v163 = vadd.f32 %v95, %v162
    %v164 = vpop.f32.mrb[0].mxu0
    %165 = vmatprep.mubr.f32.mxu0 0.0
    %166 = vmatmul.mubr.f32.gmra.mrb[0].mxu0 %v78
    %v167 = vpop.f32.mrb[0].mxu0
    %v168 = vadd.f32 %v95, %v167
    %v169 = vpop.f32.mrb[0].mxu0
    %170 = vdwg.mxu0
    %v171 = vld [vmem:[%s3] sm:$0x1]
    %v172 = vld [vmem:[%s4] sm:$0x1]
    %173 = vadd.xlane.f32.xlu0 %v163
    %v174 = vpop.xlane.xlu0 %173
    %175 = vadd.xlane.f32.xlu0 %v168
    %v176 = vpop.xlane.xlu0 %175
    %v177 = vrcp.pop 128.0
    %v178 = vmul.f32 %v174, %v177
    %v179 = vmul.f32 %v176, %v177
    %v180 = vsub.f32 %v163, %v178
    %v181 = vsub.f32 %v168, %v179
    %v182 = vmul.f32 %v180, %v180
    %v183 = vmul.f32 %v181, %v181
    %184 = vadd.xlane.f32.xlu0 %v182
    %v185 = vpop.xlane.xlu0 %184
    %186 = vadd.xlane.f32.xlu0 %v183
    %v187 = vpop.xlane.xlu0 %186
    %v188 = vmul.f32 %v185, %v177
    %v189 = vmul.f32 %v187, %v177
    %v190 = vadd.f32 %v188, 1e-12
    %v191 = vadd.f32 %v189, 1e-12
    %v192 = vrsqrt.pop %v190
    %v193 = vrsqrt.pop %v191
    %v194 = vmul.f32 %v180, %v192
    %v195 = vmul.f32 %v181, %v193
    %v197 = vlaneseq
    %v198 = vshrl.u32 %v197, 7
    %v199 = vsub.s32 0, %v198
    %v200 = vrot.slane %v171, %v199
    %v202 = vmul.f32 %v194, %v200
    %v203 = vmul.f32 %v195, %v200
    %v205 = vlaneseq
    %v206 = vshrl.u32 %v205, 7
    %v207 = vsub.s32 0, %v206
    %v208 = vrot.slane %v172, %v207
    %v210 = vadd.f32 %v202, %v208
    %v211 = vadd.f32 %v203, %v208
    %v212 = vld [vmem:[%s5] sm:$0x1]
    %v213 = vld [vmem:[%s6] sm:$0x1]
    %214 = vadd.xlane.f32.xlu0 %v210
    %v215 = vpop.xlane.xlu0 %214
    %216 = vadd.xlane.f32.xlu0 %v211
    %v217 = vpop.xlane.xlu0 %216
    %v218 = vmul.f32 %v215, %v177
    %v219 = vmul.f32 %v217, %v177
    %v220 = vsub.f32 %v210, %v218
    %v221 = vsub.f32 %v211, %v219
    %v222 = vmul.f32 %v220, %v220
    %v223 = vmul.f32 %v221, %v221
    %224 = vadd.xlane.f32.xlu0 %v222
    %v225 = vpop.xlane.xlu0 %224
    %226 = vadd.xlane.f32.xlu0 %v223
    %v227 = vpop.xlane.xlu0 %226
    %v228 = vmul.f32 %v225, %v177
    %v229 = vmul.f32 %v227, %v177
    %v230 = vadd.f32 %v228, 1e-05
    %v231 = vadd.f32 %v229, 1e-05
    %v232 = vrsqrt.pop %v230
    %v233 = vrsqrt.pop %v231
    %v234 = vmul.f32 %v220, %v232
    %v235 = vmul.f32 %v221, %v233
    %v237 = vlaneseq
    %v238 = vshrl.u32 %v237, 7
    %v239 = vsub.s32 0, %v238
    %v240 = vrot.slane %v212, %v239
    %v242 = vmul.f32 %v234, %v240
    %v243 = vmul.f32 %v235, %v240
    %v245 = vlaneseq
    %v246 = vshrl.u32 %v245, 7
    %v247 = vsub.s32 0, %v246
    %v248 = vrot.slane %v213, %v247
    %v250 = vadd.f32 %v242, %v248
    %v251 = vadd.f32 %v243, %v248
    %v252 = vld [vmem:[%s7] sm:$0xff]
    %v253 = vld [vmem:[%s7 + $0x8] sm:$0xff]
    %v254 = vld [vmem:[%s7 + $0x10] sm:$0xff]
    %v255 = vld [vmem:[%s7 + $0x18] sm:$0xff]
    %v256 = vld [vmem:[%s7 + $0x20] sm:$0xff]
    %v257 = vld [vmem:[%s7 + $0x28] sm:$0xff]
    %v258 = vld [vmem:[%s7 + $0x30] sm:$0xff]
    %v259 = vld [vmem:[%s7 + $0x38] sm:$0xff]
    %v260 = vld [vmem:[%s7 + $0x40] sm:$0xff]
    %v261 = vld [vmem:[%s7 + $0x48] sm:$0xff]
    %v262 = vld [vmem:[%s7 + $0x50] sm:$0xff]
    %v263 = vld [vmem:[%s7 + $0x58] sm:$0xff]
    %v264 = vld [vmem:[%s7 + $0x60] sm:$0xff]
    %v265 = vld [vmem:[%s7 + $0x68] sm:$0xff]
    %v266 = vld [vmem:[%s7 + $0x70] sm:$0xff]
    %v267 = vld [vmem:[%s7 + $0x78] sm:$0xff]
    %v268 = vld [vmem:[%s7 + $0x80] sm:$0xff]
    %v269 = vld [vmem:[%s7 + $0x88] sm:$0xff]
    %v270 = vld [vmem:[%s7 + $0x90] sm:$0xff]
    %v271 = vld [vmem:[%s7 + $0x98] sm:$0xff]
    %v272 = vld [vmem:[%s7 + $0xa0] sm:$0xff]
    %v273 = vld [vmem:[%s7 + $0xa8] sm:$0xff]
    %v274 = vld [vmem:[%s7 + $0xb0] sm:$0xff]
    %v275 = vld [vmem:[%s7 + $0xb8] sm:$0xff]
    %v276 = vld [vmem:[%s7 + $0xc0] sm:$0xff]
    %v277 = vld [vmem:[%s7 + $0xc8] sm:$0xff]
    %v278 = vld [vmem:[%s7 + $0xd0] sm:$0xff]
    %v279 = vld [vmem:[%s7 + $0xd8] sm:$0xff]
    %v280 = vld [vmem:[%s7 + $0xe0] sm:$0xff]
    %v281 = vld [vmem:[%s7 + $0xe8] sm:$0xff]
    %v282 = vld [vmem:[%s7 + $0xf0] sm:$0xff]
    %v283 = vld [vmem:[%s7 + $0xf8] sm:$0xff]
    %v284 = vld [vmem:[%s7 + $0x100] sm:$0xff]
    %v285 = vld [vmem:[%s7 + $0x108] sm:$0xff]
    %v286 = vld [vmem:[%s7 + $0x110] sm:$0xff]
    %v287 = vld [vmem:[%s7 + $0x118] sm:$0xff]
    %v288 = vld [vmem:[%s7 + $0x120] sm:$0xff]
    %v289 = vld [vmem:[%s7 + $0x128] sm:$0xff]
    %v290 = vld [vmem:[%s7 + $0x130] sm:$0xff]
    %v291 = vld [vmem:[%s7 + $0x138] sm:$0xff]
    %v292 = vld [vmem:[%s7 + $0x140] sm:$0xff]
    %v293 = vld [vmem:[%s7 + $0x148] sm:$0xff]
    %v294 = vld [vmem:[%s7 + $0x150] sm:$0xff]
    %v295 = vld [vmem:[%s7 + $0x158] sm:$0xff]
    %v296 = vld [vmem:[%s7 + $0x160] sm:$0xff]
    %v297 = vld [vmem:[%s7 + $0x168] sm:$0xff]
    %v298 = vld [vmem:[%s7 + $0x170] sm:$0xff]
    %v299 = vld [vmem:[%s7 + $0x178] sm:$0xff]
    %v300 = vld [vmem:[%s8] sm:$0x7]
    %v302 = vlaneseq
    %v303 = vshrl.u32 %v302, 7
    %v304 = vsub.s32 0, %v303
    %v305 = vrot.slane %v300, %v304
    %v306 = vlaneseq
    %v307 = vshrl.u32 %v306, 7
    %v308 = vsub.s32 1, %v307
    %v309 = vrot.slane %v300, %v308
    %v310 = vlaneseq
    %v311 = vshrl.u32 %v310, 7
    %v312 = vsub.s32 2, %v311
    %v313 = vrot.slane %v300, %v312
    %317 = vmatprep.subr.mxu0 %v253
    %318 = vmatpush1.msra.mxu0 %v252
    %319 = vmatprep.subr.mxu0 %v256
    %320 = vmatpush1.msra.mxu0 %v255
    %321 = vmatprep.subr.mxu0 %v259
    %322 = vmatpush1.msra.mxu0 %v258
    %323 = vmatprep.subr.mxu0 %v262
    %324 = vmatpush1.msra.mxu0 %v261
    %325 = vmatprep.subr.mxu0 %v265
    %326 = vmatpush1.msra.mxu0 %v264
    %327 = vmatprep.subr.mxu0 %v268
    %328 = vmatpush1.msra.mxu0 %v267
    %329 = vmatprep.subr.mxu0 %v271
    %330 = vmatpush1.msra.mxu0 %v270
    %331 = vmatprep.subr.mxu0 %v274
    %332 = vmatpush1.msra.mxu0 %v273
    %333 = vmatprep.subr.mxu0 %v277
    %334 = vmatpush1.msra.mxu0 %v276
    %335 = vmatprep.subr.mxu0 %v280
    %336 = vmatpush1.msra.mxu0 %v279
    %337 = vmatprep.subr.mxu0 %v283
    %338 = vmatpush1.msra.mxu0 %v282
    %339 = vmatprep.subr.mxu0 %v286
    %340 = vmatpush1.msra.mxu0 %v285
    %341 = vmatprep.subr.mxu0 %v289
    %342 = vmatpush1.msra.mxu0 %v288
    %343 = vmatprep.subr.mxu0 %v292
    %344 = vmatpush1.msra.mxu0 %v291
    %345 = vmatprep.subr.mxu0 %v295
    %346 = vmatpush1.msra.mxu0 %v294
    %347 = vmatprep.subr.mxu0 %v298
    %348 = vmatpush1.msra.mxu0 %v297
    %349 = vmatprep.subr.mxu0 0.0
    %350 = vmatpush1.msra.mxu0 0.0
    %351 = vmatprep.subr.mxu0 0.0
    %352 = vmatpush1.msra.mxu0 0.0
    %353 = vmatprep.subr.mxu0 0.0
    %354 = vmatpush1.msra.mxu0 0.0
    %355 = vmatprep.subr.mxu0 0.0
    %356 = vmatpush1.msra.mxu0 0.0
    %357 = vmatprep.subr.mxu0 0.0
    %358 = vmatpush1.msra.mxu0 0.0
    %359 = vmatprep.subr.mxu0 0.0
    %360 = vmatpush1.msra.mxu0 0.0
    %361 = vmatprep.subr.mxu0 0.0
    %362 = vmatpush1.msra.mxu0 0.0
    %363 = vmatprep.subr.mxu0 0.0
    %364 = vmatpush1.msra.mxu0 0.0
    %365 = vmatprep.subr.mxu0 0.0
    %366 = vmatpush1.msra.mxu0 0.0
    %367 = vmatprep.subr.mxu0 0.0
    %368 = vmatpush1.msra.mxu0 0.0
    %369 = vmatprep.subr.mxu0 0.0
    %370 = vmatpush1.msra.mxu0 0.0
    %371 = vmatprep.subr.mxu0 0.0
    %372 = vmatpush1.msra.mxu0 0.0
    %373 = vmatprep.subr.mxu0 0.0
    %374 = vmatpush1.msra.mxu0 0.0
    %375 = vmatprep.subr.mxu0 0.0
    %376 = vmatpush1.msra.mxu0 0.0
    %377 = vmatprep.subr.mxu0 0.0
    %378 = vmatpush1.msra.mxu0 0.0
    %379 = vmatprep.subr.mxu0 0.0
    %380 = vmatpush1.msra.mxu0 0.0
    %381 = vmatprep.mubr.f32.mxu0 0.0
    %382 = vmatmul.mubr.f32.gmra.mrb[0].mxu0 %v250
    %v383 = vpop.f32.mrb[0].mxu0
    %v384 = vadd.f32 %v305, %v383
    %v385 = vpop.f32.mrb[0].mxu0
    %v386 = vadd.f32 %v309, %v385
    %387 = vmatprep.mubr.f32.mxu0 0.0
    %388 = vmatmul.mubr.f32.gmra.mrb[0].mxu0 %v251
    %v389 = vpop.f32.mrb[0].mxu0
    %v390 = vadd.f32 %v305, %v389
    %v391 = vpop.f32.mrb[0].mxu0
    %v392 = vadd.f32 %v309, %v391
    %393 = vdwg.mxu0
    %394 = vmatprep.subr.mxu0 0.0
    %395 = vmatpush1.msra.mxu0 %v254
    %396 = vmatprep.subr.mxu0 0.0
    %397 = vmatpush1.msra.mxu0 %v257
    %398 = vmatprep.subr.mxu0 0.0
    %399 = vmatpush1.msra.mxu0 %v260
    %400 = vmatprep.subr.mxu0 0.0
    %401 = vmatpush1.msra.mxu0 %v263
    %402 = vmatprep.subr.mxu0 0.0
    %403 = vmatpush1.msra.mxu0 %v266
    %404 = vmatprep.subr.mxu0 0.0
    %405 = vmatpush1.msra.mxu0 %v269
    %406 = vmatprep.subr.mxu0 0.0
    %407 = vmatpush1.msra.mxu0 %v272
    %408 = vmatprep.subr.mxu0 0.0
    %409 = vmatpush1.msra.mxu0 %v275
    %410 = vmatprep.subr.mxu0 0.0
    %411 = vmatpush1.msra.mxu0 %v278
    %412 = vmatprep.subr.mxu0 0.0
    %413 = vmatpush1.msra.mxu0 %v281
    %414 = vmatprep.subr.mxu0 0.0
    %415 = vmatpush1.msra.mxu0 %v284
    %416 = vmatprep.subr.mxu0 0.0
    %417 = vmatpush1.msra.mxu0 %v287
    %418 = vmatprep.subr.mxu0 0.0
    %419 = vmatpush1.msra.mxu0 %v290
    %420 = vmatprep.subr.mxu0 0.0
    %421 = vmatpush1.msra.mxu0 %v293
    %422 = vmatprep.subr.mxu0 0.0
    %423 = vmatpush1.msra.mxu0 %v296
    %424 = vmatprep.subr.mxu0 0.0
    %425 = vmatpush1.msra.mxu0 %v299
    %426 = vmatprep.subr.mxu0 0.0
    %427 = vmatpush1.msra.mxu0 0.0
    %428 = vmatprep.subr.mxu0 0.0
    %429 = vmatpush1.msra.mxu0 0.0
    %430 = vmatprep.subr.mxu0 0.0
    %431 = vmatpush1.msra.mxu0 0.0
    %432 = vmatprep.subr.mxu0 0.0
    %433 = vmatpush1.msra.mxu0 0.0
    %434 = vmatprep.subr.mxu0 0.0
    %435 = vmatpush1.msra.mxu0 0.0
    %436 = vmatprep.subr.mxu0 0.0
    %437 = vmatpush1.msra.mxu0 0.0
    %438 = vmatprep.subr.mxu0 0.0
    %439 = vmatpush1.msra.mxu0 0.0
    %440 = vmatprep.subr.mxu0 0.0
    %441 = vmatpush1.msra.mxu0 0.0
    %442 = vmatprep.subr.mxu0 0.0
    %443 = vmatpush1.msra.mxu0 0.0
    %444 = vmatprep.subr.mxu0 0.0
    %445 = vmatpush1.msra.mxu0 0.0
    %446 = vmatprep.subr.mxu0 0.0
    %447 = vmatpush1.msra.mxu0 0.0
    %448 = vmatprep.subr.mxu0 0.0
    %449 = vmatpush1.msra.mxu0 0.0
    %450 = vmatprep.subr.mxu0 0.0
    %451 = vmatpush1.msra.mxu0 0.0
    %452 = vmatprep.subr.mxu0 0.0
    %453 = vmatpush1.msra.mxu0 0.0
    %454 = vmatprep.subr.mxu0 0.0
    %455 = vmatpush1.msra.mxu0 0.0
    %456 = vmatprep.subr.mxu0 0.0
    %457 = vmatpush1.msra.mxu0 0.0
    %458 = vmatprep.mubr.f32.mxu0 0.0
    %459 = vmatmul.mubr.f32.gmra.mrb[0].mxu0 %v250
    %v460 = vpop.f32.mrb[0].mxu0
    %v461 = vadd.f32 %v313, %v460
    %v462 = vpop.f32.mrb[0].mxu0
    %463 = vmatprep.mubr.f32.mxu0 0.0
    %464 = vmatmul.mubr.f32.gmra.mrb[0].mxu0 %v251
    %v465 = vpop.f32.mrb[0].mxu0
    %v466 = vadd.f32 %v313, %v465
    %v467 = vpop.f32.mrb[0].mxu0
    %468 = vdwg.mxu0
    %v469 = vmul.f32 %v384, 0.125
    %v470 = vmul.f32 %v390, 0.125
    %vm471 = vcmask 523264
    %v473 = vsel %vm471, %v469, 0
    %v476 = vsel %vm471, %v386, 0
    %478 = vmatprep.subr.mxu0 0.0
    %479 = vmatpush1.xpose.msra.mxu0 %v476
    %480 = vmatprep.subr.mxu0 0.0
    %481 = vmatpush1.xpose.msra.mxu0 0.0
    %482 = vmatprep.subr.mxu0 0.0
    %483 = vmatpush1.xpose.msra.mxu0 0.0
    %484 = vmatprep.subr.mxu0 0.0
    %485 = vmatpush1.xpose.msra.mxu0 0.0
    %486 = vmatprep.subr.mxu0 0.0
    %487 = vmatpush1.xpose.msra.mxu0 0.0
    %488 = vmatprep.subr.mxu0 0.0
    %489 = vmatpush1.xpose.msra.mxu0 0.0
    %490 = vmatprep.subr.mxu0 0.0
    %491 = vmatpush1.xpose.msra.mxu0 0.0
    %492 = vmatprep.subr.mxu0 0.0
    %493 = vmatpush1.xpose.msra.mxu0 0.0
    %494 = vmatprep.subr.mxu0 0.0
    %495 = vmatpush1.xpose.msra.mxu0 0.0
    %496 = vmatprep.subr.mxu0 0.0
    %497 = vmatpush1.xpose.msra.mxu0 0.0
    %498 = vmatprep.subr.mxu0 0.0
    %499 = vmatpush1.xpose.msra.mxu0 0.0
    %500 = vmatprep.subr.mxu0 0.0
    %501 = vmatpush1.xpose.msra.mxu0 0.0
    %502 = vmatprep.subr.mxu0 0.0
    %503 = vmatpush1.xpose.msra.mxu0 0.0
    %504 = vmatprep.subr.mxu0 0.0
    %505 = vmatpush1.xpose.msra.mxu0 0.0
    %506 = vmatprep.subr.mxu0 0.0
    %507 = vmatpush1.xpose.msra.mxu0 0.0
    %508 = vmatprep.subr.mxu0 0.0
    %509 = vmatpush1.xpose.msra.mxu0 0.0
    %510 = vmatprep.subr.mxu0 0.0
    %511 = vmatpush1.xpose.msra.mxu0 0.0
    %512 = vmatprep.subr.mxu0 0.0
    %513 = vmatpush1.xpose.msra.mxu0 0.0
    %514 = vmatprep.subr.mxu0 0.0
    %515 = vmatpush1.xpose.msra.mxu0 0.0
    %516 = vmatprep.subr.mxu0 0.0
    %517 = vmatpush1.xpose.msra.mxu0 0.0
    %518 = vmatprep.subr.mxu0 0.0
    %519 = vmatpush1.xpose.msra.mxu0 0.0
    %520 = vmatprep.subr.mxu0 0.0
    %521 = vmatpush1.xpose.msra.mxu0 0.0
    %522 = vmatprep.subr.mxu0 0.0
    %523 = vmatpush1.xpose.msra.mxu0 0.0
    %524 = vmatprep.subr.mxu0 0.0
    %525 = vmatpush1.xpose.msra.mxu0 0.0
    %526 = vmatprep.subr.mxu0 0.0
    %527 = vmatpush1.xpose.msra.mxu0 0.0
    %528 = vmatprep.subr.mxu0 0.0
    %529 = vmatpush1.xpose.msra.mxu0 0.0
    %530 = vmatprep.subr.mxu0 0.0
    %531 = vmatpush1.xpose.msra.mxu0 0.0
    %532 = vmatprep.subr.mxu0 0.0
    %533 = vmatpush1.xpose.msra.mxu0 0.0
    %534 = vmatprep.subr.mxu0 0.0
    %535 = vmatpush1.xpose.msra.mxu0 0.0
    %536 = vmatprep.subr.mxu0 0.0
    %537 = vmatpush1.xpose.msra.mxu0 0.0
    %538 = vmatprep.subr.mxu0 0.0
    %539 = vmatpush1.xpose.msra.mxu0 0.0
    %540 = vmatprep.subr.mxu0 0.0
    %541 = vmatpush1.xpose.msra.mxu0 0.0
    %542 = vmatprep.mubr.f32.mxu0 0.0
    %543 = vmatmul.mubr.f32.gmra.mrb[0].mxu0 %v473
    %v544 = vpop.f32.mrb[0].mxu0
    %v545 = vadd.f32 0.0, %v544
    %v546 = vpop.f32.mrb[0].mxu0
    %547 = vdwg.mxu0
    %vm548 = vcmask 64512
    %v549 = vsel %vm548, %v545, -inf
    %550 = vmax.xlane.f32.xlu0 %v549
    %v551 = vpop.xlane.xlu0 %550
    %v552 = vsub.f32 %v545, %v551
    %v553 = vmul.f32 %v552, 1.442695
    %v554 = vpow.pop %v553
    %v555 = vsel %vm548, %v554, 0.0
    %556 = vadd.xlane.f32.xlu0 %v555
    %v557 = vpop.xlane.xlu0 %556
    %v558 = vrcp.pop %v557
    %v559 = vmul.f32 %v554, %v558
    %v561 = vsel %vm548, %v559, 0
    %563 = vmatprep.subr.mxu0 0.0
    %564 = vmatpush1.msra.mxu0 %v461
    %565 = vmatprep.subr.mxu0 0.0
    %566 = vmatpush1.msra.mxu0 0.0
    %567 = vmatprep.subr.mxu0 0.0
    %568 = vmatpush1.msra.mxu0 0.0
    %569 = vmatprep.subr.mxu0 0.0
    %570 = vmatpush1.msra.mxu0 0.0
    %571 = vmatprep.subr.mxu0 0.0
    %572 = vmatpush1.msra.mxu0 0.0
    %573 = vmatprep.subr.mxu0 0.0
    %574 = vmatpush1.msra.mxu0 0.0
    %575 = vmatprep.subr.mxu0 0.0
    %576 = vmatpush1.msra.mxu0 0.0
    %577 = vmatprep.subr.mxu0 0.0
    %578 = vmatpush1.msra.mxu0 0.0
    %579 = vmatprep.subr.mxu0 0.0
    %580 = vmatpush1.msra.mxu0 0.0
    %581 = vmatprep.subr.mxu0 0.0
    %582 = vmatpush1.msra.mxu0 0.0
    %583 = vmatprep.subr.mxu0 0.0
    %584 = vmatpush1.msra.mxu0 0.0
    %585 = vmatprep.subr.mxu0 0.0
    %586 = vmatpush1.msra.mxu0 0.0
    %587 = vmatprep.subr.mxu0 0.0
    %588 = vmatpush1.msra.mxu0 0.0
    %589 = vmatprep.subr.mxu0 0.0
    %590 = vmatpush1.msra.mxu0 0.0
    %591 = vmatprep.subr.mxu0 0.0
    %592 = vmatpush1.msra.mxu0 0.0
    %593 = vmatprep.subr.mxu0 0.0
    %594 = vmatpush1.msra.mxu0 0.0
    %595 = vmatprep.subr.mxu0 0.0
    %596 = vmatpush1.msra.mxu0 0.0
    %597 = vmatprep.subr.mxu0 0.0
    %598 = vmatpush1.msra.mxu0 0.0
    %599 = vmatprep.subr.mxu0 0.0
    %600 = vmatpush1.msra.mxu0 0.0
    %601 = vmatprep.subr.mxu0 0.0
    %602 = vmatpush1.msra.mxu0 0.0
    %603 = vmatprep.subr.mxu0 0.0
    %604 = vmatpush1.msra.mxu0 0.0
    %605 = vmatprep.subr.mxu0 0.0
    %606 = vmatpush1.msra.mxu0 0.0
    %607 = vmatprep.subr.mxu0 0.0
    %608 = vmatpush1.msra.mxu0 0.0
    %609 = vmatprep.subr.mxu0 0.0
    %610 = vmatpush1.msra.mxu0 0.0
    %611 = vmatprep.subr.mxu0 0.0
    %612 = vmatpush1.msra.mxu0 0.0
    %613 = vmatprep.subr.mxu0 0.0
    %614 = vmatpush1.msra.mxu0 0.0
    %615 = vmatprep.subr.mxu0 0.0
    %616 = vmatpush1.msra.mxu0 0.0
    %617 = vmatprep.subr.mxu0 0.0
    %618 = vmatpush1.msra.mxu0 0.0
    %619 = vmatprep.subr.mxu0 0.0
    %620 = vmatpush1.msra.mxu0 0.0
    %621 = vmatprep.subr.mxu0 0.0
    %622 = vmatpush1.msra.mxu0 0.0
    %623 = vmatprep.subr.mxu0 0.0
    %624 = vmatpush1.msra.mxu0 0.0
    %625 = vmatprep.subr.mxu0 0.0
    %626 = vmatpush1.msra.mxu0 0.0
    %627 = vmatprep.mubr.f32.mxu0 0.0
    %628 = vmatmul.mubr.f32.gmra.mrb[0].mxu0 %v561
    %v629 = vpop.f32.mrb[0].mxu0
    %v630 = vadd.f32 0.0, %v629
    %v631 = vpop.f32.mrb[0].mxu0
    %632 = vdwg.mxu0
    %633 = vrot.lane.b32.xlu0 %v469, 64
    %v634 = vpop.permute.xlu0 %633
    %635 = vrot.lane.b32.xlu0 %v386, 64
    %v636 = vpop.permute.xlu0 %635
    %v637 = vsel %vm471, %v634, 0
    %v639 = vsel %vm471, %v636, 0
    %641 = vmatprep.subr.mxu0 0.0
    %642 = vmatpush1.xpose.msra.mxu0 %v639
    %643 = vmatprep.subr.mxu0 0.0
    %644 = vmatpush1.xpose.msra.mxu0 0.0
    %645 = vmatprep.subr.mxu0 0.0
    %646 = vmatpush1.xpose.msra.mxu0 0.0
    %647 = vmatprep.subr.mxu0 0.0
    %648 = vmatpush1.xpose.msra.mxu0 0.0
    %649 = vmatprep.subr.mxu0 0.0
    %650 = vmatpush1.xpose.msra.mxu0 0.0
    %651 = vmatprep.subr.mxu0 0.0
    %652 = vmatpush1.xpose.msra.mxu0 0.0
    %653 = vmatprep.subr.mxu0 0.0
    %654 = vmatpush1.xpose.msra.mxu0 0.0
    %655 = vmatprep.subr.mxu0 0.0
    %656 = vmatpush1.xpose.msra.mxu0 0.0
    %657 = vmatprep.subr.mxu0 0.0
    %658 = vmatpush1.xpose.msra.mxu0 0.0
    %659 = vmatprep.subr.mxu0 0.0
    %660 = vmatpush1.xpose.msra.mxu0 0.0
    %661 = vmatprep.subr.mxu0 0.0
    %662 = vmatpush1.xpose.msra.mxu0 0.0
    %663 = vmatprep.subr.mxu0 0.0
    %664 = vmatpush1.xpose.msra.mxu0 0.0
    %665 = vmatprep.subr.mxu0 0.0
    %666 = vmatpush1.xpose.msra.mxu0 0.0
    %667 = vmatprep.subr.mxu0 0.0
    %668 = vmatpush1.xpose.msra.mxu0 0.0
    %669 = vmatprep.subr.mxu0 0.0
    %670 = vmatpush1.xpose.msra.mxu0 0.0
    %671 = vmatprep.subr.mxu0 0.0
    %672 = vmatpush1.xpose.msra.mxu0 0.0
    %673 = vmatprep.subr.mxu0 0.0
    %674 = vmatpush1.xpose.msra.mxu0 0.0
    %675 = vmatprep.subr.mxu0 0.0
    %676 = vmatpush1.xpose.msra.mxu0 0.0
    %677 = vmatprep.subr.mxu0 0.0
    %678 = vmatpush1.xpose.msra.mxu0 0.0
    %679 = vmatprep.subr.mxu0 0.0
    %680 = vmatpush1.xpose.msra.mxu0 0.0
    %681 = vmatprep.subr.mxu0 0.0
    %682 = vmatpush1.xpose.msra.mxu0 0.0
    %683 = vmatprep.subr.mxu0 0.0
    %684 = vmatpush1.xpose.msra.mxu0 0.0
    %685 = vmatprep.subr.mxu0 0.0
    %686 = vmatpush1.xpose.msra.mxu0 0.0
    %687 = vmatprep.subr.mxu0 0.0
    %688 = vmatpush1.xpose.msra.mxu0 0.0
    %689 = vmatprep.subr.mxu0 0.0
    %690 = vmatpush1.xpose.msra.mxu0 0.0
    %691 = vmatprep.subr.mxu0 0.0
    %692 = vmatpush1.xpose.msra.mxu0 0.0
    %693 = vmatprep.subr.mxu0 0.0
    %694 = vmatpush1.xpose.msra.mxu0 0.0
    %695 = vmatprep.subr.mxu0 0.0
    %696 = vmatpush1.xpose.msra.mxu0 0.0
    %697 = vmatprep.subr.mxu0 0.0
    %698 = vmatpush1.xpose.msra.mxu0 0.0
    %699 = vmatprep.subr.mxu0 0.0
    %700 = vmatpush1.xpose.msra.mxu0 0.0
    %701 = vmatprep.subr.mxu0 0.0
    %702 = vmatpush1.xpose.msra.mxu0 0.0
    %703 = vmatprep.subr.mxu0 0.0
    %704 = vmatpush1.xpose.msra.mxu0 0.0
    %705 = vmatprep.mubr.f32.mxu0 0.0
    %706 = vmatmul.mubr.f32.gmra.mrb[0].mxu0 %v637
    %v707 = vpop.f32.mrb[0].mxu0
    %v708 = vadd.f32 0.0, %v707
    %v709 = vpop.f32.mrb[0].mxu0
    %710 = vdwg.mxu0
    %v711 = vsel %vm548, %v708, -inf
    %712 = vmax.xlane.f32.xlu0 %v711
    %v713 = vpop.xlane.xlu0 %712
    %v714 = vsub.f32 %v708, %v713
    %v715 = vmul.f32 %v714, 1.442695
    %v716 = vpow.pop %v715
    %v717 = vsel %vm548, %v716, 0.0
    %718 = vadd.xlane.f32.xlu0 %v717
    %v719 = vpop.xlane.xlu0 %718
    %v720 = vrcp.pop %v719
    %v721 = vmul.f32 %v716, %v720
    %723 = vrot.lane.b32.xlu0 %v461, 64
    %v724 = vpop.permute.xlu0 %723
    %v727 = vsel %vm548, %v721, 0
    %729 = vmatprep.subr.mxu0 0.0
    %730 = vmatpush1.msra.mxu0 %v724
    %731 = vmatprep.subr.mxu0 0.0
    %732 = vmatpush1.msra.mxu0 0.0
    %733 = vmatprep.subr.mxu0 0.0
    %734 = vmatpush1.msra.mxu0 0.0
    %735 = vmatprep.subr.mxu0 0.0
    %736 = vmatpush1.msra.mxu0 0.0
    %737 = vmatprep.subr.mxu0 0.0
    %738 = vmatpush1.msra.mxu0 0.0
    %739 = vmatprep.subr.mxu0 0.0
    %740 = vmatpush1.msra.mxu0 0.0
    %741 = vmatprep.subr.mxu0 0.0
    %742 = vmatpush1.msra.mxu0 0.0
    %743 = vmatprep.subr.mxu0 0.0
    %744 = vmatpush1.msra.mxu0 0.0
    %745 = vmatprep.subr.mxu0 0.0
    %746 = vmatpush1.msra.mxu0 0.0
    %747 = vmatprep.subr.mxu0 0.0
    %748 = vmatpush1.msra.mxu0 0.0
    %749 = vmatprep.subr.mxu0 0.0
    %750 = vmatpush1.msra.mxu0 0.0
    %751 = vmatprep.subr.mxu0 0.0
    %752 = vmatpush1.msra.mxu0 0.0
    %753 = vmatprep.subr.mxu0 0.0
    %754 = vmatpush1.msra.mxu0 0.0
    %755 = vmatprep.subr.mxu0 0.0
    %756 = vmatpush1.msra.mxu0 0.0
    %757 = vmatprep.subr.mxu0 0.0
    %758 = vmatpush1.msra.mxu0 0.0
    %759 = vmatprep.subr.mxu0 0.0
    %760 = vmatpush1.msra.mxu0 0.0
    %761 = vmatprep.subr.mxu0 0.0
    %762 = vmatpush1.msra.mxu0 0.0
    %763 = vmatprep.subr.mxu0 0.0
    %764 = vmatpush1.msra.mxu0 0.0
    %765 = vmatprep.subr.mxu0 0.0
    %766 = vmatpush1.msra.mxu0 0.0
    %767 = vmatprep.subr.mxu0 0.0
    %768 = vmatpush1.msra.mxu0 0.0
    %769 = vmatprep.subr.mxu0 0.0
    %770 = vmatpush1.msra.mxu0 0.0
    %771 = vmatprep.subr.mxu0 0.0
    %772 = vmatpush1.msra.mxu0 0.0
    %773 = vmatprep.subr.mxu0 0.0
    %774 = vmatpush1.msra.mxu0 0.0
    %775 = vmatprep.subr.mxu0 0.0
    %776 = vmatpush1.msra.mxu0 0.0
    %777 = vmatprep.subr.mxu0 0.0
    %778 = vmatpush1.msra.mxu0 0.0
    %779 = vmatprep.subr.mxu0 0.0
    %780 = vmatpush1.msra.mxu0 0.0
    %781 = vmatprep.subr.mxu0 0.0
    %782 = vmatpush1.msra.mxu0 0.0
    %783 = vmatprep.subr.mxu0 0.0
    %784 = vmatpush1.msra.mxu0 0.0
    %785 = vmatprep.subr.mxu0 0.0
    %786 = vmatpush1.msra.mxu0 0.0
    %787 = vmatprep.subr.mxu0 0.0
    %788 = vmatpush1.msra.mxu0 0.0
    %789 = vmatprep.subr.mxu0 0.0
    %790 = vmatpush1.msra.mxu0 0.0
    %791 = vmatprep.subr.mxu0 0.0
    %792 = vmatpush1.msra.mxu0 0.0
    %793 = vmatprep.mubr.f32.mxu0 0.0
    %794 = vmatmul.mubr.f32.gmra.mrb[0].mxu0 %v727
    %v795 = vpop.f32.mrb[0].mxu0
    %v796 = vadd.f32 0.0, %v795
    %v797 = vpop.f32.mrb[0].mxu0
    %798 = vdwg.mxu0
    %800 = vrot.lane.b32.xlu0 %v796, 64
    %v801 = vpop.permute.xlu0 %800
    %v803 = vsel %vm471, %v630, %v801
    %v805 = vsel %vm471, %v470, 0
    %v808 = vsel %vm471, %v392, 0
    %810 = vmatprep.subr.mxu0 0.0
    %811 = vmatpush1.xpose.msra.mxu0 %v808
    %812 = vmatprep.subr.mxu0 0.0
    %813 = vmatpush1.xpose.msra.mxu0 0.0
    %814 = vmatprep.subr.mxu0 0.0
    %815 = vmatpush1.xpose.msra.mxu0 0.0
    %816 = vmatprep.subr.mxu0 0.0
    %817 = vmatpush1.xpose.msra.mxu0 0.0
    %818 = vmatprep.subr.mxu0 0.0
    %819 = vmatpush1.xpose.msra.mxu0 0.0
    %820 = vmatprep.subr.mxu0 0.0
    %821 = vmatpush1.xpose.msra.mxu0 0.0
    %822 = vmatprep.subr.mxu0 0.0
    %823 = vmatpush1.xpose.msra.mxu0 0.0
    %824 = vmatprep.subr.mxu0 0.0
    %825 = vmatpush1.xpose.msra.mxu0 0.0
    %826 = vmatprep.subr.mxu0 0.0
    %827 = vmatpush1.xpose.msra.mxu0 0.0
    %828 = vmatprep.subr.mxu0 0.0
    %829 = vmatpush1.xpose.msra.mxu0 0.0
    %830 = vmatprep.subr.mxu0 0.0
    %831 = vmatpush1.xpose.msra.mxu0 0.0
    %832 = vmatprep.subr.mxu0 0.0
    %833 = vmatpush1.xpose.msra.mxu0 0.0
    %834 = vmatprep.subr.mxu0 0.0
    %835 = vmatpush1.xpose.msra.mxu0 0.0
    %836 = vmatprep.subr.mxu0 0.0
    %837 = vmatpush1.xpose.msra.mxu0 0.0
    %838 = vmatprep.subr.mxu0 0.0
    %839 = vmatpush1.xpose.msra.mxu0 0.0
    %840 = vmatprep.subr.mxu0 0.0
    %841 = vmatpush1.xpose.msra.mxu0 0.0
    %842 = vmatprep.subr.mxu0 0.0
    %843 = vmatpush1.xpose.msra.mxu0 0.0
    %844 = vmatprep.subr.mxu0 0.0
    %845 = vmatpush1.xpose.msra.mxu0 0.0
    %846 = vmatprep.subr.mxu0 0.0
    %847 = vmatpush1.xpose.msra.mxu0 0.0
    %848 = vmatprep.subr.mxu0 0.0
    %849 = vmatpush1.xpose.msra.mxu0 0.0
    %850 = vmatprep.subr.mxu0 0.0
    %851 = vmatpush1.xpose.msra.mxu0 0.0
    %852 = vmatprep.subr.mxu0 0.0
    %853 = vmatpush1.xpose.msra.mxu0 0.0
    %854 = vmatprep.subr.mxu0 0.0
    %855 = vmatpush1.xpose.msra.mxu0 0.0
    %856 = vmatprep.subr.mxu0 0.0
    %857 = vmatpush1.xpose.msra.mxu0 0.0
    %858 = vmatprep.subr.mxu0 0.0
    %859 = vmatpush1.xpose.msra.mxu0 0.0
    %860 = vmatprep.subr.mxu0 0.0
    %861 = vmatpush1.xpose.msra.mxu0 0.0
    %862 = vmatprep.subr.mxu0 0.0
    %863 = vmatpush1.xpose.msra.mxu0 0.0
    %864 = vmatprep.subr.mxu0 0.0
    %865 = vmatpush1.xpose.msra.mxu0 0.0
    %866 = vmatprep.subr.mxu0 0.0
    %867 = vmatpush1.xpose.msra.mxu0 0.0
    %868 = vmatprep.subr.mxu0 0.0
    %869 = vmatpush1.xpose.msra.mxu0 0.0
    %870 = vmatprep.subr.mxu0 0.0
    %871 = vmatpush1.xpose.msra.mxu0 0.0
    %872 = vmatprep.subr.mxu0 0.0
    %873 = vmatpush1.xpose.msra.mxu0 0.0
    %874 = vmatprep.mubr.f32.mxu0 0.0
    %875 = vmatmul.mubr.f32.gmra.mrb[0].mxu0 %v805
    %v876 = vpop.f32.mrb[0].mxu0
    %v877 = vadd.f32 0.0, %v876
    %v878 = vpop.f32.mrb[0].mxu0
    %879 = vdwg.mxu0
    %v880 = vsel %vm548, %v877, -inf
    %881 = vmax.xlane.f32.xlu0 %v880
    %v882 = vpop.xlane.xlu0 %881
    %v883 = vsub.f32 %v877, %v882
    %v884 = vmul.f32 %v883, 1.442695
    %v885 = vpow.pop %v884
    %v886 = vsel %vm548, %v885, 0.0
    %887 = vadd.xlane.f32.xlu0 %v886
    %v888 = vpop.xlane.xlu0 %887
    %v889 = vrcp.pop %v888
    %v890 = vmul.f32 %v885, %v889
    %v892 = vsel %vm548, %v890, 0
    %894 = vmatprep.subr.mxu0 0.0
    %895 = vmatpush1.msra.mxu0 %v466
    %896 = vmatprep.subr.mxu0 0.0
    %897 = vmatpush1.msra.mxu0 0.0
    %898 = vmatprep.subr.mxu0 0.0
    %899 = vmatpush1.msra.mxu0 0.0
    %900 = vmatprep.subr.mxu0 0.0
    %901 = vmatpush1.msra.mxu0 0.0
    %902 = vmatprep.subr.mxu0 0.0
    %903 = vmatpush1.msra.mxu0 0.0
    %904 = vmatprep.subr.mxu0 0.0
    %905 = vmatpush1.msra.mxu0 0.0
    %906 = vmatprep.subr.mxu0 0.0
    %907 = vmatpush1.msra.mxu0 0.0
    %908 = vmatprep.subr.mxu0 0.0
    %909 = vmatpush1.msra.mxu0 0.0
    %910 = vmatprep.subr.mxu0 0.0
    %911 = vmatpush1.msra.mxu0 0.0
    %912 = vmatprep.subr.mxu0 0.0
    %913 = vmatpush1.msra.mxu0 0.0
    %914 = vmatprep.subr.mxu0 0.0
    %915 = vmatpush1.msra.mxu0 0.0
    %916 = vmatprep.subr.mxu0 0.0
    %917 = vmatpush1.msra.mxu0 0.0
    %918 = vmatprep.subr.mxu0 0.0
    %919 = vmatpush1.msra.mxu0 0.0
    %920 = vmatprep.subr.mxu0 0.0
    %921 = vmatpush1.msra.mxu0 0.0
    %922 = vmatprep.subr.mxu0 0.0
    %923 = vmatpush1.msra.mxu0 0.0
    %924 = vmatprep.subr.mxu0 0.0
    %925 = vmatpush1.msra.mxu0 0.0
    %926 = vmatprep.subr.mxu0 0.0
    %927 = vmatpush1.msra.mxu0 0.0
    %928 = vmatprep.subr.mxu0 0.0
    %929 = vmatpush1.msra.mxu0 0.0
    %930 = vmatprep.subr.mxu0 0.0
    %931 = vmatpush1.msra.mxu0 0.0
    %932 = vmatprep.subr.mxu0 0.0
    %933 = vmatpush1.msra.mxu0 0.0
    %934 = vmatprep.subr.mxu0 0.0
    %935 = vmatpush1.msra.mxu0 0.0
    %936 = vmatprep.subr.mxu0 0.0
    %937 = vmatpush1.msra.mxu0 0.0
    %938 = vmatprep.subr.mxu0 0.0
    %939 = vmatpush1.msra.mxu0 0.0
    %940 = vmatprep.subr.mxu0 0.0
    %941 = vmatpush1.msra.mxu0 0.0
    %942 = vmatprep.subr.mxu0 0.0
    %943 = vmatpush1.msra.mxu0 0.0
    %944 = vmatprep.subr.mxu0 0.0
    %945 = vmatpush1.msra.mxu0 0.0
    %946 = vmatprep.subr.mxu0 0.0
    %947 = vmatpush1.msra.mxu0 0.0
    %948 = vmatprep.subr.mxu0 0.0
    %949 = vmatpush1.msra.mxu0 0.0
    %950 = vmatprep.subr.mxu0 0.0
    %951 = vmatpush1.msra.mxu0 0.0
    %952 = vmatprep.subr.mxu0 0.0
    %953 = vmatpush1.msra.mxu0 0.0
    %954 = vmatprep.subr.mxu0 0.0
    %955 = vmatpush1.msra.mxu0 0.0
    %956 = vmatprep.subr.mxu0 0.0
    %957 = vmatpush1.msra.mxu0 0.0
    %958 = vmatprep.mubr.f32.mxu0 0.0
    %959 = vmatmul.mubr.f32.gmra.mrb[0].mxu0 %v892
    %v960 = vpop.f32.mrb[0].mxu0
    %v961 = vadd.f32 0.0, %v960
    %v962 = vpop.f32.mrb[0].mxu0
    %963 = vdwg.mxu0
    %964 = vrot.lane.b32.xlu0 %v470, 64
    %v965 = vpop.permute.xlu0 %964
    %966 = vrot.lane.b32.xlu0 %v392, 64
    %v967 = vpop.permute.xlu0 %966
    %v968 = vsel %vm471, %v965, 0
    %v970 = vsel %vm471, %v967, 0
    %972 = vmatprep.subr.mxu0 0.0
    %973 = vmatpush1.xpose.msra.mxu0 %v970
    %974 = vmatprep.subr.mxu0 0.0
    %975 = vmatpush1.xpose.msra.mxu0 0.0
    %976 = vmatprep.subr.mxu0 0.0
    %977 = vmatpush1.xpose.msra.mxu0 0.0
    %978 = vmatprep.subr.mxu0 0.0
    %979 = vmatpush1.xpose.msra.mxu0 0.0
    %980 = vmatprep.subr.mxu0 0.0
    %981 = vmatpush1.xpose.msra.mxu0 0.0
    %982 = vmatprep.subr.mxu0 0.0
    %983 = vmatpush1.xpose.msra.mxu0 0.0
    %984 = vmatprep.subr.mxu0 0.0
    %985 = vmatpush1.xpose.msra.mxu0 0.0
    %986 = vmatprep.subr.mxu0 0.0
    %987 = vmatpush1.xpose.msra.mxu0 0.0
    %988 = vmatprep.subr.mxu0 0.0
    %989 = vmatpush1.xpose.msra.mxu0 0.0
    %990 = vmatprep.subr.mxu0 0.0
    %991 = vmatpush1.xpose.msra.mxu0 0.0
    %992 = vmatprep.subr.mxu0 0.0
    %993 = vmatpush1.xpose.msra.mxu0 0.0
    %994 = vmatprep.subr.mxu0 0.0
    %995 = vmatpush1.xpose.msra.mxu0 0.0
    %996 = vmatprep.subr.mxu0 0.0
    %997 = vmatpush1.xpose.msra.mxu0 0.0
    %998 = vmatprep.subr.mxu0 0.0
    %999 = vmatpush1.xpose.msra.mxu0 0.0
    %1000 = vmatprep.subr.mxu0 0.0
    %1001 = vmatpush1.xpose.msra.mxu0 0.0
    %1002 = vmatprep.subr.mxu0 0.0
    %1003 = vmatpush1.xpose.msra.mxu0 0.0
    %1004 = vmatprep.subr.mxu0 0.0
    %1005 = vmatpush1.xpose.msra.mxu0 0.0
    %1006 = vmatprep.subr.mxu0 0.0
    %1007 = vmatpush1.xpose.msra.mxu0 0.0
    %1008 = vmatprep.subr.mxu0 0.0
    %1009 = vmatpush1.xpose.msra.mxu0 0.0
    %1010 = vmatprep.subr.mxu0 0.0
    %1011 = vmatpush1.xpose.msra.mxu0 0.0
    %1012 = vmatprep.subr.mxu0 0.0
    %1013 = vmatpush1.xpose.msra.mxu0 0.0
    %1014 = vmatprep.subr.mxu0 0.0
    %1015 = vmatpush1.xpose.msra.mxu0 0.0
    %1016 = vmatprep.subr.mxu0 0.0
    %1017 = vmatpush1.xpose.msra.mxu0 0.0
    %1018 = vmatprep.subr.mxu0 0.0
    %1019 = vmatpush1.xpose.msra.mxu0 0.0
    %1020 = vmatprep.subr.mxu0 0.0
    %1021 = vmatpush1.xpose.msra.mxu0 0.0
    %1022 = vmatprep.subr.mxu0 0.0
    %1023 = vmatpush1.xpose.msra.mxu0 0.0
    %1024 = vmatprep.subr.mxu0 0.0
    %1025 = vmatpush1.xpose.msra.mxu0 0.0
    %1026 = vmatprep.subr.mxu0 0.0
    %1027 = vmatpush1.xpose.msra.mxu0 0.0
    %1028 = vmatprep.subr.mxu0 0.0
    %1029 = vmatpush1.xpose.msra.mxu0 0.0
    %1030 = vmatprep.subr.mxu0 0.0
    %1031 = vmatpush1.xpose.msra.mxu0 0.0
    %1032 = vmatprep.subr.mxu0 0.0
    %1033 = vmatpush1.xpose.msra.mxu0 0.0
    %1034 = vmatprep.subr.mxu0 0.0
    %1035 = vmatpush1.xpose.msra.mxu0 0.0
    %1036 = vmatprep.mubr.f32.mxu0 0.0
    %1037 = vmatmul.mubr.f32.gmra.mrb[0].mxu0 %v968
    %v1038 = vpop.f32.mrb[0].mxu0
    %v1039 = vadd.f32 0.0, %v1038
    %v1040 = vpop.f32.mrb[0].mxu0
    %1041 = vdwg.mxu0
    %v1042 = vsel %vm548, %v1039, -inf
    %1043 = vmax.xlane.f32.xlu0 %v1042
    %v1044 = vpop.xlane.xlu0 %1043
    %v1045 = vsub.f32 %v1039, %v1044
    %v1046 = vmul.f32 %v1045, 1.442695
    %v1047 = vpow.pop %v1046
    %v1048 = vsel %vm548, %v1047, 0.0
    %1049 = vadd.xlane.f32.xlu0 %v1048
    %v1050 = vpop.xlane.xlu0 %1049
    %v1051 = vrcp.pop %v1050
    %v1052 = vmul.f32 %v1047, %v1051
    %1054 = vrot.lane.b32.xlu0 %v466, 64
    %v1055 = vpop.permute.xlu0 %1054
    %v1058 = vsel %vm548, %v1052, 0
    %1060 = vmatprep.subr.mxu0 0.0
    %1061 = vmatpush1.msra.mxu0 %v1055
    %1062 = vmatprep.subr.mxu0 0.0
    %1063 = vmatpush1.msra.mxu0 0.0
    %1064 = vmatprep.subr.mxu0 0.0
    %1065 = vmatpush1.msra.mxu0 0.0
    %1066 = vmatprep.subr.mxu0 0.0
    %1067 = vmatpush1.msra.mxu0 0.0
    %1068 = vmatprep.subr.mxu0 0.0
    %1069 = vmatpush1.msra.mxu0 0.0
    %1070 = vmatprep.subr.mxu0 0.0
    %1071 = vmatpush1.msra.mxu0 0.0
    %1072 = vmatprep.subr.mxu0 0.0
    %1073 = vmatpush1.msra.mxu0 0.0
    %1074 = vmatprep.subr.mxu0 0.0
    %1075 = vmatpush1.msra.mxu0 0.0
    %1076 = vmatprep.subr.mxu0 0.0
    %1077 = vmatpush1.msra.mxu0 0.0
    %1078 = vmatprep.subr.mxu0 0.0
    %1079 = vmatpush1.msra.mxu0 0.0
    %1080 = vmatprep.subr.mxu0 0.0
    %1081 = vmatpush1.msra.mxu0 0.0
    %1082 = vmatprep.subr.mxu0 0.0
    %1083 = vmatpush1.msra.mxu0 0.0
    %1084 = vmatprep.subr.mxu0 0.0
    %1085 = vmatpush1.msra.mxu0 0.0
    %1086 = vmatprep.subr.mxu0 0.0
    %1087 = vmatpush1.msra.mxu0 0.0
    %1088 = vmatprep.subr.mxu0 0.0
    %1089 = vmatpush1.msra.mxu0 0.0
    %1090 = vmatprep.subr.mxu0 0.0
    %1091 = vmatpush1.msra.mxu0 0.0
    %1092 = vmatprep.subr.mxu0 0.0
    %1093 = vmatpush1.msra.mxu0 0.0
    %1094 = vmatprep.subr.mxu0 0.0
    %1095 = vmatpush1.msra.mxu0 0.0
    %1096 = vmatprep.subr.mxu0 0.0
    %1097 = vmatpush1.msra.mxu0 0.0
    %1098 = vmatprep.subr.mxu0 0.0
    %1099 = vmatpush1.msra.mxu0 0.0
    %1100 = vmatprep.subr.mxu0 0.0
    %1101 = vmatpush1.msra.mxu0 0.0
    %1102 = vmatprep.subr.mxu0 0.0
    %1103 = vmatpush1.msra.mxu0 0.0
    %1104 = vmatprep.subr.mxu0 0.0
    %1105 = vmatpush1.msra.mxu0 0.0
    %1106 = vmatprep.subr.mxu0 0.0
    %1107 = vmatpush1.msra.mxu0 0.0
    %1108 = vmatprep.subr.mxu0 0.0
    %1109 = vmatpush1.msra.mxu0 0.0
    %1110 = vmatprep.subr.mxu0 0.0
    %1111 = vmatpush1.msra.mxu0 0.0
    %1112 = vmatprep.subr.mxu0 0.0
    %1113 = vmatpush1.msra.mxu0 0.0
    %1114 = vmatprep.subr.mxu0 0.0
    %1115 = vmatpush1.msra.mxu0 0.0
    %1116 = vmatprep.subr.mxu0 0.0
    %1117 = vmatpush1.msra.mxu0 0.0
    %1118 = vmatprep.subr.mxu0 0.0
    %1119 = vmatpush1.msra.mxu0 0.0
    %1120 = vmatprep.subr.mxu0 0.0
    %1121 = vmatpush1.msra.mxu0 0.0
    %1122 = vmatprep.subr.mxu0 0.0
    %1123 = vmatpush1.msra.mxu0 0.0
    %1124 = vmatprep.mubr.f32.mxu0 0.0
    %1125 = vmatmul.mubr.f32.gmra.mrb[0].mxu0 %v1058
    %v1126 = vpop.f32.mrb[0].mxu0
    %v1127 = vadd.f32 0.0, %v1126
    %v1128 = vpop.f32.mrb[0].mxu0
    %1129 = vdwg.mxu0
    %1131 = vrot.lane.b32.xlu0 %v1127, 64
    %v1132 = vpop.permute.xlu0 %1131
    %v1134 = vsel %vm471, %v961, %v1132
    %v1135 = vld [vmem:[%s9] sm:$0xff]
    %v1136 = vld [vmem:[%s9 + $0x8] sm:$0xff]
    %v1137 = vld [vmem:[%s9 + $0x10] sm:$0xff]
    %v1138 = vld [vmem:[%s9 + $0x18] sm:$0xff]
    %v1139 = vld [vmem:[%s9 + $0x20] sm:$0xff]
    %v1140 = vld [vmem:[%s9 + $0x28] sm:$0xff]
    %v1141 = vld [vmem:[%s9 + $0x30] sm:$0xff]
    %v1142 = vld [vmem:[%s9 + $0x38] sm:$0xff]
    %v1143 = vld [vmem:[%s9 + $0x40] sm:$0xff]
    %v1144 = vld [vmem:[%s9 + $0x48] sm:$0xff]
    %v1145 = vld [vmem:[%s9 + $0x50] sm:$0xff]
    %v1146 = vld [vmem:[%s9 + $0x58] sm:$0xff]
    %v1147 = vld [vmem:[%s9 + $0x60] sm:$0xff]
    %v1148 = vld [vmem:[%s9 + $0x68] sm:$0xff]
    %v1149 = vld [vmem:[%s9 + $0x70] sm:$0xff]
    %v1150 = vld [vmem:[%s9 + $0x78] sm:$0xff]
    %1151 = vmatprep.subr.mxu0 0.0
    %1152 = vmatpush1.msra.mxu0 %v1135
    %1153 = vmatprep.subr.mxu0 0.0
    %1154 = vmatpush1.msra.mxu0 %v1136
    %1155 = vmatprep.subr.mxu0 0.0
    %1156 = vmatpush1.msra.mxu0 %v1137
    %1157 = vmatprep.subr.mxu0 0.0
    %1158 = vmatpush1.msra.mxu0 %v1138
    %1159 = vmatprep.subr.mxu0 0.0
    %1160 = vmatpush1.msra.mxu0 %v1139
    %1161 = vmatprep.subr.mxu0 0.0
    %1162 = vmatpush1.msra.mxu0 %v1140
    %1163 = vmatprep.subr.mxu0 0.0
    %1164 = vmatpush1.msra.mxu0 %v1141
    %1165 = vmatprep.subr.mxu0 0.0
    %1166 = vmatpush1.msra.mxu0 %v1142
    %1167 = vmatprep.subr.mxu0 0.0
    %1168 = vmatpush1.msra.mxu0 %v1143
    %1169 = vmatprep.subr.mxu0 0.0
    %1170 = vmatpush1.msra.mxu0 %v1144
    %1171 = vmatprep.subr.mxu0 0.0
    %1172 = vmatpush1.msra.mxu0 %v1145
    %1173 = vmatprep.subr.mxu0 0.0
    %1174 = vmatpush1.msra.mxu0 %v1146
    %1175 = vmatprep.subr.mxu0 0.0
    %1176 = vmatpush1.msra.mxu0 %v1147
    %1177 = vmatprep.subr.mxu0 0.0
    %1178 = vmatpush1.msra.mxu0 %v1148
    %1179 = vmatprep.subr.mxu0 0.0
    %1180 = vmatpush1.msra.mxu0 %v1149
    %1181 = vmatprep.subr.mxu0 0.0
    %1182 = vmatpush1.msra.mxu0 %v1150
    %1183 = vmatprep.subr.mxu0 0.0
    %1184 = vmatpush1.msra.mxu0 0.0
    %1185 = vmatprep.subr.mxu0 0.0
    %1186 = vmatpush1.msra.mxu0 0.0
    %1187 = vmatprep.subr.mxu0 0.0
    %1188 = vmatpush1.msra.mxu0 0.0
    %1189 = vmatprep.subr.mxu0 0.0
    %1190 = vmatpush1.msra.mxu0 0.0
    %1191 = vmatprep.subr.mxu0 0.0
    %1192 = vmatpush1.msra.mxu0 0.0
    %1193 = vmatprep.subr.mxu0 0.0
    %1194 = vmatpush1.msra.mxu0 0.0
    %1195 = vmatprep.subr.mxu0 0.0
    %1196 = vmatpush1.msra.mxu0 0.0
    %1197 = vmatprep.subr.mxu0 0.0
    %1198 = vmatpush1.msra.mxu0 0.0
    %1199 = vmatprep.subr.mxu0 0.0
    %1200 = vmatpush1.msra.mxu0 0.0
    %1201 = vmatprep.subr.mxu0 0.0
    %1202 = vmatpush1.msra.mxu0 0.0
    %1203 = vmatprep.subr.mxu0 0.0
    %1204 = vmatpush1.msra.mxu0 0.0
    %1205 = vmatprep.subr.mxu0 0.0
    %1206 = vmatpush1.msra.mxu0 0.0
    %1207 = vmatprep.subr.mxu0 0.0
    %1208 = vmatpush1.msra.mxu0 0.0
    %1209 = vmatprep.subr.mxu0 0.0
    %1210 = vmatpush1.msra.mxu0 0.0
    %1211 = vmatprep.subr.mxu0 0.0
    %1212 = vmatpush1.msra.mxu0 0.0
    %1213 = vmatprep.subr.mxu0 0.0
    %1214 = vmatpush1.msra.mxu0 0.0
    %1215 = vmatprep.mubr.f32.mxu0 0.0
    %1216 = vmatmul.mubr.f32.gmra.mrb[0].mxu0 %v803
    %v1217 = vpop.f32.mrb[0].mxu0
    %v1218 = vadd.f32 0.0, %v1217
    %v1219 = vpop.f32.mrb[0].mxu0
    %1220 = vmatprep.mubr.f32.mxu0 0.0
    %1221 = vmatmul.mubr.f32.gmra.mrb[0].mxu0 %v1134
    %v1222 = vpop.f32.mrb[0].mxu0
    %v1223 = vadd.f32 0.0, %v1222
    %v1224 = vpop.f32.mrb[0].mxu0
    %1225 = vdwg.mxu0
    %v1226 = vadd.f32 %v210, %v1218
    %v1227 = vadd.f32 %v211, %v1223
    %v1228 = vld [vmem:[%s10] sm:$0x1]
    %v1230 = vlaneseq
    %v1231 = vshrl.u32 %v1230, 7
    %v1232 = vsub.s32 0, %v1231
    %v1233 = vrot.slane %v1228, %v1232
    %v1235 = vadd.f32 %v1226, %v1233
    %v1236 = vadd.f32 %v1227, %v1233
    %v1237 = vld [vmem:[%s11] sm:$0x1]
    %v1238 = vld [vmem:[%s12] sm:$0x1]
    %1239 = vadd.xlane.f32.xlu0 %v1235
    %v1240 = vpop.xlane.xlu0 %1239
    %1241 = vadd.xlane.f32.xlu0 %v1236
    %v1242 = vpop.xlane.xlu0 %1241
    %v1243 = vmul.f32 %v1240, %v177
    %v1244 = vmul.f32 %v1242, %v177
    %v1245 = vsub.f32 %v1235, %v1243
    %v1246 = vsub.f32 %v1236, %v1244
    %v1247 = vmul.f32 %v1245, %v1245
    %v1248 = vmul.f32 %v1246, %v1246
    %1249 = vadd.xlane.f32.xlu0 %v1247
    %v1250 = vpop.xlane.xlu0 %1249
    %1251 = vadd.xlane.f32.xlu0 %v1248
    %v1252 = vpop.xlane.xlu0 %1251
    %v1253 = vmul.f32 %v1250, %v177
    %v1254 = vmul.f32 %v1252, %v177
    %v1255 = vadd.f32 %v1253, 1e-05
    %v1256 = vadd.f32 %v1254, 1e-05
    %v1257 = vrsqrt.pop %v1255
    %v1258 = vrsqrt.pop %v1256
    %v1259 = vmul.f32 %v1245, %v1257
    %v1260 = vmul.f32 %v1246, %v1258
    %v1262 = vlaneseq
    %v1263 = vshrl.u32 %v1262, 7
    %v1264 = vsub.s32 0, %v1263
    %v1265 = vrot.slane %v1237, %v1264
    %v1267 = vmul.f32 %v1259, %v1265
    %v1268 = vmul.f32 %v1260, %v1265
    %v1270 = vlaneseq
    %v1271 = vshrl.u32 %v1270, 7
    %v1272 = vsub.s32 0, %v1271
    %v1273 = vrot.slane %v1238, %v1272
    %v1275 = vadd.f32 %v1267, %v1273
    %v1276 = vadd.f32 %v1268, %v1273
    %v1277 = vld [vmem:[%s13] sm:$0xff]
    %v1278 = vld [vmem:[%s13 + $0x8] sm:$0xff]
    %v1279 = vld [vmem:[%s13 + $0x10] sm:$0xff]
    %v1280 = vld [vmem:[%s13 + $0x18] sm:$0xff]
    %v1281 = vld [vmem:[%s13 + $0x20] sm:$0xff]
    %v1282 = vld [vmem:[%s13 + $0x28] sm:$0xff]
    %v1283 = vld [vmem:[%s13 + $0x30] sm:$0xff]
    %v1284 = vld [vmem:[%s13 + $0x38] sm:$0xff]
    %v1285 = vld [vmem:[%s13 + $0x40] sm:$0xff]
    %v1286 = vld [vmem:[%s13 + $0x48] sm:$0xff]
    %v1287 = vld [vmem:[%s13 + $0x50] sm:$0xff]
    %v1288 = vld [vmem:[%s13 + $0x58] sm:$0xff]
    %v1289 = vld [vmem:[%s13 + $0x60] sm:$0xff]
    %v1290 = vld [vmem:[%s13 + $0x68] sm:$0xff]
    %v1291 = vld [vmem:[%s13 + $0x70] sm:$0xff]
    %v1292 = vld [vmem:[%s13 + $0x78] sm:$0xff]
    %v1293 = vld [vmem:[%s13 + $0x80] sm:$0xff]
    %v1294 = vld [vmem:[%s13 + $0x88] sm:$0xff]
    %v1295 = vld [vmem:[%s13 + $0x90] sm:$0xff]
    %v1296 = vld [vmem:[%s13 + $0x98] sm:$0xff]
    %v1297 = vld [vmem:[%s13 + $0xa0] sm:$0xff]
    %v1298 = vld [vmem:[%s13 + $0xa8] sm:$0xff]
    %v1299 = vld [vmem:[%s13 + $0xb0] sm:$0xff]
    %v1300 = vld [vmem:[%s13 + $0xb8] sm:$0xff]
    %v1301 = vld [vmem:[%s13 + $0xc0] sm:$0xff]
    %v1302 = vld [vmem:[%s13 + $0xc8] sm:$0xff]
    %v1303 = vld [vmem:[%s13 + $0xd0] sm:$0xff]
    %v1304 = vld [vmem:[%s13 + $0xd8] sm:$0xff]
    %v1305 = vld [vmem:[%s13 + $0xe0] sm:$0xff]
    %v1306 = vld [vmem:[%s13 + $0xe8] sm:$0xff]
    %v1307 = vld [vmem:[%s13 + $0xf0] sm:$0xff]
    %v1308 = vld [vmem:[%s13 + $0xf8] sm:$0xff]
    %v1309 = vld [vmem:[%s14] sm:$0x3]
    %v1311 = vlaneseq
    %v1312 = vshrl.u32 %v1311, 7
    %v1313 = vsub.s32 0, %v1312
    %v1314 = vrot.slane %v1309, %v1313
    %v1315 = vlaneseq
    %v1316 = vshrl.u32 %v1315, 7
    %v1317 = vsub.s32 1, %v1316
    %v1318 = vrot.slane %v1309, %v1317
    %1321 = vmatprep.subr.mxu0 %v1278
    %1322 = vmatpush1.msra.mxu0 %v1277
    %1323 = vmatprep.subr.mxu0 %v1280
    %1324 = vmatpush1.msra.mxu0 %v1279
    %1325 = vmatprep.subr.mxu0 %v1282
    %1326 = vmatpush1.msra.mxu0 %v1281
    %1327 = vmatprep.subr.mxu0 %v1284
    %1328 = vmatpush1.msra.mxu0 %v1283
    %1329 = vmatprep.subr.mxu0 %v1286
    %1330 = vmatpush1.msra.mxu0 %v1285
    %1331 = vmatprep.subr.mxu0 %v1288
    %1332 = vmatpush1.msra.mxu0 %v1287
    %1333 = vmatprep.subr.mxu0 %v1290
    %1334 = vmatpush1.msra.mxu0 %v1289
    %1335 = vmatprep.subr.mxu0 %v1292
    %1336 = vmatpush1.msra.mxu0 %v1291
    %1337 = vmatprep.subr.mxu0 %v1294
    %1338 = vmatpush1.msra.mxu0 %v1293
    %1339 = vmatprep.subr.mxu0 %v1296
    %1340 = vmatpush1.msra.mxu0 %v1295
    %1341 = vmatprep.subr.mxu0 %v1298
    %1342 = vmatpush1.msra.mxu0 %v1297
    %1343 = vmatprep.subr.mxu0 %v1300
    %1344 = vmatpush1.msra.mxu0 %v1299
    %1345 = vmatprep.subr.mxu0 %v1302
    %1346 = vmatpush1.msra.mxu0 %v1301
    %1347 = vmatprep.subr.mxu0 %v1304
    %1348 = vmatpush1.msra.mxu0 %v1303
    %1349 = vmatprep.subr.mxu0 %v1306
    %1350 = vmatpush1.msra.mxu0 %v1305
    %1351 = vmatprep.subr.mxu0 %v1308
    %1352 = vmatpush1.msra.mxu0 %v1307
    %1353 = vmatprep.subr.mxu0 0.0
    %1354 = vmatpush1.msra.mxu0 0.0
    %1355 = vmatprep.subr.mxu0 0.0
    %1356 = vmatpush1.msra.mxu0 0.0
    %1357 = vmatprep.subr.mxu0 0.0
    %1358 = vmatpush1.msra.mxu0 0.0
    %1359 = vmatprep.subr.mxu0 0.0
    %1360 = vmatpush1.msra.mxu0 0.0
    %1361 = vmatprep.subr.mxu0 0.0
    %1362 = vmatpush1.msra.mxu0 0.0
    %1363 = vmatprep.subr.mxu0 0.0
    %1364 = vmatpush1.msra.mxu0 0.0
    %1365 = vmatprep.subr.mxu0 0.0
    %1366 = vmatpush1.msra.mxu0 0.0
    %1367 = vmatprep.subr.mxu0 0.0
    %1368 = vmatpush1.msra.mxu0 0.0
    %1369 = vmatprep.subr.mxu0 0.0
    %1370 = vmatpush1.msra.mxu0 0.0
    %1371 = vmatprep.subr.mxu0 0.0
    %1372 = vmatpush1.msra.mxu0 0.0
    %1373 = vmatprep.subr.mxu0 0.0
    %1374 = vmatpush1.msra.mxu0 0.0
    %1375 = vmatprep.subr.mxu0 0.0
    %1376 = vmatpush1.msra.mxu0 0.0
    %1377 = vmatprep.subr.mxu0 0.0
    %1378 = vmatpush1.msra.mxu0 0.0
    %1379 = vmatprep.subr.mxu0 0.0
    %1380 = vmatpush1.msra.mxu0 0.0
    %1381 = vmatprep.subr.mxu0 0.0
    %1382 = vmatpush1.msra.mxu0 0.0
    %1383 = vmatprep.subr.mxu0 0.0
    %1384 = vmatpush1.msra.mxu0 0.0
    %1385 = vmatprep.mubr.f32.mxu0 0.0
    %1386 = vmatmul.mubr.f32.gmra.mrb[0].mxu0 %v1275
    %v1387 = vpop.f32.mrb[0].mxu0
    %v1388 = vadd.f32 %v1314, %v1387
    %v1389 = vpop.f32.mrb[0].mxu0
    %v1390 = vadd.f32 %v1318, %v1389
    %1391 = vmatprep.mubr.f32.mxu0 0.0
    %1392 = vmatmul.mubr.f32.gmra.mrb[0].mxu0 %v1276
    %v1393 = vpop.f32.mrb[0].mxu0
    %v1394 = vadd.f32 %v1314, %v1393
    %v1395 = vpop.f32.mrb[0].mxu0
    %v1396 = vadd.f32 %v1318, %v1395
    %1397 = vdwg.mxu0
    %v1398 = vmul.f32 %v1388, 0.5
    %v1399 = vmul.f32 %v1390, 0.5
    %v1400 = vmul.f32 %v1394, 0.5
    %v1401 = vmul.f32 %v1396, 0.5
    %v1402 = vmul.f32 %v1388, 0.044715
    %v1403 = vmul.f32 %v1390, 0.044715
    %v1404 = vmul.f32 %v1394, 0.044715
    %v1405 = vmul.f32 %v1396, 0.044715
    %v1406 = vmul.f32 %v1402, %v1388
    %v1407 = vmul.f32 %v1403, %v1390
    %v1408 = vmul.f32 %v1404, %v1394
    %v1409 = vmul.f32 %v1405, %v1396
    %v1410 = vmul.f32 %v1406, %v1388
    %v1411 = vmul.f32 %v1407, %v1390
    %v1412 = vmul.f32 %v1408, %v1394
    %v1413 = vmul.f32 %v1409, %v1396
    %v1414 = vadd.f32 %v1388, %v1410
    %v1415 = vadd.f32 %v1390, %v1411
    %v1416 = vadd.f32 %v1394, %v1412
    %v1417 = vadd.f32 %v1396, %v1413
    %v1418 = vmul.f32 %v1414, 0.7978846
    %v1419 = vmul.f32 %v1415, 0.7978846
    %v1420 = vmul.f32 %v1416, 0.7978846
    %v1421 = vmul.f32 %v1417, 0.7978846
    %v1422 = vtanh.pop %v1418
    %v1423 = vtanh.pop %v1419
    %v1424 = vtanh.pop %v1420
    %v1425 = vtanh.pop %v1421
    %v1426 = vadd.f32 %v1422, 1.0
    %v1427 = vadd.f32 %v1423, 1.0
    %v1428 = vadd.f32 %v1424, 1.0
    %v1429 = vadd.f32 %v1425, 1.0
    %v1430 = vmul.f32 %v1398, %v1426
    %v1431 = vmul.f32 %v1399, %v1427
    %v1432 = vmul.f32 %v1400, %v1428
    %v1433 = vmul.f32 %v1401, %v1429
    %v1434 = vld [vmem:[%s15] sm:$0xff]
    %v1435 = vld [vmem:[%s15 + $0x8] sm:$0xff]
    %v1436 = vld [vmem:[%s15 + $0x10] sm:$0xff]
    %v1437 = vld [vmem:[%s15 + $0x18] sm:$0xff]
    %v1438 = vld [vmem:[%s15 + $0x20] sm:$0xff]
    %v1439 = vld [vmem:[%s15 + $0x28] sm:$0xff]
    %v1440 = vld [vmem:[%s15 + $0x30] sm:$0xff]
    %v1441 = vld [vmem:[%s15 + $0x38] sm:$0xff]
    %v1442 = vld [vmem:[%s15 + $0x40] sm:$0xff]
    %v1443 = vld [vmem:[%s15 + $0x48] sm:$0xff]
    %v1444 = vld [vmem:[%s15 + $0x50] sm:$0xff]
    %v1445 = vld [vmem:[%s15 + $0x58] sm:$0xff]
    %v1446 = vld [vmem:[%s15 + $0x60] sm:$0xff]
    %v1447 = vld [vmem:[%s15 + $0x68] sm:$0xff]
    %v1448 = vld [vmem:[%s15 + $0x70] sm:$0xff]
    %v1449 = vld [vmem:[%s15 + $0x78] sm:$0xff]
    %v1450 = vld [vmem:[%s15 + $0x80] sm:$0xff]
    %v1451 = vld [vmem:[%s15 + $0x88] sm:$0xff]
    %v1452 = vld [vmem:[%s15 + $0x90] sm:$0xff]
    %v1453 = vld [vmem:[%s15 + $0x98] sm:$0xff]
    %v1454 = vld [vmem:[%s15 + $0xa0] sm:$0xff]
    %v1455 = vld [vmem:[%s15 + $0xa8] sm:$0xff]
    %v1456 = vld [vmem:[%s15 + $0xb0] sm:$0xff]
    %v1457 = vld [vmem:[%s15 + $0xb8] sm:$0xff]
    %v1458 = vld [vmem:[%s15 + $0xc0] sm:$0xff]
    %v1459 = vld [vmem:[%s15 + $0xc8] sm:$0xff]
    %v1460 = vld [vmem:[%s15 + $0xd0] sm:$0xff]
    %v1461 = vld [vmem:[%s15 + $0xd8] sm:$0xff]
    %v1462 = vld [vmem:[%s15 + $0xe0] sm:$0xff]
    %v1463 = vld [vmem:[%s15 + $0xe8] sm:$0xff]
    %v1464 = vld [vmem:[%s15 + $0xf0] sm:$0xff]
    %v1465 = vld [vmem:[%s15 + $0xf8] sm:$0xff]
    %1466 = vmatprep.subr.mxu0 0.0
    %1467 = vmatpush1.msra.mxu0 %v1434
    %1468 = vmatprep.subr.mxu0 0.0
    %1469 = vmatpush1.msra.mxu0 %v1435
    %1470 = vmatprep.subr.mxu0 0.0
    %1471 = vmatpush1.msra.mxu0 %v1436
    %1472 = vmatprep.subr.mxu0 0.0
    %1473 = vmatpush1.msra.mxu0 %v1437
    %1474 = vmatprep.subr.mxu0 0.0
    %1475 = vmatpush1.msra.mxu0 %v1438
    %1476 = vmatprep.subr.mxu0 0.0
    %1477 = vmatpush1.msra.mxu0 %v1439
    %1478 = vmatprep.subr.mxu0 0.0
    %1479 = vmatpush1.msra.mxu0 %v1440
    %1480 = vmatprep.subr.mxu0 0.0
    %1481 = vmatpush1.msra.mxu0 %v1441
    %1482 = vmatprep.subr.mxu0 0.0
    %1483 = vmatpush1.msra.mxu0 %v1442
    %1484 = vmatprep.subr.mxu0 0.0
    %1485 = vmatpush1.msra.mxu0 %v1443
    %1486 = vmatprep.subr.mxu0 0.0
    %1487 = vmatpush1.msra.mxu0 %v1444
    %1488 = vmatprep.subr.mxu0 0.0
    %1489 = vmatpush1.msra.mxu0 %v1445
    %1490 = vmatprep.subr.mxu0 0.0
    %1491 = vmatpush1.msra.mxu0 %v1446
    %1492 = vmatprep.subr.mxu0 0.0
    %1493 = vmatpush1.msra.mxu0 %v1447
    %1494 = vmatprep.subr.mxu0 0.0
    %1495 = vmatpush1.msra.mxu0 %v1448
    %1496 = vmatprep.subr.mxu0 0.0
    %1497 = vmatpush1.msra.mxu0 %v1449
    %1498 = vmatprep.subr.mxu0 0.0
    %1499 = vmatpush1.msra.mxu0 %v1450
    %1500 = vmatprep.subr.mxu0 0.0
    %1501 = vmatpush1.msra.mxu0 %v1451
    %1502 = vmatprep.subr.mxu0 0.0
    %1503 = vmatpush1.msra.mxu0 %v1452
    %1504 = vmatprep.subr.mxu0 0.0
    %1505 = vmatpush1.msra.mxu0 %v1453
    %1506 = vmatprep.subr.mxu0 0.0
    %1507 = vmatpush1.msra.mxu0 %v1454
    %1508 = vmatprep.subr.mxu0 0.0
    %1509 = vmatpush1.msra.mxu0 %v1455
    %1510 = vmatprep.subr.mxu0 0.0
    %1511 = vmatpush1.msra.mxu0 %v1456
    %1512 = vmatprep.subr.mxu0 0.0
    %1513 = vmatpush1.msra.mxu0 %v1457
    %1514 = vmatprep.subr.mxu0 0.0
    %1515 = vmatpush1.msra.mxu0 %v1458
    %1516 = vmatprep.subr.mxu0 0.0
    %1517 = vmatpush1.msra.mxu0 %v1459
    %1518 = vmatprep.subr.mxu0 0.0
    %1519 = vmatpush1.msra.mxu0 %v1460
    %1520 = vmatprep.subr.mxu0 0.0
    %1521 = vmatpush1.msra.mxu0 %v1461
    %1522 = vmatprep.subr.mxu0 0.0
    %1523 = vmatpush1.msra.mxu0 %v1462
    %1524 = vmatprep.subr.mxu0 0.0
    %1525 = vmatpush1.msra.mxu0 %v1463
    %1526 = vmatprep.subr.mxu0 0.0
    %1527 = vmatpush1.msra.mxu0 %v1464
    %1528 = vmatprep.subr.mxu0 0.0
    %1529 = vmatpush1.msra.mxu0 %v1465
    %1530 = vmatprep.mubr.f32.mxu0 %v1431
    %1531 = vmatmul.mubr.f32.gmra.mrb[0].mxu0 %v1430
    %v1532 = vpop.f32.mrb[0].mxu0
    %v1533 = vadd.f32 0.0, %v1532
    %v1534 = vpop.f32.mrb[0].mxu0
    %1535 = vmatprep.mubr.f32.mxu0 %v1433
    %1536 = vmatmul.mubr.f32.gmra.mrb[0].mxu0 %v1432
    %v1537 = vpop.f32.mrb[0].mxu0
    %v1538 = vadd.f32 0.0, %v1537
    %v1539 = vpop.f32.mrb[0].mxu0
    %1540 = vdwg.mxu0
    %v1541 = vadd.f32 %v1235, %v1533
    %v1542 = vadd.f32 %v1236, %v1538
    %v1543 = vld [vmem:[%s16] sm:$0x1]
    %v1545 = vlaneseq
    %v1546 = vshrl.u32 %v1545, 7
    %v1547 = vsub.s32 0, %v1546
    %v1548 = vrot.slane %v1543, %v1547
    %v1550 = vadd.f32 %v1541, %v1548
    %v1551 = vadd.f32 %v1542, %v1548
    %s1552 = scalar_lea.vmem %s5, 1
    %v1553 = vld [vmem:[%s1552] sm:$0x1]
    %s1554 = scalar_lea.vmem %s6, 1
    %v1555 = vld [vmem:[%s1554] sm:$0x1]
    %1556 = vadd.xlane.f32.xlu0 %v1550
    %v1557 = vpop.xlane.xlu0 %1556
    %1558 = vadd.xlane.f32.xlu0 %v1551
    %v1559 = vpop.xlane.xlu0 %1558
    %v1560 = vmul.f32 %v1557, %v177
    %v1561 = vmul.f32 %v1559, %v177
    %v1562 = vsub.f32 %v1550, %v1560
    %v1563 = vsub.f32 %v1551, %v1561
    %v1564 = vmul.f32 %v1562, %v1562
    %v1565 = vmul.f32 %v1563, %v1563
    %1566 = vadd.xlane.f32.xlu0 %v1564
    %v1567 = vpop.xlane.xlu0 %1566
    %1568 = vadd.xlane.f32.xlu0 %v1565
    %v1569 = vpop.xlane.xlu0 %1568
    %v1570 = vmul.f32 %v1567, %v177
    %v1571 = vmul.f32 %v1569, %v177
    %v1572 = vadd.f32 %v1570, 1e-05
    %v1573 = vadd.f32 %v1571, 1e-05
    %v1574 = vrsqrt.pop %v1572
    %v1575 = vrsqrt.pop %v1573
    %v1576 = vmul.f32 %v1562, %v1574
    %v1577 = vmul.f32 %v1563, %v1575
    %v1579 = vlaneseq
    %v1580 = vshrl.u32 %v1579, 7
    %v1581 = vsub.s32 0, %v1580
    %v1582 = vrot.slane %v1553, %v1581
    %v1584 = vmul.f32 %v1576, %v1582
    %v1585 = vmul.f32 %v1577, %v1582
    %v1587 = vlaneseq
    %v1588 = vshrl.u32 %v1587, 7
    %v1589 = vsub.s32 0, %v1588
    %v1590 = vrot.slane %v1555, %v1589
    %v1592 = vadd.f32 %v1584, %v1590
    %v1593 = vadd.f32 %v1585, %v1590
    %s1594 = scalar_lea.vmem %s7, 384
    %v1595 = vld [vmem:[%s1594] sm:$0xff]
    %v1596 = vld [vmem:[%s1594 + $0x8] sm:$0xff]
    %v1597 = vld [vmem:[%s1594 + $0x10] sm:$0xff]
    %v1598 = vld [vmem:[%s1594 + $0x18] sm:$0xff]
    %v1599 = vld [vmem:[%s1594 + $0x20] sm:$0xff]
    %v1600 = vld [vmem:[%s1594 + $0x28] sm:$0xff]
    %v1601 = vld [vmem:[%s1594 + $0x30] sm:$0xff]
    %v1602 = vld [vmem:[%s1594 + $0x38] sm:$0xff]
    %v1603 = vld [vmem:[%s1594 + $0x40] sm:$0xff]
    %v1604 = vld [vmem:[%s1594 + $0x48] sm:$0xff]
    %v1605 = vld [vmem:[%s1594 + $0x50] sm:$0xff]
    %v1606 = vld [vmem:[%s1594 + $0x58] sm:$0xff]
    %v1607 = vld [vmem:[%s1594 + $0x60] sm:$0xff]
    %v1608 = vld [vmem:[%s1594 + $0x68] sm:$0xff]
    %v1609 = vld [vmem:[%s1594 + $0x70] sm:$0xff]
    %v1610 = vld [vmem:[%s1594 + $0x78] sm:$0xff]
    %v1611 = vld [vmem:[%s1594 + $0x80] sm:$0xff]
    %v1612 = vld [vmem:[%s1594 + $0x88] sm:$0xff]
    %v1613 = vld [vmem:[%s1594 + $0x90] sm:$0xff]
    %v1614 = vld [vmem:[%s1594 + $0x98] sm:$0xff]
    %v1615 = vld [vmem:[%s1594 + $0xa0] sm:$0xff]
    %v1616 = vld [vmem:[%s1594 + $0xa8] sm:$0xff]
    %v1617 = vld [vmem:[%s1594 + $0xb0] sm:$0xff]
    %v1618 = vld [vmem:[%s1594 + $0xb8] sm:$0xff]
    %v1619 = vld [vmem:[%s1594 + $0xc0] sm:$0xff]
    %v1620 = vld [vmem:[%s1594 + $0xc8] sm:$0xff]
    %v1621 = vld [vmem:[%s1594 + $0xd0] sm:$0xff]
    %v1622 = vld [vmem:[%s1594 + $0xd8] sm:$0xff]
    %v1623 = vld [vmem:[%s1594 + $0xe0] sm:$0xff]
    %v1624 = vld [vmem:[%s1594 + $0xe8] sm:$0xff]
    %v1625 = vld [vmem:[%s1594 + $0xf0] sm:$0xff]
    %v1626 = vld [vmem:[%s1594 + $0xf8] sm:$0xff]
    %v1627 = vld [vmem:[%s1594 + $0x100] sm:$0xff]
    %v1628 = vld [vmem:[%s1594 + $0x108] sm:$0xff]
    %v1629 = vld [vmem:[%s1594 + $0x110] sm:$0xff]
    %v1630 = vld [vmem:[%s1594 + $0x118] sm:$0xff]
    %v1631 = vld [vmem:[%s1594 + $0x120] sm:$0xff]
    %v1632 = vld [vmem:[%s1594 + $0x128] sm:$0xff]
    %v1633 = vld [vmem:[%s1594 + $0x130] sm:$0xff]
    %v1634 = vld [vmem:[%s1594 + $0x138] sm:$0xff]
    %v1635 = vld [vmem:[%s1594 + $0x140] sm:$0xff]
    %v1636 = vld [vmem:[%s1594 + $0x148] sm:$0xff]
    %v1637 = vld [vmem:[%s1594 + $0x150] sm:$0xff]
    %v1638 = vld [vmem:[%s1594 + $0x158] sm:$0xff]
    %v1639 = vld [vmem:[%s1594 + $0x160] sm:$0xff]
    %v1640 = vld [vmem:[%s1594 + $0x168] sm:$0xff]
    %v1641 = vld [vmem:[%s1594 + $0x170] sm:$0xff]
    %v1642 = vld [vmem:[%s1594 + $0x178] sm:$0xff]
    %s1643 = scalar_lea.vmem %s8, 3
    %v1644 = vld [vmem:[%s1643] sm:$0x7]
    %v1646 = vlaneseq
    %v1647 = vshrl.u32 %v1646, 7
    %v1648 = vsub.s32 0, %v1647
    %v1649 = vrot.slane %v1644, %v1648
    %v1650 = vlaneseq
    %v1651 = vshrl.u32 %v1650, 7
    %v1652 = vsub.s32 1, %v1651
    %v1653 = vrot.slane %v1644, %v1652
    %v1654 = vlaneseq
    %v1655 = vshrl.u32 %v1654, 7
    %v1656 = vsub.s32 2, %v1655
    %v1657 = vrot.slane %v1644, %v1656
    %1661 = vmatprep.subr.mxu0 %v1596
    %1662 = vmatpush1.msra.mxu0 %v1595
    %1663 = vmatprep.subr.mxu0 %v1599
    %1664 = vmatpush1.msra.mxu0 %v1598
    %1665 = vmatprep.subr.mxu0 %v1602
    %1666 = vmatpush1.msra.mxu0 %v1601
    %1667 = vmatprep.subr.mxu0 %v1605
    %1668 = vmatpush1.msra.mxu0 %v1604
    %1669 = vmatprep.subr.mxu0 %v1608
    %1670 = vmatpush1.msra.mxu0 %v1607
    %1671 = vmatprep.subr.mxu0 %v1611
    %1672 = vmatpush1.msra.mxu0 %v1610
    %1673 = vmatprep.subr.mxu0 %v1614
    %1674 = vmatpush1.msra.mxu0 %v1613
    %1675 = vmatprep.subr.mxu0 %v1617
    %1676 = vmatpush1.msra.mxu0 %v1616
    %1677 = vmatprep.subr.mxu0 %v1620
    %1678 = vmatpush1.msra.mxu0 %v1619
    %1679 = vmatprep.subr.mxu0 %v1623
    %1680 = vmatpush1.msra.mxu0 %v1622
    %1681 = vmatprep.subr.mxu0 %v1626
    %1682 = vmatpush1.msra.mxu0 %v1625
    %1683 = vmatprep.subr.mxu0 %v1629
    %1684 = vmatpush1.msra.mxu0 %v1628
    %1685 = vmatprep.subr.mxu0 %v1632
    %1686 = vmatpush1.msra.mxu0 %v1631
    %1687 = vmatprep.subr.mxu0 %v1635
    %1688 = vmatpush1.msra.mxu0 %v1634
    %1689 = vmatprep.subr.mxu0 %v1638
    %1690 = vmatpush1.msra.mxu0 %v1637
    %1691 = vmatprep.subr.mxu0 %v1641
    %1692 = vmatpush1.msra.mxu0 %v1640
    %1693 = vmatprep.subr.mxu0 0.0
    %1694 = vmatpush1.msra.mxu0 0.0
    %1695 = vmatprep.subr.mxu0 0.0
    %1696 = vmatpush1.msra.mxu0 0.0
    %1697 = vmatprep.subr.mxu0 0.0
    %1698 = vmatpush1.msra.mxu0 0.0
    %1699 = vmatprep.subr.mxu0 0.0
    %1700 = vmatpush1.msra.mxu0 0.0
    %1701 = vmatprep.subr.mxu0 0.0
    %1702 = vmatpush1.msra.mxu0 0.0
    %1703 = vmatprep.subr.mxu0 0.0
    %1704 = vmatpush1.msra.mxu0 0.0
    %1705 = vmatprep.subr.mxu0 0.0
    %1706 = vmatpush1.msra.mxu0 0.0
    %1707 = vmatprep.subr.mxu0 0.0
    %1708 = vmatpush1.msra.mxu0 0.0
    %1709 = vmatprep.subr.mxu0 0.0
    %1710 = vmatpush1.msra.mxu0 0.0
    %1711 = vmatprep.subr.mxu0 0.0
    %1712 = vmatpush1.msra.mxu0 0.0
    %1713 = vmatprep.subr.mxu0 0.0
    %1714 = vmatpush1.msra.mxu0 0.0
    %1715 = vmatprep.subr.mxu0 0.0
    %1716 = vmatpush1.msra.mxu0 0.0
    %1717 = vmatprep.subr.mxu0 0.0
    %1718 = vmatpush1.msra.mxu0 0.0
    %1719 = vmatprep.subr.mxu0 0.0
    %1720 = vmatpush1.msra.mxu0 0.0
    %1721 = vmatprep.subr.mxu0 0.0
    %1722 = vmatpush1.msra.mxu0 0.0
    %1723 = vmatprep.subr.mxu0 0.0
    %1724 = vmatpush1.msra.mxu0 0.0
    %1725 = vmatprep.mubr.f32.mxu0 0.0
    %1726 = vmatmul.mubr.f32.gmra.mrb[0].mxu0 %v1592
    %v1727 = vpop.f32.mrb[0].mxu0
    %v1728 = vadd.f32 %v1649, %v1727
    %v1729 = vpop.f32.mrb[0].mxu0
    %v1730 = vadd.f32 %v1653, %v1729
    %1731 = vmatprep.mubr.f32.mxu0 0.0
    %1732 = vmatmul.mubr.f32.gmra.mrb[0].mxu0 %v1593
    %v1733 = vpop.f32.mrb[0].mxu0
    %v1734 = vadd.f32 %v1649, %v1733
    %v1735 = vpop.f32.mrb[0].mxu0
    %v1736 = vadd.f32 %v1653, %v1735
    %1737 = vdwg.mxu0
    %1738 = vmatprep.subr.mxu0 0.0
    %1739 = vmatpush1.msra.mxu0 %v1597
    %1740 = vmatprep.subr.mxu0 0.0
    %1741 = vmatpush1.msra.mxu0 %v1600
    %1742 = vmatprep.subr.mxu0 0.0
    %1743 = vmatpush1.msra.mxu0 %v1603
    %1744 = vmatprep.subr.mxu0 0.0
    %1745 = vmatpush1.msra.mxu0 %v1606
    %1746 = vmatprep.subr.mxu0 0.0
    %1747 = vmatpush1.msra.mxu0 %v1609
    %1748 = vmatprep.subr.mxu0 0.0
    %1749 = vmatpush1.msra.mxu0 %v1612
    %1750 = vmatprep.subr.mxu0 0.0
    %1751 = vmatpush1.msra.mxu0 %v1615
    %1752 = vmatprep.subr.mxu0 0.0
    %1753 = vmatpush1.msra.mxu0 %v1618
    %1754 = vmatprep.subr.mxu0 0.0
    %1755 = vmatpush1.msra.mxu0 %v1621
    %1756 = vmatprep.subr.mxu0 0.0
    %1757 = vmatpush1.msra.mxu0 %v1624
    %1758 = vmatprep.subr.mxu0 0.0
    %1759 = vmatpush1.msra.mxu0 %v1627
    %1760 = vmatprep.subr.mxu0 0.0
    %1761 = vmatpush1.msra.mxu0 %v1630
    %1762 = vmatprep.subr.mxu0 0.0
    %1763 = vmatpush1.msra.mxu0 %v1633
    %1764 = vmatprep.subr.mxu0 0.0
    %1765 = vmatpush1.msra.mxu0 %v1636
    %1766 = vmatprep.subr.mxu0 0.0
    %1767 = vmatpush1.msra.mxu0 %v1639
    %1768 = vmatprep.subr.mxu0 0.0
    %1769 = vmatpush1.msra.mxu0 %v1642
    %1770 = vmatprep.subr.mxu0 0.0
    %1771 = vmatpush1.msra.mxu0 0.0
    %1772 = vmatprep.subr.mxu0 0.0
    %1773 = vmatpush1.msra.mxu0 0.0
    %1774 = vmatprep.subr.mxu0 0.0
    %1775 = vmatpush1.msra.mxu0 0.0
    %1776 = vmatprep.subr.mxu0 0.0
    %1777 = vmatpush1.msra.mxu0 0.0
    %1778 = vmatprep.subr.mxu0 0.0
    %1779 = vmatpush1.msra.mxu0 0.0
    %1780 = vmatprep.subr.mxu0 0.0
    %1781 = vmatpush1.msra.mxu0 0.0
    %1782 = vmatprep.subr.mxu0 0.0
    %1783 = vmatpush1.msra.mxu0 0.0
    %1784 = vmatprep.subr.mxu0 0.0
    %1785 = vmatpush1.msra.mxu0 0.0
    %1786 = vmatprep.subr.mxu0 0.0
    %1787 = vmatpush1.msra.mxu0 0.0
    %1788 = vmatprep.subr.mxu0 0.0
    %1789 = vmatpush1.msra.mxu0 0.0
    %1790 = vmatprep.subr.mxu0 0.0
    %1791 = vmatpush1.msra.mxu0 0.0
    %1792 = vmatprep.subr.mxu0 0.0
    %1793 = vmatpush1.msra.mxu0 0.0
    %1794 = vmatprep.subr.mxu0 0.0
    %1795 = vmatpush1.msra.mxu0 0.0
    %1796 = vmatprep.subr.mxu0 0.0
    %1797 = vmatpush1.msra.mxu0 0.0
    %1798 = vmatprep.subr.mxu0 0.0
    %1799 = vmatpush1.msra.mxu0 0.0
    %1800 = vmatprep.subr.mxu0 0.0
    %1801 = vmatpush1.msra.mxu0 0.0
    %1802 = vmatprep.mubr.f32.mxu0 0.0
    %1803 = vmatmul.mubr.f32.gmra.mrb[0].mxu0 %v1592
    %v1804 = vpop.f32.mrb[0].mxu0
    %v1805 = vadd.f32 %v1657, %v1804
    %v1806 = vpop.f32.mrb[0].mxu0
    %1807 = vmatprep.mubr.f32.mxu0 0.0
    %1808 = vmatmul.mubr.f32.gmra.mrb[0].mxu0 %v1593
    %v1809 = vpop.f32.mrb[0].mxu0
    %v1810 = vadd.f32 %v1657, %v1809
    %v1811 = vpop.f32.mrb[0].mxu0
    %1812 = vdwg.mxu0
    %v1813 = vmul.f32 %v1728, 0.125
    %v1814 = vmul.f32 %v1734, 0.125
    %v1816 = vsel %vm471, %v1813, 0
    %v1819 = vsel %vm471, %v1730, 0
    %1821 = vmatprep.subr.mxu0 0.0
    %1822 = vmatpush1.xpose.msra.mxu0 %v1819
    %1823 = vmatprep.subr.mxu0 0.0
    %1824 = vmatpush1.xpose.msra.mxu0 0.0
    %1825 = vmatprep.subr.mxu0 0.0
    %1826 = vmatpush1.xpose.msra.mxu0 0.0
    %1827 = vmatprep.subr.mxu0 0.0
    %1828 = vmatpush1.xpose.msra.mxu0 0.0
    %1829 = vmatprep.subr.mxu0 0.0
    %1830 = vmatpush1.xpose.msra.mxu0 0.0
    %1831 = vmatprep.subr.mxu0 0.0
    %1832 = vmatpush1.xpose.msra.mxu0 0.0
    %1833 = vmatprep.subr.mxu0 0.0
    %1834 = vmatpush1.xpose.msra.mxu0 0.0
    %1835 = vmatprep.subr.mxu0 0.0
    %1836 = vmatpush1.xpose.msra.mxu0 0.0
    %1837 = vmatprep.subr.mxu0 0.0
    %1838 = vmatpush1.xpose.msra.mxu0 0.0
    %1839 = vmatprep.subr.mxu0 0.0
    %1840 = vmatpush1.xpose.msra.mxu0 0.0
    %1841 = vmatprep.subr.mxu0 0.0
    %1842 = vmatpush1.xpose.msra.mxu0 0.0
    %1843 = vmatprep.subr.mxu0 0.0
    %1844 = vmatpush1.xpose.msra.mxu0 0.0
    %1845 = vmatprep.subr.mxu0 0.0
    %1846 = vmatpush1.xpose.msra.mxu0 0.0
    %1847 = vmatprep.subr.mxu0 0.0
    %1848 = vmatpush1.xpose.msra.mxu0 0.0
    %1849 = vmatprep.subr.mxu0 0.0
    %1850 = vmatpush1.xpose.msra.mxu0 0.0
    %1851 = vmatprep.subr.mxu0 0.0
    %1852 = vmatpush1.xpose.msra.mxu0 0.0
    %1853 = vmatprep.subr.mxu0 0.0
    %1854 = vmatpush1.xpose.msra.mxu0 0.0
    %1855 = vmatprep.subr.mxu0 0.0
    %1856 = vmatpush1.xpose.msra.mxu0 0.0
    %1857 = vmatprep.subr.mxu0 0.0
    %1858 = vmatpush1.xpose.msra.mxu0 0.0
    %1859 = vmatprep.subr.mxu0 0.0
    %1860 = vmatpush1.xpose.msra.mxu0 0.0
    %1861 = vmatprep.subr.mxu0 0.0
    %1862 = vmatpush1.xpose.msra.mxu0 0.0
    %1863 = vmatprep.subr.mxu0 0.0
    %1864 = vmatpush1.xpose.msra.mxu0 0.0
    %1865 = vmatprep.subr.mxu0 0.0
    %1866 = vmatpush1.xpose.msra.mxu0 0.0
    %1867 = vmatprep.subr.mxu0 0.0
    %1868 = vmatpush1.xpose.msra.mxu0 0.0
    %1869 = vmatprep.subr.mxu0 0.0
    %1870 = vmatpush1.xpose.msra.mxu0 0.0
    %1871 = vmatprep.subr.mxu0 0.0
    %1872 = vmatpush1.xpose.msra.mxu0 0.0
    %1873 = vmatprep.subr.mxu0 0.0
    %1874 = vmatpush1.xpose.msra.mxu0 0.0
    %1875 = vmatprep.subr.mxu0 0.0
    %1876 = vmatpush1.xpose.msra.mxu0 0.0
    %1877 = vmatprep.subr.mxu0 0.0
    %1878 = vmatpush1.xpose.msra.mxu0 0.0
    %1879 = vmatprep.subr.mxu0 0.0
    %1880 = vmatpush1.xpose.msra.mxu0 0.0
    %1881 = vmatprep.subr.mxu0 0.0
    %1882 = vmatpush1.xpose.msra.mxu0 0.0
    %1883 = vmatprep.subr.mxu0 0.0
    %1884 = vmatpush1.xpose.msra.mxu0 0.0
    %1885 = vmatprep.mubr.f32.mxu0 0.0
    %1886 = vmatmul.mubr.f32.gmra.mrb[0].mxu0 %v1816
    %v1887 = vpop.f32.mrb[0].mxu0
    %v1888 = vadd.f32 0.0, %v1887
    %v1889 = vpop.f32.mrb[0].mxu0
    %1890 = vdwg.mxu0
    %v1891 = vsel %vm548, %v1888, -inf
    %1892 = vmax.xlane.f32.xlu0 %v1891
    %v1893 = vpop.xlane.xlu0 %1892
    %v1894 = vsub.f32 %v1888, %v1893
    %v1895 = vmul.f32 %v1894, 1.442695
    %v1896 = vpow.pop %v1895
    %v1897 = vsel %vm548, %v1896, 0.0
    %1898 = vadd.xlane.f32.xlu0 %v1897
    %v1899 = vpop.xlane.xlu0 %1898
    %v1900 = vrcp.pop %v1899
    %v1901 = vmul.f32 %v1896, %v1900
    %v1903 = vsel %vm548, %v1901, 0
    %1905 = vmatprep.subr.mxu0 0.0
    %1906 = vmatpush1.msra.mxu0 %v1805
    %1907 = vmatprep.subr.mxu0 0.0
    %1908 = vmatpush1.msra.mxu0 0.0
    %1909 = vmatprep.subr.mxu0 0.0
    %1910 = vmatpush1.msra.mxu0 0.0
    %1911 = vmatprep.subr.mxu0 0.0
    %1912 = vmatpush1.msra.mxu0 0.0
    %1913 = vmatprep.subr.mxu0 0.0
    %1914 = vmatpush1.msra.mxu0 0.0
    %1915 = vmatprep.subr.mxu0 0.0
    %1916 = vmatpush1.msra.mxu0 0.0
    %1917 = vmatprep.subr.mxu0 0.0
    %1918 = vmatpush1.msra.mxu0 0.0
    %1919 = vmatprep.subr.mxu0 0.0
    %1920 = vmatpush1.msra.mxu0 0.0
    %1921 = vmatprep.subr.mxu0 0.0
    %1922 = vmatpush1.msra.mxu0 0.0
    %1923 = vmatprep.subr.mxu0 0.0
    %1924 = vmatpush1.msra.mxu0 0.0
    %1925 = vmatprep.subr.mxu0 0.0
    %1926 = vmatpush1.msra.mxu0 0.0
    %1927 = vmatprep.subr.mxu0 0.0
    %1928 = vmatpush1.msra.mxu0 0.0
    %1929 = vmatprep.subr.mxu0 0.0
    %1930 = vmatpush1.msra.mxu0 0.0
    %1931 = vmatprep.subr.mxu0 0.0
    %1932 = vmatpush1.msra.mxu0 0.0
    %1933 = vmatprep.subr.mxu0 0.0
    %1934 = vmatpush1.msra.mxu0 0.0
    %1935 = vmatprep.subr.mxu0 0.0
    %1936 = vmatpush1.msra.mxu0 0.0
    %1937 = vmatprep.subr.mxu0 0.0
    %1938 = vmatpush1.msra.mxu0 0.0
    %1939 = vmatprep.subr.mxu0 0.0
    %1940 = vmatpush1.msra.mxu0 0.0
    %1941 = vmatprep.subr.mxu0 0.0
    %1942 = vmatpush1.msra.mxu0 0.0
    %1943 = vmatprep.subr.mxu0 0.0
    %1944 = vmatpush1.msra.mxu0 0.0
    %1945 = vmatprep.subr.mxu0 0.0
    %1946 = vmatpush1.msra.mxu0 0.0
    %1947 = vmatprep.subr.mxu0 0.0
    %1948 = vmatpush1.msra.mxu0 0.0
    %1949 = vmatprep.subr.mxu0 0.0
    %1950 = vmatpush1.msra.mxu0 0.0
    %1951 = vmatprep.subr.mxu0 0.0
    %1952 = vmatpush1.msra.mxu0 0.0
    %1953 = vmatprep.subr.mxu0 0.0
    %1954 = vmatpush1.msra.mxu0 0.0
    %1955 = vmatprep.subr.mxu0 0.0
    %1956 = vmatpush1.msra.mxu0 0.0
    %1957 = vmatprep.subr.mxu0 0.0
    %1958 = vmatpush1.msra.mxu0 0.0
    %1959 = vmatprep.subr.mxu0 0.0
    %1960 = vmatpush1.msra.mxu0 0.0
    %1961 = vmatprep.subr.mxu0 0.0
    %1962 = vmatpush1.msra.mxu0 0.0
    %1963 = vmatprep.subr.mxu0 0.0
    %1964 = vmatpush1.msra.mxu0 0.0
    %1965 = vmatprep.subr.mxu0 0.0
    %1966 = vmatpush1.msra.mxu0 0.0
    %1967 = vmatprep.subr.mxu0 0.0
    %1968 = vmatpush1.msra.mxu0 0.0
    %1969 = vmatprep.mubr.f32.mxu0 0.0
    %1970 = vmatmul.mubr.f32.gmra.mrb[0].mxu0 %v1903
    %v1971 = vpop.f32.mrb[0].mxu0
    %v1972 = vadd.f32 0.0, %v1971
    %v1973 = vpop.f32.mrb[0].mxu0
    %1974 = vdwg.mxu0
    %1975 = vrot.lane.b32.xlu0 %v1813, 64
    %v1976 = vpop.permute.xlu0 %1975
    %1977 = vrot.lane.b32.xlu0 %v1730, 64
    %v1978 = vpop.permute.xlu0 %1977
    %v1979 = vsel %vm471, %v1976, 0
    %v1981 = vsel %vm471, %v1978, 0
    %1983 = vmatprep.subr.mxu0 0.0
    %1984 = vmatpush1.xpose.msra.mxu0 %v1981
    %1985 = vmatprep.subr.mxu0 0.0
    %1986 = vmatpush1.xpose.msra.mxu0 0.0
    %1987 = vmatprep.subr.mxu0 0.0
    %1988 = vmatpush1.xpose.msra.mxu0 0.0
    %1989 = vmatprep.subr.mxu0 0.0
    %1990 = vmatpush1.xpose.msra.mxu0 0.0
    %1991 = vmatprep.subr.mxu0 0.0
    %1992 = vmatpush1.xpose.msra.mxu0 0.0
    %1993 = vmatprep.subr.mxu0 0.0
    %1994 = vmatpush1.xpose.msra.mxu0 0.0
    %1995 = vmatprep.subr.mxu0 0.0
    %1996 = vmatpush1.xpose.msra.mxu0 0.0
    %1997 = vmatprep.subr.mxu0 0.0
    %1998 = vmatpush1.xpose.msra.mxu0 0.0
    %1999 = vmatprep.subr.mxu0 0.0
    %2000 = vmatpush1.xpose.msra.mxu0 0.0
    %2001 = vmatprep.subr.mxu0 0.0
    %2002 = vmatpush1.xpose.msra.mxu0 0.0
    %2003 = vmatprep.subr.mxu0 0.0
    %2004 = vmatpush1.xpose.msra.mxu0 0.0
    %2005 = vmatprep.subr.mxu0 0.0
    %2006 = vmatpush1.xpose.msra.mxu0 0.0
    %2007 = vmatprep.subr.mxu0 0.0
    %2008 = vmatpush1.xpose.msra.mxu0 0.0
    %2009 = vmatprep.subr.mxu0 0.0
    %2010 = vmatpush1.xpose.msra.mxu0 0.0
    %2011 = vmatprep.subr.mxu0 0.0
    %2012 = vmatpush1.xpose.msra.mxu0 0.0
    %2013 = vmatprep.subr.mxu0 0.0
    %2014 = vmatpush1.xpose.msra.mxu0 0.0
    %2015 = vmatprep.subr.mxu0 0.0
    %2016 = vmatpush1.xpose.msra.mxu0 0.0
    %2017 = vmatprep.subr.mxu0 0.0
    %2018 = vmatpush1.xpose.msra.mxu0 0.0
    %2019 = vmatprep.subr.mxu0 0.0
    %2020 = vmatpush1.xpose.msra.mxu0 0.0
    %2021 = vmatprep.subr.mxu0 0.0
    %2022 = vmatpush1.xpose.msra.mxu0 0.0
    %2023 = vmatprep.subr.mxu0 0.0
    %2024 = vmatpush1.xpose.msra.mxu0 0.0
    %2025 = vmatprep.subr.mxu0 0.0
    %2026 = vmatpush1.xpose.msra.mxu0 0.0
    %2027 = vmatprep.subr.mxu0 0.0
    %2028 = vmatpush1.xpose.msra.mxu0 0.0
    %2029 = vmatprep.subr.mxu0 0.0
    %2030 = vmatpush1.xpose.msra.mxu0 0.0
    %2031 = vmatprep.subr.mxu0 0.0
    %2032 = vmatpush1.xpose.msra.mxu0 0.0
    %2033 = vmatprep.subr.mxu0 0.0
    %2034 = vmatpush1.xpose.msra.mxu0 0.0
    %2035 = vmatprep.subr.mxu0 0.0
    %2036 = vmatpush1.xpose.msra.mxu0 0.0
    %2037 = vmatprep.subr.mxu0 0.0
    %2038 = vmatpush1.xpose.msra.mxu0 0.0
    %2039 = vmatprep.subr.mxu0 0.0
    %2040 = vmatpush1.xpose.msra.mxu0 0.0
    %2041 = vmatprep.subr.mxu0 0.0
    %2042 = vmatpush1.xpose.msra.mxu0 0.0
    %2043 = vmatprep.subr.mxu0 0.0
    %2044 = vmatpush1.xpose.msra.mxu0 0.0
    %2045 = vmatprep.subr.mxu0 0.0
    %2046 = vmatpush1.xpose.msra.mxu0 0.0
    %2047 = vmatprep.mubr.f32.mxu0 0.0
    %2048 = vmatmul.mubr.f32.gmra.mrb[0].mxu0 %v1979
    %v2049 = vpop.f32.mrb[0].mxu0
    %v2050 = vadd.f32 0.0, %v2049
    %v2051 = vpop.f32.mrb[0].mxu0
    %2052 = vdwg.mxu0
    %v2053 = vsel %vm548, %v2050, -inf
    %2054 = vmax.xlane.f32.xlu0 %v2053
    %v2055 = vpop.xlane.xlu0 %2054
    %v2056 = vsub.f32 %v2050, %v2055
    %v2057 = vmul.f32 %v2056, 1.442695
    %v2058 = vpow.pop %v2057
    %v2059 = vsel %vm548, %v2058, 0.0
    %2060 = vadd.xlane.f32.xlu0 %v2059
    %v2061 = vpop.xlane.xlu0 %2060
    %v2062 = vrcp.pop %v2061
    %v2063 = vmul.f32 %v2058, %v2062
    %2065 = vrot.lane.b32.xlu0 %v1805, 64
    %v2066 = vpop.permute.xlu0 %2065
    %v2069 = vsel %vm548, %v2063, 0
    %2071 = vmatprep.subr.mxu0 0.0
    %2072 = vmatpush1.msra.mxu0 %v2066
    %2073 = vmatprep.subr.mxu0 0.0
    %2074 = vmatpush1.msra.mxu0 0.0
    %2075 = vmatprep.subr.mxu0 0.0
    %2076 = vmatpush1.msra.mxu0 0.0
    %2077 = vmatprep.subr.mxu0 0.0
    %2078 = vmatpush1.msra.mxu0 0.0
    %2079 = vmatprep.subr.mxu0 0.0
    %2080 = vmatpush1.msra.mxu0 0.0
    %2081 = vmatprep.subr.mxu0 0.0
    %2082 = vmatpush1.msra.mxu0 0.0
    %2083 = vmatprep.subr.mxu0 0.0
    %2084 = vmatpush1.msra.mxu0 0.0
    %2085 = vmatprep.subr.mxu0 0.0
    %2086 = vmatpush1.msra.mxu0 0.0
    %2087 = vmatprep.subr.mxu0 0.0
    %2088 = vmatpush1.msra.mxu0 0.0
    %2089 = vmatprep.subr.mxu0 0.0
    %2090 = vmatpush1.msra.mxu0 0.0
    %2091 = vmatprep.subr.mxu0 0.0
    %2092 = vmatpush1.msra.mxu0 0.0
    %2093 = vmatprep.subr.mxu0 0.0
    %2094 = vmatpush1.msra.mxu0 0.0
    %2095 = vmatprep.subr.mxu0 0.0
    %2096 = vmatpush1.msra.mxu0 0.0
    %2097 = vmatprep.subr.mxu0 0.0
    %2098 = vmatpush1.msra.mxu0 0.0
    %2099 = vmatprep.subr.mxu0 0.0
    %2100 = vmatpush1.msra.mxu0 0.0
    %2101 = vmatprep.subr.mxu0 0.0
    %2102 = vmatpush1.msra.mxu0 0.0
    %2103 = vmatprep.subr.mxu0 0.0
    %2104 = vmatpush1.msra.mxu0 0.0
    %2105 = vmatprep.subr.mxu0 0.0
    %2106 = vmatpush1.msra.mxu0 0.0
    %2107 = vmatprep.subr.mxu0 0.0
    %2108 = vmatpush1.msra.mxu0 0.0
    %2109 = vmatprep.subr.mxu0 0.0
    %2110 = vmatpush1.msra.mxu0 0.0
    %2111 = vmatprep.subr.mxu0 0.0
    %2112 = vmatpush1.msra.mxu0 0.0
    %2113 = vmatprep.subr.mxu0 0.0
    %2114 = vmatpush1.msra.mxu0 0.0
    %2115 = vmatprep.subr.mxu0 0.0
    %2116 = vmatpush1.msra.mxu0 0.0
    %2117 = vmatprep.subr.mxu0 0.0
    %2118 = vmatpush1.msra.mxu0 0.0
    %2119 = vmatprep.subr.mxu0 0.0
    %2120 = vmatpush1.msra.mxu0 0.0
    %2121 = vmatprep.subr.mxu0 0.0
    %2122 = vmatpush1.msra.mxu0 0.0
    %2123 = vmatprep.subr.mxu0 0.0
    %2124 = vmatpush1.msra.mxu0 0.0
    %2125 = vmatprep.subr.mxu0 0.0
    %2126 = vmatpush1.msra.mxu0 0.0
    %2127 = vmatprep.subr.mxu0 0.0
    %2128 = vmatpush1.msra.mxu0 0.0
    %2129 = vmatprep.subr.mxu0 0.0
    %2130 = vmatpush1.msra.mxu0 0.0
    %2131 = vmatprep.subr.mxu0 0.0
    %2132 = vmatpush1.msra.mxu0 0.0
    %2133 = vmatprep.subr.mxu0 0.0
    %2134 = vmatpush1.msra.mxu0 0.0
    %2135 = vmatprep.mubr.f32.mxu0 0.0
    %2136 = vmatmul.mubr.f32.gmra.mrb[0].mxu0 %v2069
    %v2137 = vpop.f32.mrb[0].mxu0
    %v2138 = vadd.f32 0.0, %v2137
    %v2139 = vpop.f32.mrb[0].mxu0
    %2140 = vdwg.mxu0
    %2142 = vrot.lane.b32.xlu0 %v2138, 64
    %v2143 = vpop.permute.xlu0 %2142
    %v2145 = vsel %vm471, %v1972, %v2143
    %v2147 = vsel %vm471, %v1814, 0
    %v2150 = vsel %vm471, %v1736, 0
    %2152 = vmatprep.subr.mxu0 0.0
    %2153 = vmatpush1.xpose.msra.mxu0 %v2150
    %2154 = vmatprep.subr.mxu0 0.0
    %2155 = vmatpush1.xpose.msra.mxu0 0.0
    %2156 = vmatprep.subr.mxu0 0.0
    %2157 = vmatpush1.xpose.msra.mxu0 0.0
    %2158 = vmatprep.subr.mxu0 0.0
    %2159 = vmatpush1.xpose.msra.mxu0 0.0
    %2160 = vmatprep.subr.mxu0 0.0
    %2161 = vmatpush1.xpose.msra.mxu0 0.0
    %2162 = vmatprep.subr.mxu0 0.0
    %2163 = vmatpush1.xpose.msra.mxu0 0.0
    %2164 = vmatprep.subr.mxu0 0.0
    %2165 = vmatpush1.xpose.msra.mxu0 0.0
    %2166 = vmatprep.subr.mxu0 0.0
    %2167 = vmatpush1.xpose.msra.mxu0 0.0
    %2168 = vmatprep.subr.mxu0 0.0
    %2169 = vmatpush1.xpose.msra.mxu0 0.0
    %2170 = vmatprep.subr.mxu0 0.0
    %2171 = vmatpush1.xpose.msra.mxu0 0.0
    %2172 = vmatprep.subr.mxu0 0.0
    %2173 = vmatpush1.xpose.msra.mxu0 0.0
    %2174 = vmatprep.subr.mxu0 0.0
    %2175 = vmatpush1.xpose.msra.mxu0 0.0
    %2176 = vmatprep.subr.mxu0 0.0
    %2177 = vmatpush1.xpose.msra.mxu0 0.0
    %2178 = vmatprep.subr.mxu0 0.0
    %2179 = vmatpush1.xpose.msra.mxu0 0.0
    %2180 = vmatprep.subr.mxu0 0.0
    %2181 = vmatpush1.xpose.msra.mxu0 0.0
    %2182 = vmatprep.subr.mxu0 0.0
    %2183 = vmatpush1.xpose.msra.mxu0 0.0
    %2184 = vmatprep.subr.mxu0 0.0
    %2185 = vmatpush1.xpose.msra.mxu0 0.0
    %2186 = vmatprep.subr.mxu0 0.0
    %2187 = vmatpush1.xpose.msra.mxu0 0.0
    %2188 = vmatprep.subr.mxu0 0.0
    %2189 = vmatpush1.xpose.msra.mxu0 0.0
    %2190 = vmatprep.subr.mxu0 0.0
    %2191 = vmatpush1.xpose.msra.mxu0 0.0
    %2192 = vmatprep.subr.mxu0 0.0
    %2193 = vmatpush1.xpose.msra.mxu0 0.0
    %2194 = vmatprep.subr.mxu0 0.0
    %2195 = vmatpush1.xpose.msra.mxu0 0.0
    %2196 = vmatprep.subr.mxu0 0.0
    %2197 = vmatpush1.xpose.msra.mxu0 0.0
    %2198 = vmatprep.subr.mxu0 0.0
    %2199 = vmatpush1.xpose.msra.mxu0 0.0
    %2200 = vmatprep.subr.mxu0 0.0
    %2201 = vmatpush1.xpose.msra.mxu0 0.0
    %2202 = vmatprep.subr.mxu0 0.0
    %2203 = vmatpush1.xpose.msra.mxu0 0.0
    %2204 = vmatprep.subr.mxu0 0.0
    %2205 = vmatpush1.xpose.msra.mxu0 0.0
    %2206 = vmatprep.subr.mxu0 0.0
    %2207 = vmatpush1.xpose.msra.mxu0 0.0
    %2208 = vmatprep.subr.mxu0 0.0
    %2209 = vmatpush1.xpose.msra.mxu0 0.0
    %2210 = vmatprep.subr.mxu0 0.0
    %2211 = vmatpush1.xpose.msra.mxu0 0.0
    %2212 = vmatprep.subr.mxu0 0.0
    %2213 = vmatpush1.xpose.msra.mxu0 0.0
    %2214 = vmatprep.subr.mxu0 0.0
    %2215 = vmatpush1.xpose.msra.mxu0 0.0
    %2216 = vmatprep.mubr.f32.mxu0 0.0
    %2217 = vmatmul.mubr.f32.gmra.mrb[0].mxu0 %v2147
    %v2218 = vpop.f32.mrb[0].mxu0
    %v2219 = vadd.f32 0.0, %v2218
    %v2220 = vpop.f32.mrb[0].mxu0
    %2221 = vdwg.mxu0
    %v2222 = vsel %vm548, %v2219, -inf
    %2223 = vmax.xlane.f32.xlu0 %v2222
    %v2224 = vpop.xlane.xlu0 %2223
    %v2225 = vsub.f32 %v2219, %v2224
    %v2226 = vmul.f32 %v2225, 1.442695
    %v2227 = vpow.pop %v2226
    %v2228 = vsel %vm548, %v2227, 0.0
    %2229 = vadd.xlane.f32.xlu0 %v2228
    %v2230 = vpop.xlane.xlu0 %2229
    %v2231 = vrcp.pop %v2230
    %v2232 = vmul.f32 %v2227, %v2231
    %v2234 = vsel %vm548, %v2232, 0
    %2236 = vmatprep.subr.mxu0 0.0
    %2237 = vmatpush1.msra.mxu0 %v1810
    %2238 = vmatprep.subr.mxu0 0.0
    %2239 = vmatpush1.msra.mxu0 0.0
    %2240 = vmatprep.subr.mxu0 0.0
    %2241 = vmatpush1.msra.mxu0 0.0
    %2242 = vmatprep.subr.mxu0 0.0
    %2243 = vmatpush1.msra.mxu0 0.0
    %2244 = vmatprep.subr.mxu0 0.0
    %2245 = vmatpush1.msra.mxu0 0.0
    %2246 = vmatprep.subr.mxu0 0.0
    %2247 = vmatpush1.msra.mxu0 0.0
    %2248 = vmatprep.subr.mxu0 0.0
    %2249 = vmatpush1.msra.mxu0 0.0
    %2250 = vmatprep.subr.mxu0 0.0
    %2251 = vmatpush1.msra.mxu0 0.0
    %2252 = vmatprep.subr.mxu0 0.0
    %2253 = vmatpush1.msra.mxu0 0.0
    %2254 = vmatprep.subr.mxu0 0.0
    %2255 = vmatpush1.msra.mxu0 0.0
    %2256 = vmatprep.subr.mxu0 0.0
    %2257 = vmatpush1.msra.mxu0 0.0
    %2258 = vmatprep.subr.mxu0 0.0
    %2259 = vmatpush1.msra.mxu0 0.0
    %2260 = vmatprep.subr.mxu0 0.0
    %2261 = vmatpush1.msra.mxu0 0.0
    %2262 = vmatprep.subr.mxu0 0.0
    %2263 = vmatpush1.msra.mxu0 0.0
    %2264 = vmatprep.subr.mxu0 0.0
    %2265 = vmatpush1.msra.mxu0 0.0
    %2266 = vmatprep.subr.mxu0 0.0
    %2267 = vmatpush1.msra.mxu0 0.0
    %2268 = vmatprep.subr.mxu0 0.0
    %2269 = vmatpush1.msra.mxu0 0.0
    %2270 = vmatprep.subr.mxu0 0.0
    %2271 = vmatpush1.msra.mxu0 0.0
    %2272 = vmatprep.subr.mxu0 0.0
    %2273 = vmatpush1.msra.mxu0 0.0
    %2274 = vmatprep.subr.mxu0 0.0
    %2275 = vmatpush1.msra.mxu0 0.0
    %2276 = vmatprep.subr.mxu0 0.0
    %2277 = vmatpush1.msra.mxu0 0.0
    %2278 = vmatprep.subr.mxu0 0.0
    %2279 = vmatpush1.msra.mxu0 0.0
    %2280 = vmatprep.subr.mxu0 0.0
    %2281 = vmatpush1.msra.mxu0 0.0
    %2282 = vmatprep.subr.mxu0 0.0
    %2283 = vmatpush1.msra.mxu0 0.0
    %2284 = vmatprep.subr.mxu0 0.0
    %2285 = vmatpush1.msra.mxu0 0.0
    %2286 = vmatprep.subr.mxu0 0.0
    %2287 = vmatpush1.msra.mxu0 0.0
    %2288 = vmatprep.subr.mxu0 0.0
    %2289 = vmatpush1.msra.mxu0 0.0
    %2290 = vmatprep.subr.mxu0 0.0
    %2291 = vmatpush1.msra.mxu0 0.0
    %2292 = vmatprep.subr.mxu0 0.0
    %2293 = vmatpush1.msra.mxu0 0.0
    %2294 = vmatprep.subr.mxu0 0.0
    %2295 = vmatpush1.msra.mxu0 0.0
    %2296 = vmatprep.subr.mxu0 0.0
    %2297 = vmatpush1.msra.mxu0 0.0
    %2298 = vmatprep.subr.mxu0 0.0
    %2299 = vmatpush1.msra.mxu0 0.0
    %2300 = vmatprep.mubr.f32.mxu0 0.0
    %2301 = vmatmul.mubr.f32.gmra.mrb[0].mxu0 %v2234
    %v2302 = vpop.f32.mrb[0].mxu0
    %v2303 = vadd.f32 0.0, %v2302
    %v2304 = vpop.f32.mrb[0].mxu0
    %2305 = vdwg.mxu0
    %2306 = vrot.lane.b32.xlu0 %v1814, 64
    %v2307 = vpop.permute.xlu0 %2306
    %2308 = vrot.lane.b32.xlu0 %v1736, 64
    %v2309 = vpop.permute.xlu0 %2308
    %v2310 = vsel %vm471, %v2307, 0
    %v2312 = vsel %vm471, %v2309, 0
    %2314 = vmatprep.subr.mxu0 0.0
    %2315 = vmatpush1.xpose.msra.mxu0 %v2312
    %2316 = vmatprep.subr.mxu0 0.0
    %2317 = vmatpush1.xpose.msra.mxu0 0.0
    %2318 = vmatprep.subr.mxu0 0.0
    %2319 = vmatpush1.xpose.msra.mxu0 0.0
    %2320 = vmatprep.subr.mxu0 0.0
    %2321 = vmatpush1.xpose.msra.mxu0 0.0
    %2322 = vmatprep.subr.mxu0 0.0
    %2323 = vmatpush1.xpose.msra.mxu0 0.0
    %2324 = vmatprep.subr.mxu0 0.0
    %2325 = vmatpush1.xpose.msra.mxu0 0.0
    %2326 = vmatprep.subr.mxu0 0.0
    %2327 = vmatpush1.xpose.msra.mxu0 0.0
    %2328 = vmatprep.subr.mxu0 0.0
    %2329 = vmatpush1.xpose.msra.mxu0 0.0
    %2330 = vmatprep.subr.mxu0 0.0
    %2331 = vmatpush1.xpose.msra.mxu0 0.0
    %2332 = vmatprep.subr.mxu0 0.0
    %2333 = vmatpush1.xpose.msra.mxu0 0.0
    %2334 = vmatprep.subr.mxu0 0.0
    %2335 = vmatpush1.xpose.msra.mxu0 0.0
    %2336 = vmatprep.subr.mxu0 0.0
    %2337 = vmatpush1.xpose.msra.mxu0 0.0
    %2338 = vmatprep.subr.mxu0 0.0
    %2339 = vmatpush1.xpose.msra.mxu0 0.0
    %2340 = vmatprep.subr.mxu0 0.0
    %2341 = vmatpush1.xpose.msra.mxu0 0.0
    %2342 = vmatprep.subr.mxu0 0.0
    %2343 = vmatpush1.xpose.msra.mxu0 0.0
    %2344 = vmatprep.subr.mxu0 0.0
    %2345 = vmatpush1.xpose.msra.mxu0 0.0
    %2346 = vmatprep.subr.mxu0 0.0
    %2347 = vmatpush1.xpose.msra.mxu0 0.0
    %2348 = vmatprep.subr.mxu0 0.0
    %2349 = vmatpush1.xpose.msra.mxu0 0.0
    %2350 = vmatprep.subr.mxu0 0.0
    %2351 = vmatpush1.xpose.msra.mxu0 0.0
    %2352 = vmatprep.subr.mxu0 0.0
    %2353 = vmatpush1.xpose.msra.mxu0 0.0
    %2354 = vmatprep.subr.mxu0 0.0
    %2355 = vmatpush1.xpose.msra.mxu0 0.0
    %2356 = vmatprep.subr.mxu0 0.0
    %2357 = vmatpush1.xpose.msra.mxu0 0.0
    %2358 = vmatprep.subr.mxu0 0.0
    %2359 = vmatpush1.xpose.msra.mxu0 0.0
    %2360 = vmatprep.subr.mxu0 0.0
    %2361 = vmatpush1.xpose.msra.mxu0 0.0
    %2362 = vmatprep.subr.mxu0 0.0
    %2363 = vmatpush1.xpose.msra.mxu0 0.0
    %2364 = vmatprep.subr.mxu0 0.0
    %2365 = vmatpush1.xpose.msra.mxu0 0.0
    %2366 = vmatprep.subr.mxu0 0.0
    %2367 = vmatpush1.xpose.msra.mxu0 0.0
    %2368 = vmatprep.subr.mxu0 0.0
    %2369 = vmatpush1.xpose.msra.mxu0 0.0
    %2370 = vmatprep.subr.mxu0 0.0
    %2371 = vmatpush1.xpose.msra.mxu0 0.0
    %2372 = vmatprep.subr.mxu0 0.0
    %2373 = vmatpush1.xpose.msra.mxu0 0.0
    %2374 = vmatprep.subr.mxu0 0.0
    %2375 = vmatpush1.xpose.msra.mxu0 0.0
    %2376 = vmatprep.subr.mxu0 0.0
    %2377 = vmatpush1.xpose.msra.mxu0 0.0
    %2378 = vmatprep.mubr.f32.mxu0 0.0
    %2379 = vmatmul.mubr.f32.gmra.mrb[0].mxu0 %v2310
    %v2380 = vpop.f32.mrb[0].mxu0
    %v2381 = vadd.f32 0.0, %v2380
    %v2382 = vpop.f32.mrb[0].mxu0
    %2383 = vdwg.mxu0
    %v2384 = vsel %vm548, %v2381, -inf
    %2385 = vmax.xlane.f32.xlu0 %v2384
    %v2386 = vpop.xlane.xlu0 %2385
    %v2387 = vsub.f32 %v2381, %v2386
    %v2388 = vmul.f32 %v2387, 1.442695
    %v2389 = vpow.pop %v2388
    %v2390 = vsel %vm548, %v2389, 0.0
    %2391 = vadd.xlane.f32.xlu0 %v2390
    %v2392 = vpop.xlane.xlu0 %2391
    %v2393 = vrcp.pop %v2392
    %v2394 = vmul.f32 %v2389, %v2393
    %2396 = vrot.lane.b32.xlu0 %v1810, 64
    %v2397 = vpop.permute.xlu0 %2396
    %v2400 = vsel %vm548, %v2394, 0
    %2402 = vmatprep.subr.mxu0 0.0
    %2403 = vmatpush1.msra.mxu0 %v2397
    %2404 = vmatprep.subr.mxu0 0.0
    %2405 = vmatpush1.msra.mxu0 0.0
    %2406 = vmatprep.subr.mxu0 0.0
    %2407 = vmatpush1.msra.mxu0 0.0
    %2408 = vmatprep.subr.mxu0 0.0
    %2409 = vmatpush1.msra.mxu0 0.0
    %2410 = vmatprep.subr.mxu0 0.0
    %2411 = vmatpush1.msra.mxu0 0.0
    %2412 = vmatprep.subr.mxu0 0.0
    %2413 = vmatpush1.msra.mxu0 0.0
    %2414 = vmatprep.subr.mxu0 0.0
    %2415 = vmatpush1.msra.mxu0 0.0
    %2416 = vmatprep.subr.mxu0 0.0
    %2417 = vmatpush1.msra.mxu0 0.0
    %2418 = vmatprep.subr.mxu0 0.0
    %2419 = vmatpush1.msra.mxu0 0.0
    %2420 = vmatprep.subr.mxu0 0.0
    %2421 = vmatpush1.msra.mxu0 0.0
    %2422 = vmatprep.subr.mxu0 0.0
    %2423 = vmatpush1.msra.mxu0 0.0
    %2424 = vmatprep.subr.mxu0 0.0
    %2425 = vmatpush1.msra.mxu0 0.0
    %2426 = vmatprep.subr.mxu0 0.0
    %2427 = vmatpush1.msra.mxu0 0.0
    %2428 = vmatprep.subr.mxu0 0.0
    %2429 = vmatpush1.msra.mxu0 0.0
    %2430 = vmatprep.subr.mxu0 0.0
    %2431 = vmatpush1.msra.mxu0 0.0
    %2432 = vmatprep.subr.mxu0 0.0
    %2433 = vmatpush1.msra.mxu0 0.0
    %2434 = vmatprep.subr.mxu0 0.0
    %2435 = vmatpush1.msra.mxu0 0.0
    %2436 = vmatprep.subr.mxu0 0.0
    %2437 = vmatpush1.msra.mxu0 0.0
    %2438 = vmatprep.subr.mxu0 0.0
    %2439 = vmatpush1.msra.mxu0 0.0
    %2440 = vmatprep.subr.mxu0 0.0
    %2441 = vmatpush1.msra.mxu0 0.0
    %2442 = vmatprep.subr.mxu0 0.0
    %2443 = vmatpush1.msra.mxu0 0.0
    %2444 = vmatprep.subr.mxu0 0.0
    %2445 = vmatpush1.msra.mxu0 0.0
    %2446 = vmatprep.subr.mxu0 0.0
    %2447 = vmatpush1.msra.mxu0 0.0
    %2448 = vmatprep.subr.mxu0 0.0
    %2449 = vmatpush1.msra.mxu0 0.0
    %2450 = vmatprep.subr.mxu0 0.0
    %2451 = vmatpush1.msra.mxu0 0.0
    %2452 = vmatprep.subr.mxu0 0.0
    %2453 = vmatpush1.msra.mxu0 0.0
    %2454 = vmatprep.subr.mxu0 0.0
    %2455 = vmatpush1.msra.mxu0 0.0
    %2456 = vmatprep.subr.mxu0 0.0
    %2457 = vmatpush1.msra.mxu0 0.0
    %2458 = vmatprep.subr.mxu0 0.0
    %2459 = vmatpush1.msra.mxu0 0.0
    %2460 = vmatprep.subr.mxu0 0.0
    %2461 = vmatpush1.msra.mxu0 0.0
    %2462 = vmatprep.subr.mxu0 0.0
    %2463 = vmatpush1.msra.mxu0 0.0
    %2464 = vmatprep.subr.mxu0 0.0
    %2465 = vmatpush1.msra.mxu0 0.0
    %2466 = vmatprep.mubr.f32.mxu0 0.0
    %2467 = vmatmul.mubr.f32.gmra.mrb[0].mxu0 %v2400
    %v2468 = vpop.f32.mrb[0].mxu0
    %v2469 = vadd.f32 0.0, %v2468
    %v2470 = vpop.f32.mrb[0].mxu0
    %2471 = vdwg.mxu0
    %2473 = vrot.lane.b32.xlu0 %v2469, 64
    %v2474 = vpop.permute.xlu0 %2473
    %v2476 = vsel %vm471, %v2303, %v2474
    %s2477 = scalar_lea.vmem %s9, 128
    %v2478 = vld [vmem:[%s2477] sm:$0xff]
    %v2479 = vld [vmem:[%s2477 + $0x8] sm:$0xff]
    %v2480 = vld [vmem:[%s2477 + $0x10] sm:$0xff]
    %v2481 = vld [vmem:[%s2477 + $0x18] sm:$0xff]
    %v2482 = vld [vmem:[%s2477 + $0x20] sm:$0xff]
    %v2483 = vld [vmem:[%s2477 + $0x28] sm:$0xff]
    %v2484 = vld [vmem:[%s2477 + $0x30] sm:$0xff]
    %v2485 = vld [vmem:[%s2477 + $0x38] sm:$0xff]
    %v2486 = vld [vmem:[%s2477 + $0x40] sm:$0xff]
    %v2487 = vld [vmem:[%s2477 + $0x48] sm:$0xff]
    %v2488 = vld [vmem:[%s2477 + $0x50] sm:$0xff]
    %v2489 = vld [vmem:[%s2477 + $0x58] sm:$0xff]
    %v2490 = vld [vmem:[%s2477 + $0x60] sm:$0xff]
    %v2491 = vld [vmem:[%s2477 + $0x68] sm:$0xff]
    %v2492 = vld [vmem:[%s2477 + $0x70] sm:$0xff]
    %v2493 = vld [vmem:[%s2477 + $0x78] sm:$0xff]
    %2494 = vmatprep.subr.mxu0 0.0
    %2495 = vmatpush1.msra.mxu0 %v2478
    %2496 = vmatprep.subr.mxu0 0.0
    %2497 = vmatpush1.msra.mxu0 %v2479
    %2498 = vmatprep.subr.mxu0 0.0
    %2499 = vmatpush1.msra.mxu0 %v2480
    %2500 = vmatprep.subr.mxu0 0.0
    %2501 = vmatpush1.msra.mxu0 %v2481
    %2502 = vmatprep.subr.mxu0 0.0
    %2503 = vmatpush1.msra.mxu0 %v2482
    %2504 = vmatprep.subr.mxu0 0.0
    %2505 = vmatpush1.msra.mxu0 %v2483
    %2506 = vmatprep.subr.mxu0 0.0
    %2507 = vmatpush1.msra.mxu0 %v2484
    %2508 = vmatprep.subr.mxu0 0.0
    %2509 = vmatpush1.msra.mxu0 %v2485
    %2510 = vmatprep.subr.mxu0 0.0
    %2511 = vmatpush1.msra.mxu0 %v2486
    %2512 = vmatprep.subr.mxu0 0.0
    %2513 = vmatpush1.msra.mxu0 %v2487
    %2514 = vmatprep.subr.mxu0 0.0
    %2515 = vmatpush1.msra.mxu0 %v2488
    %2516 = vmatprep.subr.mxu0 0.0
    %2517 = vmatpush1.msra.mxu0 %v2489
    %2518 = vmatprep.subr.mxu0 0.0
    %2519 = vmatpush1.msra.mxu0 %v2490
    %2520 = vmatprep.subr.mxu0 0.0
    %2521 = vmatpush1.msra.mxu0 %v2491
    %2522 = vmatprep.subr.mxu0 0.0
    %2523 = vmatpush1.msra.mxu0 %v2492
    %2524 = vmatprep.subr.mxu0 0.0
    %2525 = vmatpush1.msra.mxu0 %v2493
    %2526 = vmatprep.subr.mxu0 0.0
    %2527 = vmatpush1.msra.mxu0 0.0
    %2528 = vmatprep.subr.mxu0 0.0
    %2529 = vmatpush1.msra.mxu0 0.0
    %2530 = vmatprep.subr.mxu0 0.0
    %2531 = vmatpush1.msra.mxu0 0.0
    %2532 = vmatprep.subr.mxu0 0.0
    %2533 = vmatpush1.msra.mxu0 0.0
    %2534 = vmatprep.subr.mxu0 0.0
    %2535 = vmatpush1.msra.mxu0 0.0
    %2536 = vmatprep.subr.mxu0 0.0
    %2537 = vmatpush1.msra.mxu0 0.0
    %2538 = vmatprep.subr.mxu0 0.0
    %2539 = vmatpush1.msra.mxu0 0.0
    %2540 = vmatprep.subr.mxu0 0.0
    %2541 = vmatpush1.msra.mxu0 0.0
    %2542 = vmatprep.subr.mxu0 0.0
    %2543 = vmatpush1.msra.mxu0 0.0
    %2544 = vmatprep.subr.mxu0 0.0
    %2545 = vmatpush1.msra.mxu0 0.0
    %2546 = vmatprep.subr.mxu0 0.0
    %2547 = vmatpush1.msra.mxu0 0.0
    %2548 = vmatprep.subr.mxu0 0.0
    %2549 = vmatpush1.msra.mxu0 0.0
    %2550 = vmatprep.subr.mxu0 0.0
    %2551 = vmatpush1.msra.mxu0 0.0
    %2552 = vmatprep.subr.mxu0 0.0
    %2553 = vmatpush1.msra.mxu0 0.0
    %2554 = vmatprep.subr.mxu0 0.0
    %2555 = vmatpush1.msra.mxu0 0.0
    %2556 = vmatprep.subr.mxu0 0.0
    %2557 = vmatpush1.msra.mxu0 0.0
    %2558 = vmatprep.mubr.f32.mxu0 0.0
    %2559 = vmatmul.mubr.f32.gmra.mrb[0].mxu0 %v2145
    %v2560 = vpop.f32.mrb[0].mxu0
    %v2561 = vadd.f32 0.0, %v2560
    %v2562 = vpop.f32.mrb[0].mxu0
    %2563 = vmatprep.mubr.f32.mxu0 0.0
    %2564 = vmatmul.mubr.f32.gmra.mrb[0].mxu0 %v2476
    %v2565 = vpop.f32.mrb[0].mxu0
    %v2566 = vadd.f32 0.0, %v2565
    %v2567 = vpop.f32.mrb[0].mxu0
    %2568 = vdwg.mxu0
    %v2569 = vadd.f32 %v1550, %v2561
    %v2570 = vadd.f32 %v1551, %v2566
    %s2571 = scalar_lea.vmem %s10, 1
    %v2572 = vld [vmem:[%s2571] sm:$0x1]
    %v2574 = vlaneseq
    %v2575 = vshrl.u32 %v2574, 7
    %v2576 = vsub.s32 0, %v2575
    %v2577 = vrot.slane %v2572, %v2576
    %v2579 = vadd.f32 %v2569, %v2577
    %v2580 = vadd.f32 %v2570, %v2577
    %s2581 = scalar_lea.vmem %s11, 1
    %v2582 = vld [vmem:[%s2581] sm:$0x1]
    %s2583 = scalar_lea.vmem %s12, 1
    %v2584 = vld [vmem:[%s2583] sm:$0x1]
    %2585 = vadd.xlane.f32.xlu0 %v2579
    %v2586 = vpop.xlane.xlu0 %2585
    %2587 = vadd.xlane.f32.xlu0 %v2580
    %v2588 = vpop.xlane.xlu0 %2587
    %v2589 = vmul.f32 %v2586, %v177
    %v2590 = vmul.f32 %v2588, %v177
    %v2591 = vsub.f32 %v2579, %v2589
    %v2592 = vsub.f32 %v2580, %v2590
    %v2593 = vmul.f32 %v2591, %v2591
    %v2594 = vmul.f32 %v2592, %v2592
    %2595 = vadd.xlane.f32.xlu0 %v2593
    %v2596 = vpop.xlane.xlu0 %2595
    %2597 = vadd.xlane.f32.xlu0 %v2594
    %v2598 = vpop.xlane.xlu0 %2597
    %v2599 = vmul.f32 %v2596, %v177
    %v2600 = vmul.f32 %v2598, %v177
    %v2601 = vadd.f32 %v2599, 1e-05
    %v2602 = vadd.f32 %v2600, 1e-05
    %v2603 = vrsqrt.pop %v2601
    %v2604 = vrsqrt.pop %v2602
    %v2605 = vmul.f32 %v2591, %v2603
    %v2606 = vmul.f32 %v2592, %v2604
    %v2608 = vlaneseq
    %v2609 = vshrl.u32 %v2608, 7
    %v2610 = vsub.s32 0, %v2609
    %v2611 = vrot.slane %v2582, %v2610
    %v2613 = vmul.f32 %v2605, %v2611
    %v2614 = vmul.f32 %v2606, %v2611
    %v2616 = vlaneseq
    %v2617 = vshrl.u32 %v2616, 7
    %v2618 = vsub.s32 0, %v2617
    %v2619 = vrot.slane %v2584, %v2618
    %v2621 = vadd.f32 %v2613, %v2619
    %v2622 = vadd.f32 %v2614, %v2619
    %s2623 = scalar_lea.vmem %s13, 256
    %v2624 = vld [vmem:[%s2623] sm:$0xff]
    %v2625 = vld [vmem:[%s2623 + $0x8] sm:$0xff]
    %v2626 = vld [vmem:[%s2623 + $0x10] sm:$0xff]
    %v2627 = vld [vmem:[%s2623 + $0x18] sm:$0xff]
    %v2628 = vld [vmem:[%s2623 + $0x20] sm:$0xff]
    %v2629 = vld [vmem:[%s2623 + $0x28] sm:$0xff]
    %v2630 = vld [vmem:[%s2623 + $0x30] sm:$0xff]
    %v2631 = vld [vmem:[%s2623 + $0x38] sm:$0xff]
    %v2632 = vld [vmem:[%s2623 + $0x40] sm:$0xff]
    %v2633 = vld [vmem:[%s2623 + $0x48] sm:$0xff]
    %v2634 = vld [vmem:[%s2623 + $0x50] sm:$0xff]
    %v2635 = vld [vmem:[%s2623 + $0x58] sm:$0xff]
    %v2636 = vld [vmem:[%s2623 + $0x60] sm:$0xff]
    %v2637 = vld [vmem:[%s2623 + $0x68] sm:$0xff]
    %v2638 = vld [vmem:[%s2623 + $0x70] sm:$0xff]
    %v2639 = vld [vmem:[%s2623 + $0x78] sm:$0xff]
    %v2640 = vld [vmem:[%s2623 + $0x80] sm:$0xff]
    %v2641 = vld [vmem:[%s2623 + $0x88] sm:$0xff]
    %v2642 = vld [vmem:[%s2623 + $0x90] sm:$0xff]
    %v2643 = vld [vmem:[%s2623 + $0x98] sm:$0xff]
    %v2644 = vld [vmem:[%s2623 + $0xa0] sm:$0xff]
    %v2645 = vld [vmem:[%s2623 + $0xa8] sm:$0xff]
    %v2646 = vld [vmem:[%s2623 + $0xb0] sm:$0xff]
    %v2647 = vld [vmem:[%s2623 + $0xb8] sm:$0xff]
    %v2648 = vld [vmem:[%s2623 + $0xc0] sm:$0xff]
    %v2649 = vld [vmem:[%s2623 + $0xc8] sm:$0xff]
    %v2650 = vld [vmem:[%s2623 + $0xd0] sm:$0xff]
    %v2651 = vld [vmem:[%s2623 + $0xd8] sm:$0xff]
    %v2652 = vld [vmem:[%s2623 + $0xe0] sm:$0xff]
    %v2653 = vld [vmem:[%s2623 + $0xe8] sm:$0xff]
    %v2654 = vld [vmem:[%s2623 + $0xf0] sm:$0xff]
    %v2655 = vld [vmem:[%s2623 + $0xf8] sm:$0xff]
    %s2656 = scalar_lea.vmem %s14, 2
    %v2657 = vld [vmem:[%s2656] sm:$0x3]
    %v2659 = vlaneseq
    %v2660 = vshrl.u32 %v2659, 7
    %v2661 = vsub.s32 0, %v2660
    %v2662 = vrot.slane %v2657, %v2661
    %v2663 = vlaneseq
    %v2664 = vshrl.u32 %v2663, 7
    %v2665 = vsub.s32 1, %v2664
    %v2666 = vrot.slane %v2657, %v2665
    %2669 = vmatprep.subr.mxu0 %v2625
    %2670 = vmatpush1.msra.mxu0 %v2624
    %2671 = vmatprep.subr.mxu0 %v2627
    %2672 = vmatpush1.msra.mxu0 %v2626
    %2673 = vmatprep.subr.mxu0 %v2629
    %2674 = vmatpush1.msra.mxu0 %v2628
    %2675 = vmatprep.subr.mxu0 %v2631
    %2676 = vmatpush1.msra.mxu0 %v2630
    %2677 = vmatprep.subr.mxu0 %v2633
    %2678 = vmatpush1.msra.mxu0 %v2632
    %2679 = vmatprep.subr.mxu0 %v2635
    %2680 = vmatpush1.msra.mxu0 %v2634
    %2681 = vmatprep.subr.mxu0 %v2637
    %2682 = vmatpush1.msra.mxu0 %v2636
    %2683 = vmatprep.subr.mxu0 %v2639
    %2684 = vmatpush1.msra.mxu0 %v2638
    %2685 = vmatprep.subr.mxu0 %v2641
    %2686 = vmatpush1.msra.mxu0 %v2640
    %2687 = vmatprep.subr.mxu0 %v2643
    %2688 = vmatpush1.msra.mxu0 %v2642
    %2689 = vmatprep.subr.mxu0 %v2645
    %2690 = vmatpush1.msra.mxu0 %v2644
    %2691 = vmatprep.subr.mxu0 %v2647
    %2692 = vmatpush1.msra.mxu0 %v2646
    %2693 = vmatprep.subr.mxu0 %v2649
    %2694 = vmatpush1.msra.mxu0 %v2648
    %2695 = vmatprep.subr.mxu0 %v2651
    %2696 = vmatpush1.msra.mxu0 %v2650
    %2697 = vmatprep.subr.mxu0 %v2653
    %2698 = vmatpush1.msra.mxu0 %v2652
    %2699 = vmatprep.subr.mxu0 %v2655
    %2700 = vmatpush1.msra.mxu0 %v2654
    %2701 = vmatprep.subr.mxu0 0.0
    %2702 = vmatpush1.msra.mxu0 0.0
    %2703 = vmatprep.subr.mxu0 0.0
    %2704 = vmatpush1.msra.mxu0 0.0
    %2705 = vmatprep.subr.mxu0 0.0
    %2706 = vmatpush1.msra.mxu0 0.0
    %2707 = vmatprep.subr.mxu0 0.0
    %2708 = vmatpush1.msra.mxu0 0.0
    %2709 = vmatprep.subr.mxu0 0.0
    %2710 = vmatpush1.msra.mxu0 0.0
    %2711 = vmatprep.subr.mxu0 0.0
    %2712 = vmatpush1.msra.mxu0 0.0
    %2713 = vmatprep.subr.mxu0 0.0
    %2714 = vmatpush1.msra.mxu0 0.0
    %2715 = vmatprep.subr.mxu0 0.0
    %2716 = vmatpush1.msra.mxu0 0.0
    %2717 = vmatprep.subr.mxu0 0.0
    %2718 = vmatpush1.msra.mxu0 0.0
    %2719 = vmatprep.subr.mxu0 0.0
    %2720 = vmatpush1.msra.mxu0 0.0
    %2721 = vmatprep.subr.mxu0 0.0
    %2722 = vmatpush1.msra.mxu0 0.0
    %2723 = vmatprep.subr.mxu0 0.0
    %2724 = vmatpush1.msra.mxu0 0.0
    %2725 = vmatprep.subr.mxu0 0.0
    %2726 = vmatpush1.msra.mxu0 0.0
    %2727 = vmatprep.subr.mxu0 0.0
    %2728 = vmatpush1.msra.mxu0 0.0
    %2729 = vmatprep.subr.mxu0 0.0
    %2730 = vmatpush1.msra.mxu0 0.0
    %2731 = vmatprep.subr.mxu0 0.0
    %2732 = vmatpush1.msra.mxu0 0.0
    %2733 = vmatprep.mubr.f32.mxu0 0.0
    %2734 = vmatmul.mubr.f32.gmra.mrb[0].mxu0 %v2621
    %v2735 = vpop.f32.mrb[0].mxu0
    %v2736 = vadd.f32 %v2662, %v2735
    %v2737 = vpop.f32.mrb[0].mxu0
    %v2738 = vadd.f32 %v2666, %v2737
    %2739 = vmatprep.mubr.f32.mxu0 0.0
    %2740 = vmatmul.mubr.f32.gmra.mrb[0].mxu0 %v2622
    %v2741 = vpop.f32.mrb[0].mxu0
    %v2742 = vadd.f32 %v2662, %v2741
    %v2743 = vpop.f32.mrb[0].mxu0
    %v2744 = vadd.f32 %v2666, %v2743
    %2745 = vdwg.mxu0
    %v2746 = vmul.f32 %v2736, 0.5
    %v2747 = vmul.f32 %v2738, 0.5
    %v2748 = vmul.f32 %v2742, 0.5
    %v2749 = vmul.f32 %v2744, 0.5
    %v2750 = vmul.f32 %v2736, 0.044715
    %v2751 = vmul.f32 %v2738, 0.044715
    %v2752 = vmul.f32 %v2742, 0.044715
    %v2753 = vmul.f32 %v2744, 0.044715
    %v2754 = vmul.f32 %v2750, %v2736
    %v2755 = vmul.f32 %v2751, %v2738
    %v2756 = vmul.f32 %v2752, %v2742
    %v2757 = vmul.f32 %v2753, %v2744
    %v2758 = vmul.f32 %v2754, %v2736
    %v2759 = vmul.f32 %v2755, %v2738
    %v2760 = vmul.f32 %v2756, %v2742
    %v2761 = vmul.f32 %v2757, %v2744
    %v2762 = vadd.f32 %v2736, %v2758
    %v2763 = vadd.f32 %v2738, %v2759
    %v2764 = vadd.f32 %v2742, %v2760
    %v2765 = vadd.f32 %v2744, %v2761
    %v2766 = vmul.f32 %v2762, 0.7978846
    %v2767 = vmul.f32 %v2763, 0.7978846
    %v2768 = vmul.f32 %v2764, 0.7978846
    %v2769 = vmul.f32 %v2765, 0.7978846
    %v2770 = vtanh.pop %v2766
    %v2771 = vtanh.pop %v2767
    %v2772 = vtanh.pop %v2768
    %v2773 = vtanh.pop %v2769
    %v2774 = vadd.f32 %v2770, 1.0
    %v2775 = vadd.f32 %v2771, 1.0
    %v2776 = vadd.f32 %v2772, 1.0
    %v2777 = vadd.f32 %v2773, 1.0
    %v2778 = vmul.f32 %v2746, %v2774
    %v2779 = vmul.f32 %v2747, %v2775
    %v2780 = vmul.f32 %v2748, %v2776
    %v2781 = vmul.f32 %v2749, %v2777
    %s2782 = scalar_lea.vmem %s15, 256
    %v2783 = vld [vmem:[%s2782] sm:$0xff]
    %v2784 = vld [vmem:[%s2782 + $0x8] sm:$0xff]
    %v2785 = vld [vmem:[%s2782 + $0x10] sm:$0xff]
    %v2786 = vld [vmem:[%s2782 + $0x18] sm:$0xff]
    %v2787 = vld [vmem:[%s2782 + $0x20] sm:$0xff]
    %v2788 = vld [vmem:[%s2782 + $0x28] sm:$0xff]
    %v2789 = vld [vmem:[%s2782 + $0x30] sm:$0xff]
    %v2790 = vld [vmem:[%s2782 + $0x38] sm:$0xff]
    %v2791 = vld [vmem:[%s2782 + $0x40] sm:$0xff]
    %v2792 = vld [vmem:[%s2782 + $0x48] sm:$0xff]
    %v2793 = vld [vmem:[%s2782 + $0x50] sm:$0xff]
    %v2794 = vld [vmem:[%s2782 + $0x58] sm:$0xff]
    %v2795 = vld [vmem:[%s2782 + $0x60] sm:$0xff]
    %v2796 = vld [vmem:[%s2782 + $0x68] sm:$0xff]
    %v2797 = vld [vmem:[%s2782 + $0x70] sm:$0xff]
    %v2798 = vld [vmem:[%s2782 + $0x78] sm:$0xff]
    %v2799 = vld [vmem:[%s2782 + $0x80] sm:$0xff]
    %v2800 = vld [vmem:[%s2782 + $0x88] sm:$0xff]
    %v2801 = vld [vmem:[%s2782 + $0x90] sm:$0xff]
    %v2802 = vld [vmem:[%s2782 + $0x98] sm:$0xff]
    %v2803 = vld [vmem:[%s2782 + $0xa0] sm:$0xff]
    %v2804 = vld [vmem:[%s2782 + $0xa8] sm:$0xff]
    %v2805 = vld [vmem:[%s2782 + $0xb0] sm:$0xff]
    %v2806 = vld [vmem:[%s2782 + $0xb8] sm:$0xff]
    %v2807 = vld [vmem:[%s2782 + $0xc0] sm:$0xff]
    %v2808 = vld [vmem:[%s2782 + $0xc8] sm:$0xff]
    %v2809 = vld [vmem:[%s2782 + $0xd0] sm:$0xff]
    %v2810 = vld [vmem:[%s2782 + $0xd8] sm:$0xff]
    %v2811 = vld [vmem:[%s2782 + $0xe0] sm:$0xff]
    %v2812 = vld [vmem:[%s2782 + $0xe8] sm:$0xff]
    %v2813 = vld [vmem:[%s2782 + $0xf0] sm:$0xff]
    %v2814 = vld [vmem:[%s2782 + $0xf8] sm:$0xff]
    %2815 = vmatprep.subr.mxu0 0.0
    %2816 = vmatpush1.msra.mxu0 %v2783
    %2817 = vmatprep.subr.mxu0 0.0
    %2818 = vmatpush1.msra.mxu0 %v2784
    %2819 = vmatprep.subr.mxu0 0.0
    %2820 = vmatpush1.msra.mxu0 %v2785
    %2821 = vmatprep.subr.mxu0 0.0
    %2822 = vmatpush1.msra.mxu0 %v2786
    %2823 = vmatprep.subr.mxu0 0.0
    %2824 = vmatpush1.msra.mxu0 %v2787
    %2825 = vmatprep.subr.mxu0 0.0
    %2826 = vmatpush1.msra.mxu0 %v2788
    %2827 = vmatprep.subr.mxu0 0.0
    %2828 = vmatpush1.msra.mxu0 %v2789
    %2829 = vmatprep.subr.mxu0 0.0
    %2830 = vmatpush1.msra.mxu0 %v2790
    %2831 = vmatprep.subr.mxu0 0.0
    %2832 = vmatpush1.msra.mxu0 %v2791
    %2833 = vmatprep.subr.mxu0 0.0
    %2834 = vmatpush1.msra.mxu0 %v2792
    %2835 = vmatprep.subr.mxu0 0.0
    %2836 = vmatpush1.msra.mxu0 %v2793
    %2837 = vmatprep.subr.mxu0 0.0
    %2838 = vmatpush1.msra.mxu0 %v2794
    %2839 = vmatprep.subr.mxu0 0.0
    %2840 = vmatpush1.msra.mxu0 %v2795
    %2841 = vmatprep.subr.mxu0 0.0
    %2842 = vmatpush1.msra.mxu0 %v2796
    %2843 = vmatprep.subr.mxu0 0.0
    %2844 = vmatpush1.msra.mxu0 %v2797
    %2845 = vmatprep.subr.mxu0 0.0
    %2846 = vmatpush1.msra.mxu0 %v2798
    %2847 = vmatprep.subr.mxu0 0.0
    %2848 = vmatpush1.msra.mxu0 %v2799
    %2849 = vmatprep.subr.mxu0 0.0
    %2850 = vmatpush1.msra.mxu0 %v2800
    %2851 = vmatprep.subr.mxu0 0.0
    %2852 = vmatpush1.msra.mxu0 %v2801
    %2853 = vmatprep.subr.mxu0 0.0
    %2854 = vmatpush1.msra.mxu0 %v2802
    %2855 = vmatprep.subr.mxu0 0.0
    %2856 = vmatpush1.msra.mxu0 %v2803
    %2857 = vmatprep.subr.mxu0 0.0
    %2858 = vmatpush1.msra.mxu0 %v2804
    %2859 = vmatprep.subr.mxu0 0.0
    %2860 = vmatpush1.msra.mxu0 %v2805
    %2861 = vmatprep.subr.mxu0 0.0
    %2862 = vmatpush1.msra.mxu0 %v2806
    %2863 = vmatprep.subr.mxu0 0.0
    %2864 = vmatpush1.msra.mxu0 %v2807
    %2865 = vmatprep.subr.mxu0 0.0
    %2866 = vmatpush1.msra.mxu0 %v2808
    %2867 = vmatprep.subr.mxu0 0.0
    %2868 = vmatpush1.msra.mxu0 %v2809
    %2869 = vmatprep.subr.mxu0 0.0
    %2870 = vmatpush1.msra.mxu0 %v2810
    %2871 = vmatprep.subr.mxu0 0.0
    %2872 = vmatpush1.msra.mxu0 %v2811
    %2873 = vmatprep.subr.mxu0 0.0
    %2874 = vmatpush1.msra.mxu0 %v2812
    %2875 = vmatprep.subr.mxu0 0.0
    %2876 = vmatpush1.msra.mxu0 %v2813
    %2877 = vmatprep.subr.mxu0 0.0
    %2878 = vmatpush1.msra.mxu0 %v2814
    %2879 = vmatprep.mubr.f32.mxu0 %v2779
    %2880 = vmatmul.mubr.f32.gmra.mrb[0].mxu0 %v2778
    %v2881 = vpop.f32.mrb[0].mxu0
    %v2882 = vadd.f32 0.0, %v2881
    %v2883 = vpop.f32.mrb[0].mxu0
    %2884 = vmatprep.mubr.f32.mxu0 %v2781
    %2885 = vmatmul.mubr.f32.gmra.mrb[0].mxu0 %v2780
    %v2886 = vpop.f32.mrb[0].mxu0
    %v2887 = vadd.f32 0.0, %v2886
    %v2888 = vpop.f32.mrb[0].mxu0
    %2889 = vdwg.mxu0
    %v2890 = vadd.f32 %v2579, %v2882
    %v2891 = vadd.f32 %v2580, %v2887
    %s2892 = scalar_lea.vmem %s16, 1
    %v2893 = vld [vmem:[%s2892] sm:$0x1]
    %v2895 = vlaneseq
    %v2896 = vshrl.u32 %v2895, 7
    %v2897 = vsub.s32 0, %v2896
    %v2898 = vrot.slane %v2893, %v2897
    %v2900 = vadd.f32 %v2890, %v2898
    %v2901 = vadd.f32 %v2891, %v2898
    %v2903 = vrot.slane %v2901, 7
    %vm2905 = vcmask 1040384
    %v2906 = vsel %vm2905, %v2900, %v2903
    %v2907 = vld [vmem:[%s17] sm:$0xff]
    %v2908 = vld [vmem:[%s17 + $0x8] sm:$0xff]
    %v2909 = vld [vmem:[%s17 + $0x10] sm:$0xff]
    %v2910 = vld [vmem:[%s17 + $0x18] sm:$0xff]
    %v2911 = vld [vmem:[%s17 + $0x20] sm:$0xff]
    %v2912 = vld [vmem:[%s17 + $0x28] sm:$0xff]
    %v2913 = vld [vmem:[%s17 + $0x30] sm:$0xff]
    %v2914 = vld [vmem:[%s17 + $0x38] sm:$0xff]
    %v2915 = vld [vmem:[%s17 + $0x40] sm:$0xff]
    %v2916 = vld [vmem:[%s17 + $0x48] sm:$0xff]
    %v2917 = vld [vmem:[%s17 + $0x50] sm:$0xff]
    %v2918 = vld [vmem:[%s17 + $0x58] sm:$0xff]
    %v2919 = vld [vmem:[%s17 + $0x60] sm:$0xff]
    %v2920 = vld [vmem:[%s17 + $0x68] sm:$0xff]
    %v2921 = vld [vmem:[%s17 + $0x70] sm:$0xff]
    %v2922 = vld [vmem:[%s17 + $0x78] sm:$0xff]
    %v2923 = vld [vmem:[%s18] sm:$0x1]
    %v2925 = vlaneseq
    %v2926 = vshrl.u32 %v2925, 7
    %v2927 = vsub.s32 0, %v2926
    %v2928 = vrot.slane %v2923, %v2927
    %2930 = vmatprep.subr.mxu0 0.0
    %2931 = vmatpush1.msra.mxu0 %v2907
    %2932 = vmatprep.subr.mxu0 0.0
    %2933 = vmatpush1.msra.mxu0 %v2908
    %2934 = vmatprep.subr.mxu0 0.0
    %2935 = vmatpush1.msra.mxu0 %v2909
    %2936 = vmatprep.subr.mxu0 0.0
    %2937 = vmatpush1.msra.mxu0 %v2910
    %2938 = vmatprep.subr.mxu0 0.0
    %2939 = vmatpush1.msra.mxu0 %v2911
    %2940 = vmatprep.subr.mxu0 0.0
    %2941 = vmatpush1.msra.mxu0 %v2912
    %2942 = vmatprep.subr.mxu0 0.0
    %2943 = vmatpush1.msra.mxu0 %v2913
    %2944 = vmatprep.subr.mxu0 0.0
    %2945 = vmatpush1.msra.mxu0 %v2914
    %2946 = vmatprep.subr.mxu0 0.0
    %2947 = vmatpush1.msra.mxu0 %v2915
    %2948 = vmatprep.subr.mxu0 0.0
    %2949 = vmatpush1.msra.mxu0 %v2916
    %2950 = vmatprep.subr.mxu0 0.0
    %2951 = vmatpush1.msra.mxu0 %v2917
    %2952 = vmatprep.subr.mxu0 0.0
    %2953 = vmatpush1.msra.mxu0 %v2918
    %2954 = vmatprep.subr.mxu0 0.0
    %2955 = vmatpush1.msra.mxu0 %v2919
    %2956 = vmatprep.subr.mxu0 0.0
    %2957 = vmatpush1.msra.mxu0 %v2920
    %2958 = vmatprep.subr.mxu0 0.0
    %2959 = vmatpush1.msra.mxu0 %v2921
    %2960 = vmatprep.subr.mxu0 0.0
    %2961 = vmatpush1.msra.mxu0 %v2922
    %2962 = vmatprep.subr.mxu0 0.0
    %2963 = vmatpush1.msra.mxu0 0.0
    %2964 = vmatprep.subr.mxu0 0.0
    %2965 = vmatpush1.msra.mxu0 0.0
    %2966 = vmatprep.subr.mxu0 0.0
    %2967 = vmatpush1.msra.mxu0 0.0
    %2968 = vmatprep.subr.mxu0 0.0
    %2969 = vmatpush1.msra.mxu0 0.0
    %2970 = vmatprep.subr.mxu0 0.0
    %2971 = vmatpush1.msra.mxu0 0.0
    %2972 = vmatprep.subr.mxu0 0.0
    %2973 = vmatpush1.msra.mxu0 0.0
    %2974 = vmatprep.subr.mxu0 0.0
    %2975 = vmatpush1.msra.mxu0 0.0
    %2976 = vmatprep.subr.mxu0 0.0
    %2977 = vmatpush1.msra.mxu0 0.0
    %2978 = vmatprep.subr.mxu0 0.0
    %2979 = vmatpush1.msra.mxu0 0.0
    %2980 = vmatprep.subr.mxu0 0.0
    %2981 = vmatpush1.msra.mxu0 0.0
    %2982 = vmatprep.subr.mxu0 0.0
    %2983 = vmatpush1.msra.mxu0 0.0
    %2984 = vmatprep.subr.mxu0 0.0
    %2985 = vmatpush1.msra.mxu0 0.0
    %2986 = vmatprep.subr.mxu0 0.0
    %2987 = vmatpush1.msra.mxu0 0.0
    %2988 = vmatprep.subr.mxu0 0.0
    %2989 = vmatpush1.msra.mxu0 0.0
    %2990 = vmatprep.subr.mxu0 0.0
    %2991 = vmatpush1.msra.mxu0 0.0
    %2992 = vmatprep.subr.mxu0 0.0
    %2993 = vmatpush1.msra.mxu0 0.0
    %2994 = vmatprep.mubr.f32.mxu0 0.0
    %2995 = vmatmul.mubr.f32.gmra.mrb[0].mxu0 %v2906
    %v2996 = vpop.f32.mrb[0].mxu0
    %v2997 = vadd.f32 %v2928, %v2996
    %v2998 = vpop.f32.mrb[0].mxu0
    %2999 = vdwg.mxu0
    %3000 = vst [vmem:[#allocation2] sm:$0x3] %v2997
    // Predicated region
    $region78: #{transformer_forward.1} parent=1 // pred_check
      _
    $region79: #{transformer_forward.1} parent=1 // pred_check_branch
      %3002 = sbr.rel (0) target = $region81
    $region80: #{transformer_forward.1} parent=1 // pred_region
      %s3004 = ssub.s32 32, 32
      %3005 = vsyncadd [#allocation3], %s3004
      %s3007 = sshll.u32 [#allocation2], 4
      %s3008 = int_to_ptr.vmem [resolvable:$true] %s3007
      %3010 = dma.vmem_to_hbm [thread:$0]  %s3008, 32, %s19, [#allocation3]
    $region81: #{transformer_forward.1} parent=1 // pred_fallthru
      _
    // Predicated region
    $region82: #{transformer_forward.1} parent=1 // pred_check
      _
    $region83: #{transformer_forward.1} parent=1 // pred_check_branch
      %3012 = sbr.rel (0) target = $region85
    $region84: #{transformer_forward.1} parent=1 // pred_region
      %3013 = dma.done [#allocation3], 32
    $region85: #{transformer_forward.1} parent=1 // pred_fallthru
      _
    %3014 = vsyncpa [#allocation3], 1

</llo_original>
